<compile_context>
chip_gen: v7x
topology: tpu7x:2x2x1
jax: 0.10.0
libtpu: 0.0.40
codegen_flags: <defaults>
</compile_context>

<pallas_src>
import numpy as np
import jax
import jax.numpy as jnp
from jax import lax
from jax.experimental import pallas as pl
from jax.experimental.pallas import tpu as pltpu

# ----- small, module-consistent sizes -----
B, S = 2, 8          # batch, sequence length
D = 32               # hidden size
H = 4                # attention heads
HD = D // H          # head dim
I = 64               # MLP intermediate size
V = 128              # vocab size
N_LAYERS = 6
EPS = 1e-6
ROPE_THETA = 10000.0
BS = B * S           # rows processed together inside the kernel (16)
HB = H * BS          # width of the block-diagonal score matrix (64)


# ---------------------------------------------------------------- kernel -----
def part0_kernel(ids_ref, table_ref, cos2_ref, sin2_ref, selkv_ref,
                 maskadd_ref, bones_ref,
                 wproj_ref, wo_ref, wgu_ref, wd_ref, out_ref):
    # ---- fused embedding gather: one-hot (16,128) @ f32 table (128,32) -> exact
    ids = ids_ref[...]                                                # (BS, 1) int32
    onehot = (ids == lax.broadcasted_iota(jnp.int32, (BS, V), 1)).astype(jnp.float32)
    x = jnp.dot(onehot, table_ref[...], preferred_element_type=jnp.float32)  # (BS, D)

    cos2 = cos2_ref[...]          # (BS, 2D)  [cos | cos]
    sin2 = sin2_ref[...]          # (BS, 2D)  [sin | sin]
    selkv = selkv_ref[...]        # (HB, D)   0/1 per-head channel selector
    mask_add = maskadd_ref[...]   # (BS, HB)  0 / -inf block-diag causal mask
    bones = bones_ref[...]        # (HB, HB)  per-head-block ones

    for l in range(N_LAYERS):                 # static unroll, static weight index
        # ---- input RMSNorm (gamma folded into wproj rows) ----
        var = jnp.mean(x * x, axis=-1, keepdims=True)
        xn = (x * lax.rsqrt(var + EPS)).astype(jnp.bfloat16)

        # ---- fused q|k|q_rot|k_rot|v projection: one (16,32)@(32,160) bf16 matmul
        # (rotate_half and 1/sqrt(HD) folded into the weights at init time)
        proj = jnp.dot(xn, wproj_ref[l], preferred_element_type=jnp.float32)  # (BS, 5D)

        # ---- RoPE on q and k together (lane-dense first 128 lanes) ----
        qk = proj[:, :2 * D] * cos2 + proj[:, 2 * D:4 * D] * sin2    # (BS, 2D)
        q = qk[:, :D]
        k = qk[:, D:]
        v = proj[:, 4 * D:]

        # ---- block-diagonal causal MHA: 2 matmuls for all heads & batches ----
        k_rows = selkv * jnp.concatenate([k] * H, axis=0)            # (HB, D)
        v_rows = selkv * jnp.concatenate([v] * H, axis=0)            # (HB, D)
        s = lax.dot_general(q, k_rows, (((1,), (1,)), ((), ())),
                            preferred_element_type=jnp.float32) + mask_add   # (BS, HB)
        # per-row global max is safe here (diag always unmasked, small magnitudes)
        m = jnp.max(s, axis=-1, keepdims=True)
        e = jnp.exp(s - m)
        denom = jnp.dot(e, bones, preferred_element_type=jnp.float32)  # block sums, broadcast
        p = e * pl.reciprocal(denom, approx=True)
        ctx = jnp.dot(p, v_rows, preferred_element_type=jnp.float32)   # (BS, D), heads concat
        attn_out = jnp.dot(ctx.astype(jnp.bfloat16), wo_ref[l],
                           preferred_element_type=jnp.float32)
        h1 = x + attn_out

        # ---- post-attention RMSNorm (gamma folded into wgu) + SwiGLU MLP ----
        var2 = jnp.mean(h1 * h1, axis=-1, keepdims=True)
        h1n = (h1 * lax.rsqrt(var2 + EPS)).astype(jnp.bfloat16)
        gu = jnp.dot(h1n, wgu_ref[l], preferred_element_type=jnp.float32)    # (BS, 2I)
        g, u = gu[:, :I], gu[:, I:]
        act = g * jax.nn.sigmoid(g) * u       # SiLU(gate) * up, f32 on VPU/EUP
        mlp = jnp.dot(act.astype(jnp.bfloat16), wd_ref[l],
                      preferred_element_type=jnp.float32)
        x = h1 + mlp

    out_ref[...] = x


# --------------------------------------------------------------- wrappers ----
def build_constants():
    # RoPE tables (HF Llama layout: same (S, HD) cos/sin tiled per head)
    inv_freq = 1.0 / (ROPE_THETA ** (np.arange(0, HD, 2, dtype=np.float32) / HD))
    pos = np.arange(S, dtype=np.float32)
    freqs = pos[:, None] * inv_freq[None, :]              # (S, HD/2)
    emb = np.concatenate([freqs, freqs], axis=-1)         # (S, HD)
    cos = np.tile(np.cos(emb), (1, H)).astype(np.float32)  # (S, D)
    sin = np.tile(np.sin(emb), (1, H)).astype(np.float32)
    cos_full = np.tile(cos, (B, 1))                       # (BS, D)
    sin_full = np.tile(sin, (B, 1))
    cos2 = np.concatenate([cos_full, cos_full], axis=1)   # (BS, 2D) for fused q|k RoPE
    sin2 = np.concatenate([sin_full, sin_full], axis=1)

    # signed permutation implementing rotate_half inside each head block
    P = np.zeros((D, D), np.float32)
    for h in range(H):
        for j in range(HD):
            if j < HD // 2:
                P[h * HD + j + HD // 2, h * HD + j] = -1.0
            else:
                P[h * HD + j - HD // 2, h * HD + j] = 1.0

    # per-head channel selector (HB, D): row block h keeps head-h channels only
    row_head = np.arange(HB)[:, None] // BS
    col_head = np.arange(D)[None, :] // HD
    selkv = (row_head == col_head).astype(np.float32)

    # additive block-diag causal mask (BS, HB): same (BS,BS) mask tiled per head
    r = np.arange(BS)
    causal = np.where((r[:, None] // S == r[None, :] // S)
                      & (r[None, :] % S <= r[:, None] % S),
                      0.0, -np.inf).astype(np.float32)    # (BS, BS)
    mask_add = np.tile(causal, (1, H))                    # (BS, HB)

    # per-head-block ones (HB, HB): broadcasts the per-block softmax denominator
    blk = np.arange(HB) // BS
    bones = (blk[:, None] == blk[None, :]).astype(np.float32)

    consts = dict(cos2=jnp.asarray(cos2), sin2=jnp.asarray(sin2),
                  selkv=jnp.asarray(selkv), mask_add=jnp.asarray(mask_add),
                  bones=jnp.asarray(bones))
    return consts, P


def init_params(key, P):
    Pj = jnp.asarray(P)
    scale = 1.0 / (HD ** 0.5)
    keys = jax.random.split(key, 1 + N_LAYERS * 7)
    table = jax.random.normal(keys[0], (V, D), jnp.float32) * 0.02   # f32 (exact gather)
    wprojs, wos, wgus, wds = [], [], [], []
    idx = 1
    for _ in range(N_LAYERS):
        ks = keys[idx:idx + 7]
        idx += 7
        wq = jax.random.normal(ks[0], (D, D), jnp.float32) * 0.05
        wk = jax.random.normal(ks[1], (D, D), jnp.float32) * 0.05
        wv = jax.random.normal(ks[2], (D, D), jnp.float32) * 0.05
        wo = jax.random.normal(ks[3], (D, D), jnp.float32) * 0.05
        wg = jax.random.normal(ks[4], (D, I), jnp.float32) * 0.05
        wu = jax.random.normal(ks[5], (D, I), jnp.float32) * 0.05
        wd = jax.random.normal(ks[6], (I, D), jnp.float32) * 0.05
        g1 = jnp.ones((D,), jnp.float32)   # RMSNorm gammas, folded into weight rows
        g2 = jnp.ones((D,), jnp.float32)
        # fold: 1/sqrt(HD) into q columns, rotate_half (x@P) into *_rot columns,
        # input-RMSNorm gamma into rows.  Column order: [q|k|q_rot|k_rot|v].
        wproj = jnp.concatenate([wq * scale, wk, (wq @ Pj) * scale, wk @ Pj, wv], axis=1)
        wproj = g1[:, None] * wproj
        wgu = g2[:, None] * jnp.concatenate([wg, wu], axis=1)
        wprojs.append(wproj)
        wos.append(wo)
        wgus.append(wgu)
        wds.append(wd)
    params = dict(
        wproj=jnp.stack(wprojs).astype(jnp.bfloat16),   # (L, D, 5D)
        wo=jnp.stack(wos).astype(jnp.bfloat16),         # (L, D, D)
        wgu=jnp.stack(wgus).astype(jnp.bfloat16),       # (L, D, 2I)
        wd=jnp.stack(wds).astype(jnp.bfloat16),         # (L, I, D)
    )
    return table, params


def part0_forward(input_ids, table, params, consts):
    ids = input_ids.reshape(BS, 1).astype(jnp.int32)
    vspec = pl.BlockSpec(memory_space=pltpu.MemorySpace.VMEM)   # full array, VMEM-resident

    hidden = pl.pallas_call(
        part0_kernel,
        out_shape=jax.ShapeDtypeStruct((BS, D), jnp.float32),
        in_specs=[vspec] * 11,
        out_specs=vspec,
    )(ids, table,
      consts["cos2"], consts["sin2"], consts["selkv"],
      consts["mask_add"], consts["bones"],
      params["wproj"], params["wo"], params["wgu"], params["wd"])
    hidden = hidden.reshape(B, S, D)

    # attn_mask is input-independent: baked as a trace-time numpy constant
    np_mask = np.triu(np.full((S, S), -np.inf, dtype=np.float32), 1)
    attn_mask = jnp.asarray(np.ascontiguousarray(
        np.broadcast_to(np_mask[None, None], (B, 1, S, S))))
    return hidden, attn_mask


if __name__ == "__main__":
    key = jax.random.PRNGKey(0)
    pkey, ikey = jax.random.split(key)
    consts, P = build_constants()
    table, params = init_params(pkey, P)
    input_ids = jax.random.randint(ikey, (B, S), 0, V, dtype=jnp.int32)

    fwd = jax.jit(part0_forward)
    hidden, attn_mask = fwd(input_ids, table, params, consts)
    jax.block_until_ready(hidden)
    jax.block_until_ready(attn_mask)

    assert hidden.shape == (B, S, D) and hidden.dtype == jnp.float32
    assert attn_mask.shape == (B, 1, S, S)
    assert bool(jnp.all(jnp.isfinite(hidden)))
    print("KERNEL_OK")
</pallas_src>

<mosaic_0001>
module attributes {stable_mosaic.version = 11 : i64} {
  func.func @part0_kernel(%arg0: memref<16x1xi32, #tpu.memory_space<vmem>>, %arg1: memref<128x32xf32, #tpu.memory_space<vmem>>, %arg2: memref<16x64xf32, #tpu.memory_space<vmem>>, %arg3: memref<16x64xf32, #tpu.memory_space<vmem>>, %arg4: memref<64x32xf32, #tpu.memory_space<vmem>>, %arg5: memref<16x64xf32, #tpu.memory_space<vmem>>, %arg6: memref<64x64xf32, #tpu.memory_space<vmem>>, %arg7: memref<6x32x160xbf16, #tpu.memory_space<vmem>>, %arg8: memref<6x32x32xbf16, #tpu.memory_space<vmem>>, %arg9: memref<6x32x128xbf16, #tpu.memory_space<vmem>>, %arg10: memref<6x64x32xbf16, #tpu.memory_space<vmem>>, %arg11: memref<16x32xf32, #tpu.memory_space<vmem>>) attributes {dimension_semantics = [], scalar_prefetch = 0 : i64, scratch_operands = 0 : i64, tpu.core_type = #tpu.core_type<tc>} {
    %c0 = arith.constant 0 : index
    %c0_0 = arith.constant 0 : index
    %0 = vector.load %arg0[%c0, %c0_0] : memref<16x1xi32, #tpu.memory_space<vmem>>, vector<16x1xi32>
    %1 = tpu.iota {dimensions = array<i32: 1>} : vector<16x128xi32>
    %2 = vector.broadcast %0 : vector<16x1xi32> to vector<16x128xi32>
    %3 = arith.cmpi eq, %2, %1 : vector<16x128xi32>
    %4 = arith.extui %3 : vector<16x128xi1> to vector<16x128xi32>
    %5 = arith.sitofp %4 : vector<16x128xi32> to vector<16x128xf32>
    %c0_1 = arith.constant 0 : index
    %c0_2 = arith.constant 0 : index
    %6 = vector.load %arg1[%c0_1, %c0_2] : memref<128x32xf32, #tpu.memory_space<vmem>>, vector<128x32xf32>
    %cst = arith.constant dense<0.000000e+00> : vector<16x32xf32>
    %7 = tpu.matmul %5, %6, %cst {dimension_numbers = #tpu.dot_dimension_numbers<[1], [0], [0], [1], [0, 0, 1, 1], [], []>} : vector<16x128xf32>, vector<128x32xf32>, vector<16x32xf32> -> vector<16x32xf32>
    %c0_3 = arith.constant 0 : index
    %c0_4 = arith.constant 0 : index
    %8 = vector.load %arg2[%c0_3, %c0_4] : memref<16x64xf32, #tpu.memory_space<vmem>>, vector<16x64xf32>
    %c0_5 = arith.constant 0 : index
    %c0_6 = arith.constant 0 : index
    %9 = vector.load %arg3[%c0_5, %c0_6] : memref<16x64xf32, #tpu.memory_space<vmem>>, vector<16x64xf32>
    %c0_7 = arith.constant 0 : index
    %c0_8 = arith.constant 0 : index
    %10 = vector.load %arg4[%c0_7, %c0_8] : memref<64x32xf32, #tpu.memory_space<vmem>>, vector<64x32xf32>
    %c0_9 = arith.constant 0 : index
    %c0_10 = arith.constant 0 : index
    %11 = vector.load %arg5[%c0_9, %c0_10] : memref<16x64xf32, #tpu.memory_space<vmem>>, vector<16x64xf32>
    %c0_11 = arith.constant 0 : index
    %c0_12 = arith.constant 0 : index
    %12 = vector.load %arg6[%c0_11, %c0_12] : memref<64x64xf32, #tpu.memory_space<vmem>>, vector<64x64xf32>
    %13 = arith.mulf %7, %7 : vector<16x32xf32>
    %cst_13 = arith.constant dense<0.000000e+00> : vector<16xf32>
    %14 = vector.multi_reduction <add>, %13, %cst_13 [1] : vector<16x32xf32> to vector<16xf32>
    %15 = vector.shape_cast %14 : vector<16xf32> to vector<16x1xf32>
    %cst_14 = arith.constant 3.200000e+01 : f32
    %16 = vector.broadcast %cst_14 : f32 to vector<16x1xf32>
    %17 = arith.divf %15, %16 : vector<16x1xf32>
    %cst_15 = arith.constant 9.99999997E-7 : f32
    %18 = vector.broadcast %cst_15 : f32 to vector<16x1xf32>
    %19 = arith.addf %17, %18 : vector<16x1xf32>
    %20 = math.rsqrt %19 : vector<16x1xf32>
    %21 = vector.broadcast %20 : vector<16x1xf32> to vector<16x32xf32>
    %22 = arith.mulf %7, %21 : vector<16x32xf32>
    %23 = arith.truncf %22 : vector<16x32xf32> to vector<16x32xbf16>
    %c0_16 = arith.constant 0 : index
    %c0_17 = arith.constant 0 : index
    %c0_18 = arith.constant 0 : index
    %24 = vector.load %arg7[%c0_16, %c0_17, %c0_18] : memref<6x32x160xbf16, #tpu.memory_space<vmem>>, vector<1x32x160xbf16>
    %25 = vector.shape_cast %24 : vector<1x32x160xbf16> to vector<32x160xbf16>
    %cst_19 = arith.constant dense<0.000000e+00> : vector<16x160xf32>
    %26 = tpu.matmul %23, %25, %cst_19 {dimension_numbers = #tpu.dot_dimension_numbers<[1], [0], [0], [1], [0, 0, 1, 1], [], []>} : vector<16x32xbf16>, vector<32x160xbf16>, vector<16x160xf32> -> vector<16x160xf32>
    %27 = vector.extract_strided_slice %26 {offsets = [0, 0], sizes = [16, 64], strides = [1, 1]} : vector<16x160xf32> to vector<16x64xf32>
    %28 = arith.mulf %27, %8 : vector<16x64xf32>
    %29 = vector.extract_strided_slice %26 {offsets = [0, 64], sizes = [16, 64], strides = [1, 1]} : vector<16x160xf32> to vector<16x64xf32>
    %30 = arith.mulf %29, %9 : vector<16x64xf32>
    %31 = arith.addf %28, %30 : vector<16x64xf32>
    %32 = vector.extract_strided_slice %31 {offsets = [0, 0], sizes = [16, 32], strides = [1, 1]} : vector<16x64xf32> to vector<16x32xf32>
    %33 = vector.extract_strided_slice %31 {offsets = [0, 32], sizes = [16, 32], strides = [1, 1]} : vector<16x64xf32> to vector<16x32xf32>
    %34 = vector.extract_strided_slice %26 {offsets = [0, 128], sizes = [16, 32], strides = [1, 1]} : vector<16x160xf32> to vector<16x32xf32>
    %35 = tpu.concatenate %33, %33, %33, %33 in 0 : vector<16x32xf32>, vector<16x32xf32>, vector<16x32xf32>, vector<16x32xf32> -> vector<64x32xf32>
    %36 = arith.mulf %10, %35 : vector<64x32xf32>
    %37 = tpu.concatenate %34, %34, %34, %34 in 0 : vector<16x32xf32>, vector<16x32xf32>, vector<16x32xf32>, vector<16x32xf32> -> vector<64x32xf32>
    %38 = arith.mulf %10, %37 : vector<64x32xf32>
    %cst_20 = arith.constant dense<0.000000e+00> : vector<16x64xf32>
    %39 = tpu.matmul %32, %36, %cst_20 {dimension_numbers = #tpu.dot_dimension_numbers<[1], [1], [0], [0], [0, 0, 1, 0], [], []>} : vector<16x32xf32>, vector<64x32xf32>, vector<16x64xf32> -> vector<16x64xf32>
    %40 = arith.addf %39, %11 : vector<16x64xf32>
    %cst_21 = arith.constant dense<0xFF800000> : vector<16xf32>
    %41 = vector.multi_reduction <maximumf>, %40, %cst_21 [1] : vector<16x64xf32> to vector<16xf32>
    %42 = vector.shape_cast %41 : vector<16xf32> to vector<16x1xf32>
    %43 = vector.broadcast %42 : vector<16x1xf32> to vector<16x64xf32>
    %44 = arith.subf %40, %43 : vector<16x64xf32>
    %45 = math.exp %44 : vector<16x64xf32>
    %cst_22 = arith.constant dense<0.000000e+00> : vector<16x64xf32>
    %46 = tpu.matmul %45, %12, %cst_22 {dimension_numbers = #tpu.dot_dimension_numbers<[1], [0], [0], [1], [0, 0, 1, 1], [], []>} : vector<16x64xf32>, vector<64x64xf32>, vector<16x64xf32> -> vector<16x64xf32>
    %47 = tpu.reciprocal %46 {approx = true} : vector<16x64xf32> -> vector<16x64xf32>
    %48 = arith.mulf %45, %47 : vector<16x64xf32>
    %cst_23 = arith.constant dense<0.000000e+00> : vector<16x32xf32>
    %49 = tpu.matmul %48, %38, %cst_23 {dimension_numbers = #tpu.dot_dimension_numbers<[1], [0], [0], [1], [0, 0, 1, 1], [], []>} : vector<16x64xf32>, vector<64x32xf32>, vector<16x32xf32> -> vector<16x32xf32>
    %50 = arith.truncf %49 : vector<16x32xf32> to vector<16x32xbf16>
    %c0_24 = arith.constant 0 : index
    %c0_25 = arith.constant 0 : index
    %c0_26 = arith.constant 0 : index
    %51 = vector.load %arg8[%c0_24, %c0_25, %c0_26] : memref<6x32x32xbf16, #tpu.memory_space<vmem>>, vector<1x32x32xbf16>
    %52 = vector.shape_cast %51 : vector<1x32x32xbf16> to vector<32x32xbf16>
    %cst_27 = arith.constant dense<0.000000e+00> : vector<16x32xf32>
    %53 = tpu.matmul %50, %52, %cst_27 {dimension_numbers = #tpu.dot_dimension_numbers<[1], [0], [0], [1], [0, 0, 1, 1], [], []>} : vector<16x32xbf16>, vector<32x32xbf16>, vector<16x32xf32> -> vector<16x32xf32>
    %54 = arith.addf %7, %53 : vector<16x32xf32>
    %55 = arith.mulf %54, %54 : vector<16x32xf32>
    %cst_28 = arith.constant dense<0.000000e+00> : vector<16xf32>
    %56 = vector.multi_reduction <add>, %55, %cst_28 [1] : vector<16x32xf32> to vector<16xf32>
    %57 = vector.shape_cast %56 : vector<16xf32> to vector<16x1xf32>
    %cst_29 = arith.constant 3.200000e+01 : f32
    %58 = vector.broadcast %cst_29 : f32 to vector<16x1xf32>
    %59 = arith.divf %57, %58 : vector<16x1xf32>
    %cst_30 = arith.constant 9.99999997E-7 : f32
    %60 = vector.broadcast %cst_30 : f32 to vector<16x1xf32>
    %61 = arith.addf %59, %60 : vector<16x1xf32>
    %62 = math.rsqrt %61 : vector<16x1xf32>
    %63 = vector.broadcast %62 : vector<16x1xf32> to vector<16x32xf32>
    %64 = arith.mulf %54, %63 : vector<16x32xf32>
    %65 = arith.truncf %64 : vector<16x32xf32> to vector<16x32xbf16>
    %c0_31 = arith.constant 0 : index
    %c0_32 = arith.constant 0 : index
    %c0_33 = arith.constant 0 : index
    %66 = vector.load %arg9[%c0_31, %c0_32, %c0_33] : memref<6x32x128xbf16, #tpu.memory_space<vmem>>, vector<1x32x128xbf16>
    %67 = vector.shape_cast %66 : vector<1x32x128xbf16> to vector<32x128xbf16>
    %cst_34 = arith.constant dense<0.000000e+00> : vector<16x128xf32>
    %68 = tpu.matmul %65, %67, %cst_34 {dimension_numbers = #tpu.dot_dimension_numbers<[1], [0], [0], [1], [0, 0, 1, 1], [], []>} : vector<16x32xbf16>, vector<32x128xbf16>, vector<16x128xf32> -> vector<16x128xf32>
    %69 = vector.extract_strided_slice %68 {offsets = [0, 0], sizes = [16, 64], strides = [1, 1]} : vector<16x128xf32> to vector<16x64xf32>
    %70 = vector.extract_strided_slice %68 {offsets = [0, 64], sizes = [16, 64], strides = [1, 1]} : vector<16x128xf32> to vector<16x64xf32>
    %71 = arith.negf %69 : vector<16x64xf32>
    %72 = math.exp %71 : vector<16x64xf32>
    %cst_35 = arith.constant 1.000000e+00 : f32
    %73 = vector.broadcast %cst_35 : f32 to vector<16x64xf32>
    %74 = arith.addf %73, %72 : vector<16x64xf32>
    %75 = arith.divf %73, %74 : vector<16x64xf32>
    %76 = arith.mulf %69, %75 : vector<16x64xf32>
    %77 = arith.mulf %76, %70 : vector<16x64xf32>
    %78 = arith.truncf %77 : vector<16x64xf32> to vector<16x64xbf16>
    %c0_36 = arith.constant 0 : index
    %c0_37 = arith.constant 0 : index
    %c0_38 = arith.constant 0 : index
    %79 = vector.load %arg10[%c0_36, %c0_37, %c0_38] : memref<6x64x32xbf16, #tpu.memory_space<vmem>>, vector<1x64x32xbf16>
    %80 = vector.shape_cast %79 : vector<1x64x32xbf16> to vector<64x32xbf16>
    %cst_39 = arith.constant dense<0.000000e+00> : vector<16x32xf32>
    %81 = tpu.matmul %78, %80, %cst_39 {dimension_numbers = #tpu.dot_dimension_numbers<[1], [0], [0], [1], [0, 0, 1, 1], [], []>} : vector<16x64xbf16>, vector<64x32xbf16>, vector<16x32xf32> -> vector<16x32xf32>
    %82 = arith.addf %54, %81 : vector<16x32xf32>
    %83 = arith.mulf %82, %82 : vector<16x32xf32>
    %cst_40 = arith.constant dense<0.000000e+00> : vector<16xf32>
    %84 = vector.multi_reduction <add>, %83, %cst_40 [1] : vector<16x32xf32> to vector<16xf32>
    %85 = vector.shape_cast %84 : vector<16xf32> to vector<16x1xf32>
    %cst_41 = arith.constant 3.200000e+01 : f32
    %86 = vector.broadcast %cst_41 : f32 to vector<16x1xf32>
    %87 = arith.divf %85, %86 : vector<16x1xf32>
    %cst_42 = arith.constant 9.99999997E-7 : f32
    %88 = vector.broadcast %cst_42 : f32 to vector<16x1xf32>
    %89 = arith.addf %87, %88 : vector<16x1xf32>
    %90 = math.rsqrt %89 : vector<16x1xf32>
    %91 = vector.broadcast %90 : vector<16x1xf32> to vector<16x32xf32>
    %92 = arith.mulf %82, %91 : vector<16x32xf32>
    %93 = arith.truncf %92 : vector<16x32xf32> to vector<16x32xbf16>
    %c1 = arith.constant 1 : index
    %c0_43 = arith.constant 0 : index
    %c0_44 = arith.constant 0 : index
    %94 = vector.load %arg7[%c1, %c0_43, %c0_44] : memref<6x32x160xbf16, #tpu.memory_space<vmem>>, vector<1x32x160xbf16>
    %95 = vector.shape_cast %94 : vector<1x32x160xbf16> to vector<32x160xbf16>
    %cst_45 = arith.constant dense<0.000000e+00> : vector<16x160xf32>
    %96 = tpu.matmul %93, %95, %cst_45 {dimension_numbers = #tpu.dot_dimension_numbers<[1], [0], [0], [1], [0, 0, 1, 1], [], []>} : vector<16x32xbf16>, vector<32x160xbf16>, vector<16x160xf32> -> vector<16x160xf32>
    %97 = vector.extract_strided_slice %96 {offsets = [0, 0], sizes = [16, 64], strides = [1, 1]} : vector<16x160xf32> to vector<16x64xf32>
    %98 = arith.mulf %97, %8 : vector<16x64xf32>
    %99 = vector.extract_strided_slice %96 {offsets = [0, 64], sizes = [16, 64], strides = [1, 1]} : vector<16x160xf32> to vector<16x64xf32>
    %100 = arith.mulf %99, %9 : vector<16x64xf32>
    %101 = arith.addf %98, %100 : vector<16x64xf32>
    %102 = vector.extract_strided_slice %101 {offsets = [0, 0], sizes = [16, 32], strides = [1, 1]} : vector<16x64xf32> to vector<16x32xf32>
    %103 = vector.extract_strided_slice %101 {offsets = [0, 32], sizes = [16, 32], strides = [1, 1]} : vector<16x64xf32> to vector<16x32xf32>
    %104 = vector.extract_strided_slice %96 {offsets = [0, 128], sizes = [16, 32], strides = [1, 1]} : vector<16x160xf32> to vector<16x32xf32>
    %105 = tpu.concatenate %103, %103, %103, %103 in 0 : vector<16x32xf32>, vector<16x32xf32>, vector<16x32xf32>, vector<16x32xf32> -> vector<64x32xf32>
    %106 = arith.mulf %10, %105 : vector<64x32xf32>
    %107 = tpu.concatenate %104, %104, %104, %104 in 0 : vector<16x32xf32>, vector<16x32xf32>, vector<16x32xf32>, vector<16x32xf32> -> vector<64x32xf32>
    %108 = arith.mulf %10, %107 : vector<64x32xf32>
    %cst_46 = arith.constant dense<0.000000e+00> : vector<16x64xf32>
    %109 = tpu.matmul %102, %106, %cst_46 {dimension_numbers = #tpu.dot_dimension_numbers<[1], [1], [0], [0], [0, 0, 1, 0], [], []>} : vector<16x32xf32>, vector<64x32xf32>, vector<16x64xf32> -> vector<16x64xf32>
    %110 = arith.addf %109, %11 : vector<16x64xf32>
    %cst_47 = arith.constant dense<0xFF800000> : vector<16xf32>
    %111 = vector.multi_reduction <maximumf>, %110, %cst_47 [1] : vector<16x64xf32> to vector<16xf32>
    %112 = vector.shape_cast %111 : vector<16xf32> to vector<16x1xf32>
    %113 = vector.broadcast %112 : vector<16x1xf32> to vector<16x64xf32>
    %114 = arith.subf %110, %113 : vector<16x64xf32>
    %115 = math.exp %114 : vector<16x64xf32>
    %cst_48 = arith.constant dense<0.000000e+00> : vector<16x64xf32>
    %116 = tpu.matmul %115, %12, %cst_48 {dimension_numbers = #tpu.dot_dimension_numbers<[1], [0], [0], [1], [0, 0, 1, 1], [], []>} : vector<16x64xf32>, vector<64x64xf32>, vector<16x64xf32> -> vector<16x64xf32>
    %117 = tpu.reciprocal %116 {approx = true} : vector<16x64xf32> -> vector<16x64xf32>
    %118 = arith.mulf %115, %117 : vector<16x64xf32>
    %cst_49 = arith.constant dense<0.000000e+00> : vector<16x32xf32>
    %119 = tpu.matmul %118, %108, %cst_49 {dimension_numbers = #tpu.dot_dimension_numbers<[1], [0], [0], [1], [0, 0, 1, 1], [], []>} : vector<16x64xf32>, vector<64x32xf32>, vector<16x32xf32> -> vector<16x32xf32>
    %120 = arith.truncf %119 : vector<16x32xf32> to vector<16x32xbf16>
    %c1_50 = arith.constant 1 : index
    %c0_51 = arith.constant 0 : index
    %c0_52 = arith.constant 0 : index
    %121 = vector.load %arg8[%c1_50, %c0_51, %c0_52] : memref<6x32x32xbf16, #tpu.memory_space<vmem>>, vector<1x32x32xbf16>
    %122 = vector.shape_cast %121 : vector<1x32x32xbf16> to vector<32x32xbf16>
    %cst_53 = arith.constant dense<0.000000e+00> : vector<16x32xf32>
    %123 = tpu.matmul %120, %122, %cst_53 {dimension_numbers = #tpu.dot_dimension_numbers<[1], [0], [0], [1], [0, 0, 1, 1], [], []>} : vector<16x32xbf16>, vector<32x32xbf16>, vector<16x32xf32> -> vector<16x32xf32>
    %124 = arith.addf %82, %123 : vector<16x32xf32>
    %125 = arith.mulf %124, %124 : vector<16x32xf32>
    %cst_54 = arith.constant dense<0.000000e+00> : vector<16xf32>
    %126 = vector.multi_reduction <add>, %125, %cst_54 [1] : vector<16x32xf32> to vector<16xf32>
    %127 = vector.shape_cast %126 : vector<16xf32> to vector<16x1xf32>
    %cst_55 = arith.constant 3.200000e+01 : f32
    %128 = vector.broadcast %cst_55 : f32 to vector<16x1xf32>
    %129 = arith.divf %127, %128 : vector<16x1xf32>
    %cst_56 = arith.constant 9.99999997E-7 : f32
    %130 = vector.broadcast %cst_56 : f32 to vector<16x1xf32>
    %131 = arith.addf %129, %130 : vector<16x1xf32>
    %132 = math.rsqrt %131 : vector<16x1xf32>
    %133 = vector.broadcast %132 : vector<16x1xf32> to vector<16x32xf32>
    %134 = arith.mulf %124, %133 : vector<16x32xf32>
    %135 = arith.truncf %134 : vector<16x32xf32> to vector<16x32xbf16>
    %c1_57 = arith.constant 1 : index
    %c0_58 = arith.constant 0 : index
    %c0_59 = arith.constant 0 : index
    %136 = vector.load %arg9[%c1_57, %c0_58, %c0_59] : memref<6x32x128xbf16, #tpu.memory_space<vmem>>, vector<1x32x128xbf16>
    %137 = vector.shape_cast %136 : vector<1x32x128xbf16> to vector<32x128xbf16>
    %cst_60 = arith.constant dense<0.000000e+00> : vector<16x128xf32>
    %138 = tpu.matmul %135, %137, %cst_60 {dimension_numbers = #tpu.dot_dimension_numbers<[1], [0], [0], [1], [0, 0, 1, 1], [], []>} : vector<16x32xbf16>, vector<32x128xbf16>, vector<16x128xf32> -> vector<16x128xf32>
    %139 = vector.extract_strided_slice %138 {offsets = [0, 0], sizes = [16, 64], strides = [1, 1]} : vector<16x128xf32> to vector<16x64xf32>
    %140 = vector.extract_strided_slice %138 {offsets = [0, 64], sizes = [16, 64], strides = [1, 1]} : vector<16x128xf32> to vector<16x64xf32>
    %141 = arith.negf %139 : vector<16x64xf32>
    %142 = math.exp %141 : vector<16x64xf32>
    %cst_61 = arith.constant 1.000000e+00 : f32
    %143 = vector.broadcast %cst_61 : f32 to vector<16x64xf32>
    %144 = arith.addf %143, %142 : vector<16x64xf32>
    %145 = arith.divf %143, %144 : vector<16x64xf32>
    %146 = arith.mulf %139, %145 : vector<16x64xf32>
    %147 = arith.mulf %146, %140 : vector<16x64xf32>
    %148 = arith.truncf %147 : vector<16x64xf32> to vector<16x64xbf16>
    %c1_62 = arith.constant 1 : index
    %c0_63 = arith.constant 0 : index
    %c0_64 = arith.constant 0 : index
    %149 = vector.load %arg10[%c1_62, %c0_63, %c0_64] : memref<6x64x32xbf16, #tpu.memory_space<vmem>>, vector<1x64x32xbf16>
    %150 = vector.shape_cast %149 : vector<1x64x32xbf16> to vector<64x32xbf16>
    %cst_65 = arith.constant dense<0.000000e+00> : vector<16x32xf32>
    %151 = tpu.matmul %148, %150, %cst_65 {dimension_numbers = #tpu.dot_dimension_numbers<[1], [0], [0], [1], [0, 0, 1, 1], [], []>} : vector<16x64xbf16>, vector<64x32xbf16>, vector<16x32xf32> -> vector<16x32xf32>
    %152 = arith.addf %124, %151 : vector<16x32xf32>
    %153 = arith.mulf %152, %152 : vector<16x32xf32>
    %cst_66 = arith.constant dense<0.000000e+00> : vector<16xf32>
    %154 = vector.multi_reduction <add>, %153, %cst_66 [1] : vector<16x32xf32> to vector<16xf32>
    %155 = vector.shape_cast %154 : vector<16xf32> to vector<16x1xf32>
    %cst_67 = arith.constant 3.200000e+01 : f32
    %156 = vector.broadcast %cst_67 : f32 to vector<16x1xf32>
    %157 = arith.divf %155, %156 : vector<16x1xf32>
    %cst_68 = arith.constant 9.99999997E-7 : f32
    %158 = vector.broadcast %cst_68 : f32 to vector<16x1xf32>
    %159 = arith.addf %157, %158 : vector<16x1xf32>
    %160 = math.rsqrt %159 : vector<16x1xf32>
    %161 = vector.broadcast %160 : vector<16x1xf32> to vector<16x32xf32>
    %162 = arith.mulf %152, %161 : vector<16x32xf32>
    %163 = arith.truncf %162 : vector<16x32xf32> to vector<16x32xbf16>
    %c2 = arith.constant 2 : index
    %c0_69 = arith.constant 0 : index
    %c0_70 = arith.constant 0 : index
    %164 = vector.load %arg7[%c2, %c0_69, %c0_70] : memref<6x32x160xbf16, #tpu.memory_space<vmem>>, vector<1x32x160xbf16>
    %165 = vector.shape_cast %164 : vector<1x32x160xbf16> to vector<32x160xbf16>
    %cst_71 = arith.constant dense<0.000000e+00> : vector<16x160xf32>
    %166 = tpu.matmul %163, %165, %cst_71 {dimension_numbers = #tpu.dot_dimension_numbers<[1], [0], [0], [1], [0, 0, 1, 1], [], []>} : vector<16x32xbf16>, vector<32x160xbf16>, vector<16x160xf32> -> vector<16x160xf32>
    %167 = vector.extract_strided_slice %166 {offsets = [0, 0], sizes = [16, 64], strides = [1, 1]} : vector<16x160xf32> to vector<16x64xf32>
    %168 = arith.mulf %167, %8 : vector<16x64xf32>
    %169 = vector.extract_strided_slice %166 {offsets = [0, 64], sizes = [16, 64], strides = [1, 1]} : vector<16x160xf32> to vector<16x64xf32>
    %170 = arith.mulf %169, %9 : vector<16x64xf32>
    %171 = arith.addf %168, %170 : vector<16x64xf32>
    %172 = vector.extract_strided_slice %171 {offsets = [0, 0], sizes = [16, 32], strides = [1, 1]} : vector<16x64xf32> to vector<16x32xf32>
    %173 = vector.extract_strided_slice %171 {offsets = [0, 32], sizes = [16, 32], strides = [1, 1]} : vector<16x64xf32> to vector<16x32xf32>
    %174 = vector.extract_strided_slice %166 {offsets = [0, 128], sizes = [16, 32], strides = [1, 1]} : vector<16x160xf32> to vector<16x32xf32>
    %175 = tpu.concatenate %173, %173, %173, %173 in 0 : vector<16x32xf32>, vector<16x32xf32>, vector<16x32xf32>, vector<16x32xf32> -> vector<64x32xf32>
    %176 = arith.mulf %10, %175 : vector<64x32xf32>
    %177 = tpu.concatenate %174, %174, %174, %174 in 0 : vector<16x32xf32>, vector<16x32xf32>, vector<16x32xf32>, vector<16x32xf32> -> vector<64x32xf32>
    %178 = arith.mulf %10, %177 : vector<64x32xf32>
    %cst_72 = arith.constant dense<0.000000e+00> : vector<16x64xf32>
    %179 = tpu.matmul %172, %176, %cst_72 {dimension_numbers = #tpu.dot_dimension_numbers<[1], [1], [0], [0], [0, 0, 1, 0], [], []>} : vector<16x32xf32>, vector<64x32xf32>, vector<16x64xf32> -> vector<16x64xf32>
    %180 = arith.addf %179, %11 : vector<16x64xf32>
    %cst_73 = arith.constant dense<0xFF800000> : vector<16xf32>
    %181 = vector.multi_reduction <maximumf>, %180, %cst_73 [1] : vector<16x64xf32> to vector<16xf32>
    %182 = vector.shape_cast %181 : vector<16xf32> to vector<16x1xf32>
    %183 = vector.broadcast %182 : vector<16x1xf32> to vector<16x64xf32>
    %184 = arith.subf %180, %183 : vector<16x64xf32>
    %185 = math.exp %184 : vector<16x64xf32>
    %cst_74 = arith.constant dense<0.000000e+00> : vector<16x64xf32>
    %186 = tpu.matmul %185, %12, %cst_74 {dimension_numbers = #tpu.dot_dimension_numbers<[1], [0], [0], [1], [0, 0, 1, 1], [], []>} : vector<16x64xf32>, vector<64x64xf32>, vector<16x64xf32> -> vector<16x64xf32>
    %187 = tpu.reciprocal %186 {approx = true} : vector<16x64xf32> -> vector<16x64xf32>
    %188 = arith.mulf %185, %187 : vector<16x64xf32>
    %cst_75 = arith.constant dense<0.000000e+00> : vector<16x32xf32>
    %189 = tpu.matmul %188, %178, %cst_75 {dimension_numbers = #tpu.dot_dimension_numbers<[1], [0], [0], [1], [0, 0, 1, 1], [], []>} : vector<16x64xf32>, vector<64x32xf32>, vector<16x32xf32> -> vector<16x32xf32>
    %190 = arith.truncf %189 : vector<16x32xf32> to vector<16x32xbf16>
    %c2_76 = arith.constant 2 : index
    %c0_77 = arith.constant 0 : index
    %c0_78 = arith.constant 0 : index
    %191 = vector.load %arg8[%c2_76, %c0_77, %c0_78] : memref<6x32x32xbf16, #tpu.memory_space<vmem>>, vector<1x32x32xbf16>
    %192 = vector.shape_cast %191 : vector<1x32x32xbf16> to vector<32x32xbf16>
    %cst_79 = arith.constant dense<0.000000e+00> : vector<16x32xf32>
    %193 = tpu.matmul %190, %192, %cst_79 {dimension_numbers = #tpu.dot_dimension_numbers<[1], [0], [0], [1], [0, 0, 1, 1], [], []>} : vector<16x32xbf16>, vector<32x32xbf16>, vector<16x32xf32> -> vector<16x32xf32>
    %194 = arith.addf %152, %193 : vector<16x32xf32>
    %195 = arith.mulf %194, %194 : vector<16x32xf32>
    %cst_80 = arith.constant dense<0.000000e+00> : vector<16xf32>
    %196 = vector.multi_reduction <add>, %195, %cst_80 [1] : vector<16x32xf32> to vector<16xf32>
    %197 = vector.shape_cast %196 : vector<16xf32> to vector<16x1xf32>
    %cst_81 = arith.constant 3.200000e+01 : f32
    %198 = vector.broadcast %cst_81 : f32 to vector<16x1xf32>
    %199 = arith.divf %197, %198 : vector<16x1xf32>
    %cst_82 = arith.constant 9.99999997E-7 : f32
    %200 = vector.broadcast %cst_82 : f32 to vector<16x1xf32>
    %201 = arith.addf %199, %200 : vector<16x1xf32>
    %202 = math.rsqrt %201 : vector<16x1xf32>
    %203 = vector.broadcast %202 : vector<16x1xf32> to vector<16x32xf32>
    %204 = arith.mulf %194, %203 : vector<16x32xf32>
    %205 = arith.truncf %204 : vector<16x32xf32> to vector<16x32xbf16>
    %c2_83 = arith.constant 2 : index
    %c0_84 = arith.constant 0 : index
    %c0_85 = arith.constant 0 : index
    %206 = vector.load %arg9[%c2_83, %c0_84, %c0_85] : memref<6x32x128xbf16, #tpu.memory_space<vmem>>, vector<1x32x128xbf16>
    %207 = vector.shape_cast %206 : vector<1x32x128xbf16> to vector<32x128xbf16>
    %cst_86 = arith.constant dense<0.000000e+00> : vector<16x128xf32>
    %208 = tpu.matmul %205, %207, %cst_86 {dimension_numbers = #tpu.dot_dimension_numbers<[1], [0], [0], [1], [0, 0, 1, 1], [], []>} : vector<16x32xbf16>, vector<32x128xbf16>, vector<16x128xf32> -> vector<16x128xf32>
    %209 = vector.extract_strided_slice %208 {offsets = [0, 0], sizes = [16, 64], strides = [1, 1]} : vector<16x128xf32> to vector<16x64xf32>
    %210 = vector.extract_strided_slice %208 {offsets = [0, 64], sizes = [16, 64], strides = [1, 1]} : vector<16x128xf32> to vector<16x64xf32>
    %211 = arith.negf %209 : vector<16x64xf32>
    %212 = math.exp %211 : vector<16x64xf32>
    %cst_87 = arith.constant 1.000000e+00 : f32
    %213 = vector.broadcast %cst_87 : f32 to vector<16x64xf32>
    %214 = arith.addf %213, %212 : vector<16x64xf32>
    %215 = arith.divf %213, %214 : vector<16x64xf32>
    %216 = arith.mulf %209, %215 : vector<16x64xf32>
    %217 = arith.mulf %216, %210 : vector<16x64xf32>
    %218 = arith.truncf %217 : vector<16x64xf32> to vector<16x64xbf16>
    %c2_88 = arith.constant 2 : index
    %c0_89 = arith.constant 0 : index
    %c0_90 = arith.constant 0 : index
    %219 = vector.load %arg10[%c2_88, %c0_89, %c0_90] : memref<6x64x32xbf16, #tpu.memory_space<vmem>>, vector<1x64x32xbf16>
    %220 = vector.shape_cast %219 : vector<1x64x32xbf16> to vector<64x32xbf16>
    %cst_91 = arith.constant dense<0.000000e+00> : vector<16x32xf32>
    %221 = tpu.matmul %218, %220, %cst_91 {dimension_numbers = #tpu.dot_dimension_numbers<[1], [0], [0], [1], [0, 0, 1, 1], [], []>} : vector<16x64xbf16>, vector<64x32xbf16>, vector<16x32xf32> -> vector<16x32xf32>
    %222 = arith.addf %194, %221 : vector<16x32xf32>
    %223 = arith.mulf %222, %222 : vector<16x32xf32>
    %cst_92 = arith.constant dense<0.000000e+00> : vector<16xf32>
    %224 = vector.multi_reduction <add>, %223, %cst_92 [1] : vector<16x32xf32> to vector<16xf32>
    %225 = vector.shape_cast %224 : vector<16xf32> to vector<16x1xf32>
    %cst_93 = arith.constant 3.200000e+01 : f32
    %226 = vector.broadcast %cst_93 : f32 to vector<16x1xf32>
    %227 = arith.divf %225, %226 : vector<16x1xf32>
    %cst_94 = arith.constant 9.99999997E-7 : f32
    %228 = vector.broadcast %cst_94 : f32 to vector<16x1xf32>
    %229 = arith.addf %227, %228 : vector<16x1xf32>
    %230 = math.rsqrt %229 : vector<16x1xf32>
    %231 = vector.broadcast %230 : vector<16x1xf32> to vector<16x32xf32>
    %232 = arith.mulf %222, %231 : vector<16x32xf32>
    %233 = arith.truncf %232 : vector<16x32xf32> to vector<16x32xbf16>
    %c3 = arith.constant 3 : index
    %c0_95 = arith.constant 0 : index
    %c0_96 = arith.constant 0 : index
    %234 = vector.load %arg7[%c3, %c0_95, %c0_96] : memref<6x32x160xbf16, #tpu.memory_space<vmem>>, vector<1x32x160xbf16>
    %235 = vector.shape_cast %234 : vector<1x32x160xbf16> to vector<32x160xbf16>
    %cst_97 = arith.constant dense<0.000000e+00> : vector<16x160xf32>
    %236 = tpu.matmul %233, %235, %cst_97 {dimension_numbers = #tpu.dot_dimension_numbers<[1], [0], [0], [1], [0, 0, 1, 1], [], []>} : vector<16x32xbf16>, vector<32x160xbf16>, vector<16x160xf32> -> vector<16x160xf32>
    %237 = vector.extract_strided_slice %236 {offsets = [0, 0], sizes = [16, 64], strides = [1, 1]} : vector<16x160xf32> to vector<16x64xf32>
    %238 = arith.mulf %237, %8 : vector<16x64xf32>
    %239 = vector.extract_strided_slice %236 {offsets = [0, 64], sizes = [16, 64], strides = [1, 1]} : vector<16x160xf32> to vector<16x64xf32>
    %240 = arith.mulf %239, %9 : vector<16x64xf32>
    %241 = arith.addf %238, %240 : vector<16x64xf32>
    %242 = vector.extract_strided_slice %241 {offsets = [0, 0], sizes = [16, 32], strides = [1, 1]} : vector<16x64xf32> to vector<16x32xf32>
    %243 = vector.extract_strided_slice %241 {offsets = [0, 32], sizes = [16, 32], strides = [1, 1]} : vector<16x64xf32> to vector<16x32xf32>
    %244 = vector.extract_strided_slice %236 {offsets = [0, 128], sizes = [16, 32], strides = [1, 1]} : vector<16x160xf32> to vector<16x32xf32>
    %245 = tpu.concatenate %243, %243, %243, %243 in 0 : vector<16x32xf32>, vector<16x32xf32>, vector<16x32xf32>, vector<16x32xf32> -> vector<64x32xf32>
    %246 = arith.mulf %10, %245 : vector<64x32xf32>
    %247 = tpu.concatenate %244, %244, %244, %244 in 0 : vector<16x32xf32>, vector<16x32xf32>, vector<16x32xf32>, vector<16x32xf32> -> vector<64x32xf32>
    %248 = arith.mulf %10, %247 : vector<64x32xf32>
    %cst_98 = arith.constant dense<0.000000e+00> : vector<16x64xf32>
    %249 = tpu.matmul %242, %246, %cst_98 {dimension_numbers = #tpu.dot_dimension_numbers<[1], [1], [0], [0], [0, 0, 1, 0], [], []>} : vector<16x32xf32>, vector<64x32xf32>, vector<16x64xf32> -> vector<16x64xf32>
    %250 = arith.addf %249, %11 : vector<16x64xf32>
    %cst_99 = arith.constant dense<0xFF800000> : vector<16xf32>
    %251 = vector.multi_reduction <maximumf>, %250, %cst_99 [1] : vector<16x64xf32> to vector<16xf32>
    %252 = vector.shape_cast %251 : vector<16xf32> to vector<16x1xf32>
    %253 = vector.broadcast %252 : vector<16x1xf32> to vector<16x64xf32>
    %254 = arith.subf %250, %253 : vector<16x64xf32>
    %255 = math.exp %254 : vector<16x64xf32>
    %cst_100 = arith.constant dense<0.000000e+00> : vector<16x64xf32>
    %256 = tpu.matmul %255, %12, %cst_100 {dimension_numbers = #tpu.dot_dimension_numbers<[1], [0], [0], [1], [0, 0, 1, 1], [], []>} : vector<16x64xf32>, vector<64x64xf32>, vector<16x64xf32> -> vector<16x64xf32>
    %257 = tpu.reciprocal %256 {approx = true} : vector<16x64xf32> -> vector<16x64xf32>
    %258 = arith.mulf %255, %257 : vector<16x64xf32>
    %cst_101 = arith.constant dense<0.000000e+00> : vector<16x32xf32>
    %259 = tpu.matmul %258, %248, %cst_101 {dimension_numbers = #tpu.dot_dimension_numbers<[1], [0], [0], [1], [0, 0, 1, 1], [], []>} : vector<16x64xf32>, vector<64x32xf32>, vector<16x32xf32> -> vector<16x32xf32>
    %260 = arith.truncf %259 : vector<16x32xf32> to vector<16x32xbf16>
    %c3_102 = arith.constant 3 : index
    %c0_103 = arith.constant 0 : index
    %c0_104 = arith.constant 0 : index
    %261 = vector.load %arg8[%c3_102, %c0_103, %c0_104] : memref<6x32x32xbf16, #tpu.memory_space<vmem>>, vector<1x32x32xbf16>
    %262 = vector.shape_cast %261 : vector<1x32x32xbf16> to vector<32x32xbf16>
    %cst_105 = arith.constant dense<0.000000e+00> : vector<16x32xf32>
    %263 = tpu.matmul %260, %262, %cst_105 {dimension_numbers = #tpu.dot_dimension_numbers<[1], [0], [0], [1], [0, 0, 1, 1], [], []>} : vector<16x32xbf16>, vector<32x32xbf16>, vector<16x32xf32> -> vector<16x32xf32>
    %264 = arith.addf %222, %263 : vector<16x32xf32>
    %265 = arith.mulf %264, %264 : vector<16x32xf32>
    %cst_106 = arith.constant dense<0.000000e+00> : vector<16xf32>
    %266 = vector.multi_reduction <add>, %265, %cst_106 [1] : vector<16x32xf32> to vector<16xf32>
    %267 = vector.shape_cast %266 : vector<16xf32> to vector<16x1xf32>
    %cst_107 = arith.constant 3.200000e+01 : f32
    %268 = vector.broadcast %cst_107 : f32 to vector<16x1xf32>
    %269 = arith.divf %267, %268 : vector<16x1xf32>
    %cst_108 = arith.constant 9.99999997E-7 : f32
    %270 = vector.broadcast %cst_108 : f32 to vector<16x1xf32>
    %271 = arith.addf %269, %270 : vector<16x1xf32>
    %272 = math.rsqrt %271 : vector<16x1xf32>
    %273 = vector.broadcast %272 : vector<16x1xf32> to vector<16x32xf32>
    %274 = arith.mulf %264, %273 : vector<16x32xf32>
    %275 = arith.truncf %274 : vector<16x32xf32> to vector<16x32xbf16>
    %c3_109 = arith.constant 3 : index
    %c0_110 = arith.constant 0 : index
    %c0_111 = arith.constant 0 : index
    %276 = vector.load %arg9[%c3_109, %c0_110, %c0_111] : memref<6x32x128xbf16, #tpu.memory_space<vmem>>, vector<1x32x128xbf16>
    %277 = vector.shape_cast %276 : vector<1x32x128xbf16> to vector<32x128xbf16>
    %cst_112 = arith.constant dense<0.000000e+00> : vector<16x128xf32>
    %278 = tpu.matmul %275, %277, %cst_112 {dimension_numbers = #tpu.dot_dimension_numbers<[1], [0], [0], [1], [0, 0, 1, 1], [], []>} : vector<16x32xbf16>, vector<32x128xbf16>, vector<16x128xf32> -> vector<16x128xf32>
    %279 = vector.extract_strided_slice %278 {offsets = [0, 0], sizes = [16, 64], strides = [1, 1]} : vector<16x128xf32> to vector<16x64xf32>
    %280 = vector.extract_strided_slice %278 {offsets = [0, 64], sizes = [16, 64], strides = [1, 1]} : vector<16x128xf32> to vector<16x64xf32>
    %281 = arith.negf %279 : vector<16x64xf32>
    %282 = math.exp %281 : vector<16x64xf32>
    %cst_113 = arith.constant 1.000000e+00 : f32
    %283 = vector.broadcast %cst_113 : f32 to vector<16x64xf32>
    %284 = arith.addf %283, %282 : vector<16x64xf32>
    %285 = arith.divf %283, %284 : vector<16x64xf32>
    %286 = arith.mulf %279, %285 : vector<16x64xf32>
    %287 = arith.mulf %286, %280 : vector<16x64xf32>
    %288 = arith.truncf %287 : vector<16x64xf32> to vector<16x64xbf16>
    %c3_114 = arith.constant 3 : index
    %c0_115 = arith.constant 0 : index
    %c0_116 = arith.constant 0 : index
    %289 = vector.load %arg10[%c3_114, %c0_115, %c0_116] : memref<6x64x32xbf16, #tpu.memory_space<vmem>>, vector<1x64x32xbf16>
    %290 = vector.shape_cast %289 : vector<1x64x32xbf16> to vector<64x32xbf16>
    %cst_117 = arith.constant dense<0.000000e+00> : vector<16x32xf32>
    %291 = tpu.matmul %288, %290, %cst_117 {dimension_numbers = #tpu.dot_dimension_numbers<[1], [0], [0], [1], [0, 0, 1, 1], [], []>} : vector<16x64xbf16>, vector<64x32xbf16>, vector<16x32xf32> -> vector<16x32xf32>
    %292 = arith.addf %264, %291 : vector<16x32xf32>
    %293 = arith.mulf %292, %292 : vector<16x32xf32>
    %cst_118 = arith.constant dense<0.000000e+00> : vector<16xf32>
    %294 = vector.multi_reduction <add>, %293, %cst_118 [1] : vector<16x32xf32> to vector<16xf32>
    %295 = vector.shape_cast %294 : vector<16xf32> to vector<16x1xf32>
    %cst_119 = arith.constant 3.200000e+01 : f32
    %296 = vector.broadcast %cst_119 : f32 to vector<16x1xf32>
    %297 = arith.divf %295, %296 : vector<16x1xf32>
    %cst_120 = arith.constant 9.99999997E-7 : f32
    %298 = vector.broadcast %cst_120 : f32 to vector<16x1xf32>
    %299 = arith.addf %297, %298 : vector<16x1xf32>
    %300 = math.rsqrt %299 : vector<16x1xf32>
    %301 = vector.broadcast %300 : vector<16x1xf32> to vector<16x32xf32>
    %302 = arith.mulf %292, %301 : vector<16x32xf32>
    %303 = arith.truncf %302 : vector<16x32xf32> to vector<16x32xbf16>
    %c4 = arith.constant 4 : index
    %c0_121 = arith.constant 0 : index
    %c0_122 = arith.constant 0 : index
    %304 = vector.load %arg7[%c4, %c0_121, %c0_122] : memref<6x32x160xbf16, #tpu.memory_space<vmem>>, vector<1x32x160xbf16>
    %305 = vector.shape_cast %304 : vector<1x32x160xbf16> to vector<32x160xbf16>
    %cst_123 = arith.constant dense<0.000000e+00> : vector<16x160xf32>
    %306 = tpu.matmul %303, %305, %cst_123 {dimension_numbers = #tpu.dot_dimension_numbers<[1], [0], [0], [1], [0, 0, 1, 1], [], []>} : vector<16x32xbf16>, vector<32x160xbf16>, vector<16x160xf32> -> vector<16x160xf32>
    %307 = vector.extract_strided_slice %306 {offsets = [0, 0], sizes = [16, 64], strides = [1, 1]} : vector<16x160xf32> to vector<16x64xf32>
    %308 = arith.mulf %307, %8 : vector<16x64xf32>
    %309 = vector.extract_strided_slice %306 {offsets = [0, 64], sizes = [16, 64], strides = [1, 1]} : vector<16x160xf32> to vector<16x64xf32>
    %310 = arith.mulf %309, %9 : vector<16x64xf32>
    %311 = arith.addf %308, %310 : vector<16x64xf32>
    %312 = vector.extract_strided_slice %311 {offsets = [0, 0], sizes = [16, 32], strides = [1, 1]} : vector<16x64xf32> to vector<16x32xf32>
    %313 = vector.extract_strided_slice %311 {offsets = [0, 32], sizes = [16, 32], strides = [1, 1]} : vector<16x64xf32> to vector<16x32xf32>
    %314 = vector.extract_strided_slice %306 {offsets = [0, 128], sizes = [16, 32], strides = [1, 1]} : vector<16x160xf32> to vector<16x32xf32>
    %315 = tpu.concatenate %313, %313, %313, %313 in 0 : vector<16x32xf32>, vector<16x32xf32>, vector<16x32xf32>, vector<16x32xf32> -> vector<64x32xf32>
    %316 = arith.mulf %10, %315 : vector<64x32xf32>
    %317 = tpu.concatenate %314, %314, %314, %314 in 0 : vector<16x32xf32>, vector<16x32xf32>, vector<16x32xf32>, vector<16x32xf32> -> vector<64x32xf32>
    %318 = arith.mulf %10, %317 : vector<64x32xf32>
    %cst_124 = arith.constant dense<0.000000e+00> : vector<16x64xf32>
    %319 = tpu.matmul %312, %316, %cst_124 {dimension_numbers = #tpu.dot_dimension_numbers<[1], [1], [0], [0], [0, 0, 1, 0], [], []>} : vector<16x32xf32>, vector<64x32xf32>, vector<16x64xf32> -> vector<16x64xf32>
    %320 = arith.addf %319, %11 : vector<16x64xf32>
    %cst_125 = arith.constant dense<0xFF800000> : vector<16xf32>
    %321 = vector.multi_reduction <maximumf>, %320, %cst_125 [1] : vector<16x64xf32> to vector<16xf32>
    %322 = vector.shape_cast %321 : vector<16xf32> to vector<16x1xf32>
    %323 = vector.broadcast %322 : vector<16x1xf32> to vector<16x64xf32>
    %324 = arith.subf %320, %323 : vector<16x64xf32>
    %325 = math.exp %324 : vector<16x64xf32>
    %cst_126 = arith.constant dense<0.000000e+00> : vector<16x64xf32>
    %326 = tpu.matmul %325, %12, %cst_126 {dimension_numbers = #tpu.dot_dimension_numbers<[1], [0], [0], [1], [0, 0, 1, 1], [], []>} : vector<16x64xf32>, vector<64x64xf32>, vector<16x64xf32> -> vector<16x64xf32>
    %327 = tpu.reciprocal %326 {approx = true} : vector<16x64xf32> -> vector<16x64xf32>
    %328 = arith.mulf %325, %327 : vector<16x64xf32>
    %cst_127 = arith.constant dense<0.000000e+00> : vector<16x32xf32>
    %329 = tpu.matmul %328, %318, %cst_127 {dimension_numbers = #tpu.dot_dimension_numbers<[1], [0], [0], [1], [0, 0, 1, 1], [], []>} : vector<16x64xf32>, vector<64x32xf32>, vector<16x32xf32> -> vector<16x32xf32>
    %330 = arith.truncf %329 : vector<16x32xf32> to vector<16x32xbf16>
    %c4_128 = arith.constant 4 : index
    %c0_129 = arith.constant 0 : index
    %c0_130 = arith.constant 0 : index
    %331 = vector.load %arg8[%c4_128, %c0_129, %c0_130] : memref<6x32x32xbf16, #tpu.memory_space<vmem>>, vector<1x32x32xbf16>
    %332 = vector.shape_cast %331 : vector<1x32x32xbf16> to vector<32x32xbf16>
    %cst_131 = arith.constant dense<0.000000e+00> : vector<16x32xf32>
    %333 = tpu.matmul %330, %332, %cst_131 {dimension_numbers = #tpu.dot_dimension_numbers<[1], [0], [0], [1], [0, 0, 1, 1], [], []>} : vector<16x32xbf16>, vector<32x32xbf16>, vector<16x32xf32> -> vector<16x32xf32>
    %334 = arith.addf %292, %333 : vector<16x32xf32>
    %335 = arith.mulf %334, %334 : vector<16x32xf32>
    %cst_132 = arith.constant dense<0.000000e+00> : vector<16xf32>
    %336 = vector.multi_reduction <add>, %335, %cst_132 [1] : vector<16x32xf32> to vector<16xf32>
    %337 = vector.shape_cast %336 : vector<16xf32> to vector<16x1xf32>
    %cst_133 = arith.constant 3.200000e+01 : f32
    %338 = vector.broadcast %cst_133 : f32 to vector<16x1xf32>
    %339 = arith.divf %337, %338 : vector<16x1xf32>
    %cst_134 = arith.constant 9.99999997E-7 : f32
    %340 = vector.broadcast %cst_134 : f32 to vector<16x1xf32>
    %341 = arith.addf %339, %340 : vector<16x1xf32>
    %342 = math.rsqrt %341 : vector<16x1xf32>
    %343 = vector.broadcast %342 : vector<16x1xf32> to vector<16x32xf32>
    %344 = arith.mulf %334, %343 : vector<16x32xf32>
    %345 = arith.truncf %344 : vector<16x32xf32> to vector<16x32xbf16>
    %c4_135 = arith.constant 4 : index
    %c0_136 = arith.constant 0 : index
    %c0_137 = arith.constant 0 : index
    %346 = vector.load %arg9[%c4_135, %c0_136, %c0_137] : memref<6x32x128xbf16, #tpu.memory_space<vmem>>, vector<1x32x128xbf16>
    %347 = vector.shape_cast %346 : vector<1x32x128xbf16> to vector<32x128xbf16>
    %cst_138 = arith.constant dense<0.000000e+00> : vector<16x128xf32>
    %348 = tpu.matmul %345, %347, %cst_138 {dimension_numbers = #tpu.dot_dimension_numbers<[1], [0], [0], [1], [0, 0, 1, 1], [], []>} : vector<16x32xbf16>, vector<32x128xbf16>, vector<16x128xf32> -> vector<16x128xf32>
    %349 = vector.extract_strided_slice %348 {offsets = [0, 0], sizes = [16, 64], strides = [1, 1]} : vector<16x128xf32> to vector<16x64xf32>
    %350 = vector.extract_strided_slice %348 {offsets = [0, 64], sizes = [16, 64], strides = [1, 1]} : vector<16x128xf32> to vector<16x64xf32>
    %351 = arith.negf %349 : vector<16x64xf32>
    %352 = math.exp %351 : vector<16x64xf32>
    %cst_139 = arith.constant 1.000000e+00 : f32
    %353 = vector.broadcast %cst_139 : f32 to vector<16x64xf32>
    %354 = arith.addf %353, %352 : vector<16x64xf32>
    %355 = arith.divf %353, %354 : vector<16x64xf32>
    %356 = arith.mulf %349, %355 : vector<16x64xf32>
    %357 = arith.mulf %356, %350 : vector<16x64xf32>
    %358 = arith.truncf %357 : vector<16x64xf32> to vector<16x64xbf16>
    %c4_140 = arith.constant 4 : index
    %c0_141 = arith.constant 0 : index
    %c0_142 = arith.constant 0 : index
    %359 = vector.load %arg10[%c4_140, %c0_141, %c0_142] : memref<6x64x32xbf16, #tpu.memory_space<vmem>>, vector<1x64x32xbf16>
    %360 = vector.shape_cast %359 : vector<1x64x32xbf16> to vector<64x32xbf16>
    %cst_143 = arith.constant dense<0.000000e+00> : vector<16x32xf32>
    %361 = tpu.matmul %358, %360, %cst_143 {dimension_numbers = #tpu.dot_dimension_numbers<[1], [0], [0], [1], [0, 0, 1, 1], [], []>} : vector<16x64xbf16>, vector<64x32xbf16>, vector<16x32xf32> -> vector<16x32xf32>
    %362 = arith.addf %334, %361 : vector<16x32xf32>
    %363 = arith.mulf %362, %362 : vector<16x32xf32>
    %cst_144 = arith.constant dense<0.000000e+00> : vector<16xf32>
    %364 = vector.multi_reduction <add>, %363, %cst_144 [1] : vector<16x32xf32> to vector<16xf32>
    %365 = vector.shape_cast %364 : vector<16xf32> to vector<16x1xf32>
    %cst_145 = arith.constant 3.200000e+01 : f32
    %366 = vector.broadcast %cst_145 : f32 to vector<16x1xf32>
    %367 = arith.divf %365, %366 : vector<16x1xf32>
    %cst_146 = arith.constant 9.99999997E-7 : f32
    %368 = vector.broadcast %cst_146 : f32 to vector<16x1xf32>
    %369 = arith.addf %367, %368 : vector<16x1xf32>
    %370 = math.rsqrt %369 : vector<16x1xf32>
    %371 = vector.broadcast %370 : vector<16x1xf32> to vector<16x32xf32>
    %372 = arith.mulf %362, %371 : vector<16x32xf32>
    %373 = arith.truncf %372 : vector<16x32xf32> to vector<16x32xbf16>
    %c5 = arith.constant 5 : index
    %c0_147 = arith.constant 0 : index
    %c0_148 = arith.constant 0 : index
    %374 = vector.load %arg7[%c5, %c0_147, %c0_148] : memref<6x32x160xbf16, #tpu.memory_space<vmem>>, vector<1x32x160xbf16>
    %375 = vector.shape_cast %374 : vector<1x32x160xbf16> to vector<32x160xbf16>
    %cst_149 = arith.constant dense<0.000000e+00> : vector<16x160xf32>
    %376 = tpu.matmul %373, %375, %cst_149 {dimension_numbers = #tpu.dot_dimension_numbers<[1], [0], [0], [1], [0, 0, 1, 1], [], []>} : vector<16x32xbf16>, vector<32x160xbf16>, vector<16x160xf32> -> vector<16x160xf32>
    %377 = vector.extract_strided_slice %376 {offsets = [0, 0], sizes = [16, 64], strides = [1, 1]} : vector<16x160xf32> to vector<16x64xf32>
    %378 = arith.mulf %377, %8 : vector<16x64xf32>
    %379 = vector.extract_strided_slice %376 {offsets = [0, 64], sizes = [16, 64], strides = [1, 1]} : vector<16x160xf32> to vector<16x64xf32>
    %380 = arith.mulf %379, %9 : vector<16x64xf32>
    %381 = arith.addf %378, %380 : vector<16x64xf32>
    %382 = vector.extract_strided_slice %381 {offsets = [0, 0], sizes = [16, 32], strides = [1, 1]} : vector<16x64xf32> to vector<16x32xf32>
    %383 = vector.extract_strided_slice %381 {offsets = [0, 32], sizes = [16, 32], strides = [1, 1]} : vector<16x64xf32> to vector<16x32xf32>
    %384 = vector.extract_strided_slice %376 {offsets = [0, 128], sizes = [16, 32], strides = [1, 1]} : vector<16x160xf32> to vector<16x32xf32>
    %385 = tpu.concatenate %383, %383, %383, %383 in 0 : vector<16x32xf32>, vector<16x32xf32>, vector<16x32xf32>, vector<16x32xf32> -> vector<64x32xf32>
    %386 = arith.mulf %10, %385 : vector<64x32xf32>
    %387 = tpu.concatenate %384, %384, %384, %384 in 0 : vector<16x32xf32>, vector<16x32xf32>, vector<16x32xf32>, vector<16x32xf32> -> vector<64x32xf32>
    %388 = arith.mulf %10, %387 : vector<64x32xf32>
    %cst_150 = arith.constant dense<0.000000e+00> : vector<16x64xf32>
    %389 = tpu.matmul %382, %386, %cst_150 {dimension_numbers = #tpu.dot_dimension_numbers<[1], [1], [0], [0], [0, 0, 1, 0], [], []>} : vector<16x32xf32>, vector<64x32xf32>, vector<16x64xf32> -> vector<16x64xf32>
    %390 = arith.addf %389, %11 : vector<16x64xf32>
    %cst_151 = arith.constant dense<0xFF800000> : vector<16xf32>
    %391 = vector.multi_reduction <maximumf>, %390, %cst_151 [1] : vector<16x64xf32> to vector<16xf32>
    %392 = vector.shape_cast %391 : vector<16xf32> to vector<16x1xf32>
    %393 = vector.broadcast %392 : vector<16x1xf32> to vector<16x64xf32>
    %394 = arith.subf %390, %393 : vector<16x64xf32>
    %395 = math.exp %394 : vector<16x64xf32>
    %cst_152 = arith.constant dense<0.000000e+00> : vector<16x64xf32>
    %396 = tpu.matmul %395, %12, %cst_152 {dimension_numbers = #tpu.dot_dimension_numbers<[1], [0], [0], [1], [0, 0, 1, 1], [], []>} : vector<16x64xf32>, vector<64x64xf32>, vector<16x64xf32> -> vector<16x64xf32>
    %397 = tpu.reciprocal %396 {approx = true} : vector<16x64xf32> -> vector<16x64xf32>
    %398 = arith.mulf %395, %397 : vector<16x64xf32>
    %cst_153 = arith.constant dense<0.000000e+00> : vector<16x32xf32>
    %399 = tpu.matmul %398, %388, %cst_153 {dimension_numbers = #tpu.dot_dimension_numbers<[1], [0], [0], [1], [0, 0, 1, 1], [], []>} : vector<16x64xf32>, vector<64x32xf32>, vector<16x32xf32> -> vector<16x32xf32>
    %400 = arith.truncf %399 : vector<16x32xf32> to vector<16x32xbf16>
    %c5_154 = arith.constant 5 : index
    %c0_155 = arith.constant 0 : index
    %c0_156 = arith.constant 0 : index
    %401 = vector.load %arg8[%c5_154, %c0_155, %c0_156] : memref<6x32x32xbf16, #tpu.memory_space<vmem>>, vector<1x32x32xbf16>
    %402 = vector.shape_cast %401 : vector<1x32x32xbf16> to vector<32x32xbf16>
    %cst_157 = arith.constant dense<0.000000e+00> : vector<16x32xf32>
    %403 = tpu.matmul %400, %402, %cst_157 {dimension_numbers = #tpu.dot_dimension_numbers<[1], [0], [0], [1], [0, 0, 1, 1], [], []>} : vector<16x32xbf16>, vector<32x32xbf16>, vector<16x32xf32> -> vector<16x32xf32>
    %404 = arith.addf %362, %403 : vector<16x32xf32>
    %405 = arith.mulf %404, %404 : vector<16x32xf32>
    %cst_158 = arith.constant dense<0.000000e+00> : vector<16xf32>
    %406 = vector.multi_reduction <add>, %405, %cst_158 [1] : vector<16x32xf32> to vector<16xf32>
    %407 = vector.shape_cast %406 : vector<16xf32> to vector<16x1xf32>
    %cst_159 = arith.constant 3.200000e+01 : f32
    %408 = vector.broadcast %cst_159 : f32 to vector<16x1xf32>
    %409 = arith.divf %407, %408 : vector<16x1xf32>
    %cst_160 = arith.constant 9.99999997E-7 : f32
    %410 = vector.broadcast %cst_160 : f32 to vector<16x1xf32>
    %411 = arith.addf %409, %410 : vector<16x1xf32>
    %412 = math.rsqrt %411 : vector<16x1xf32>
    %413 = vector.broadcast %412 : vector<16x1xf32> to vector<16x32xf32>
    %414 = arith.mulf %404, %413 : vector<16x32xf32>
    %415 = arith.truncf %414 : vector<16x32xf32> to vector<16x32xbf16>
    %c5_161 = arith.constant 5 : index
    %c0_162 = arith.constant 0 : index
    %c0_163 = arith.constant 0 : index
    %416 = vector.load %arg9[%c5_161, %c0_162, %c0_163] : memref<6x32x128xbf16, #tpu.memory_space<vmem>>, vector<1x32x128xbf16>
    %417 = vector.shape_cast %416 : vector<1x32x128xbf16> to vector<32x128xbf16>
    %cst_164 = arith.constant dense<0.000000e+00> : vector<16x128xf32>
    %418 = tpu.matmul %415, %417, %cst_164 {dimension_numbers = #tpu.dot_dimension_numbers<[1], [0], [0], [1], [0, 0, 1, 1], [], []>} : vector<16x32xbf16>, vector<32x128xbf16>, vector<16x128xf32> -> vector<16x128xf32>
    %419 = vector.extract_strided_slice %418 {offsets = [0, 0], sizes = [16, 64], strides = [1, 1]} : vector<16x128xf32> to vector<16x64xf32>
    %420 = vector.extract_strided_slice %418 {offsets = [0, 64], sizes = [16, 64], strides = [1, 1]} : vector<16x128xf32> to vector<16x64xf32>
    %421 = arith.negf %419 : vector<16x64xf32>
    %422 = math.exp %421 : vector<16x64xf32>
    %cst_165 = arith.constant 1.000000e+00 : f32
    %423 = vector.broadcast %cst_165 : f32 to vector<16x64xf32>
    %424 = arith.addf %423, %422 : vector<16x64xf32>
    %425 = arith.divf %423, %424 : vector<16x64xf32>
    %426 = arith.mulf %419, %425 : vector<16x64xf32>
    %427 = arith.mulf %426, %420 : vector<16x64xf32>
    %428 = arith.truncf %427 : vector<16x64xf32> to vector<16x64xbf16>
    %c5_166 = arith.constant 5 : index
    %c0_167 = arith.constant 0 : index
    %c0_168 = arith.constant 0 : index
    %429 = vector.load %arg10[%c5_166, %c0_167, %c0_168] : memref<6x64x32xbf16, #tpu.memory_space<vmem>>, vector<1x64x32xbf16>
    %430 = vector.shape_cast %429 : vector<1x64x32xbf16> to vector<64x32xbf16>
    %cst_169 = arith.constant dense<0.000000e+00> : vector<16x32xf32>
    %431 = tpu.matmul %428, %430, %cst_169 {dimension_numbers = #tpu.dot_dimension_numbers<[1], [0], [0], [1], [0, 0, 1, 1], [], []>} : vector<16x64xbf16>, vector<64x32xbf16>, vector<16x32xf32> -> vector<16x32xf32>
    %432 = arith.addf %404, %431 : vector<16x32xf32>
    %c0_170 = arith.constant 0 : index
    %c0_171 = arith.constant 0 : index
    %433 = vector.load %arg11[%c0_170, %c0_171] : memref<16x32xf32, #tpu.memory_space<vmem>>, vector<16x32xf32>
    tpu.vector_store %arg11[%c0_170, %c0_171], %432 {strides = array<i32>} : memref<16x32xf32, #tpu.memory_space<vmem>>, vector<16x32xf32>,
    return
  }
}

</mosaic_0001>

<llo_original>
// kernel: part0_forward.1
$region0: #{part0_forward.1}
  #allocation0 [shape = 'u32[]', space=smem, size = 0x4, offset = 0x4, fixed_abs, tag = 'smem constant byte address 0x4 - core index']
  #allocation1 [shape = 'u32[144,128]{1,0:T(1,128)}', space=vmem, size = 0x12000, scoped, tag = 'internal scratch']
  %s0 = inlined_call_operand.vmem [shape: s32[16,1], index: 0, kind: input, shape index: {}]
  %s1 = inlined_call_operand.vmem [shape: f32[128,32], index: 1, kind: input, shape index: {}]
  %s2 = inlined_call_operand.vmem [shape: f32[16,64], index: 2, kind: input, shape index: {}]
  %s3 = inlined_call_operand.vmem [shape: f32[16,64], index: 3, kind: input, shape index: {}]
  %s4 = inlined_call_operand.vmem [shape: f32[64,32], index: 4, kind: input, shape index: {}]
  %s5 = inlined_call_operand.vmem [shape: f32[16,64], index: 5, kind: input, shape index: {}]
  %s6 = inlined_call_operand.vmem [shape: f32[64,64], index: 6, kind: input, shape index: {}]
  %s7 = inlined_call_operand.vmem [shape: bf16[6,32,160], index: 7, kind: input, shape index: {}]
  %s8 = inlined_call_operand.vmem [shape: bf16[6,32,32], index: 8, kind: input, shape index: {}]
  %s9 = inlined_call_operand.vmem [shape: bf16[6,32,128], index: 9, kind: input, shape index: {}]
  %s10 = inlined_call_operand.vmem [shape: bf16[6,64,32], index: 10, kind: input, shape index: {}]
  %s11 = inlined_call_operand.hbm [shape: f32[16,32], index: 11, kind: output, shape index: {}]
  %s12 = sld [smem:[#allocation0]]
  $region54: #{part0_forward.1} parent=0
    _
  %s14 = ssub.s32 1, %s12
  %s15 = scalar_select 0, %s14, %s12
  $region1: #{part0_forward.1} parent=0
    #allocation2 [shape = 'u8[8192]{0}', space=vmem, size = 0x2000, scoped, tag = 'output window, operand 0, single buffered']
    #allocation3 [shape = 's32[1]{0}', space=sflag, size = 0x4, scoped, tag = 'scoped memory for part0_forward.1']
    %16 = vsyncpa [#allocation3], 0
    // Predicated region
    $region2: #{part0_forward.1} parent=1 // pred_check
      _
    $region3: #{part0_forward.1} parent=1 // pred_check_branch
      %18 = sbr.rel (0) target = $region5
    $region4: #{part0_forward.1} parent=1 // pred_region
      _
    $region5: #{part0_forward.1} parent=1 // pred_fallthru
      _
    // Predicated region
    $region6: #{part0_forward.1} parent=1 // pred_check
      _
    $region7: #{part0_forward.1} parent=1 // pred_check_branch
      %20 = sbr.rel (0) target = $region9
    $region8: #{part0_forward.1} parent=1 // pred_region
      _
    $region9: #{part0_forward.1} parent=1 // pred_fallthru
      _
    // Predicated region
    $region10: #{part0_forward.1} parent=1 // pred_check
      _
    $region11: #{part0_forward.1} parent=1 // pred_check_branch
      %22 = sbr.rel (0) target = $region13
    $region12: #{part0_forward.1} parent=1 // pred_region
      _
    $region13: #{part0_forward.1} parent=1 // pred_fallthru
      _
    // Predicated region
    $region14: #{part0_forward.1} parent=1 // pred_check
      _
    $region15: #{part0_forward.1} parent=1 // pred_check_branch
      %24 = sbr.rel (0) target = $region17
    $region16: #{part0_forward.1} parent=1 // pred_region
      _
    $region17: #{part0_forward.1} parent=1 // pred_fallthru
      _
    // Predicated region
    $region18: #{part0_forward.1} parent=1 // pred_check
      _
    $region19: #{part0_forward.1} parent=1 // pred_check_branch
      %26 = sbr.rel (0) target = $region21
    $region20: #{part0_forward.1} parent=1 // pred_region
      _
    $region21: #{part0_forward.1} parent=1 // pred_fallthru
      _
    // Predicated region
    $region22: #{part0_forward.1} parent=1 // pred_check
      _
    $region23: #{part0_forward.1} parent=1 // pred_check_branch
      %28 = sbr.rel (0) target = $region25
    $region24: #{part0_forward.1} parent=1 // pred_region
      _
    $region25: #{part0_forward.1} parent=1 // pred_fallthru
      _
    // Predicated region
    $region26: #{part0_forward.1} parent=1 // pred_check
      _
    $region27: #{part0_forward.1} parent=1 // pred_check_branch
      %30 = sbr.rel (0) target = $region29
    $region28: #{part0_forward.1} parent=1 // pred_region
      _
    $region29: #{part0_forward.1} parent=1 // pred_fallthru
      _
    // Predicated region
    $region30: #{part0_forward.1} parent=1 // pred_check
      _
    $region31: #{part0_forward.1} parent=1 // pred_check_branch
      %32 = sbr.rel (0) target = $region33
    $region32: #{part0_forward.1} parent=1 // pred_region
      _
    $region33: #{part0_forward.1} parent=1 // pred_fallthru
      _
    // Predicated region
    $region34: #{part0_forward.1} parent=1 // pred_check
      _
    $region35: #{part0_forward.1} parent=1 // pred_check_branch
      %34 = sbr.rel (0) target = $region37
    $region36: #{part0_forward.1} parent=1 // pred_region
      _
    $region37: #{part0_forward.1} parent=1 // pred_fallthru
      _
    // Predicated region
    $region38: #{part0_forward.1} parent=1 // pred_check
      _
    $region39: #{part0_forward.1} parent=1 // pred_check_branch
      %36 = sbr.rel (0) target = $region41
    $region40: #{part0_forward.1} parent=1 // pred_region
      _
    $region41: #{part0_forward.1} parent=1 // pred_fallthru
      _
    // Predicated region
    $region42: #{part0_forward.1} parent=1 // pred_check
      _
    $region43: #{part0_forward.1} parent=1 // pred_check_branch
      %38 = sbr.rel (0) target = $region45
    $region44: #{part0_forward.1} parent=1 // pred_region
      _
    $region45: #{part0_forward.1} parent=1 // pred_fallthru
      _
    %v40 = vld [vmem:[%s0] sm:$0xff]
    %v41 = vld [vmem:[%s0 + $0x8] sm:$0xff]
    %v42 = vlaneseq
    %v43 = vand.u32 %v42, 127
    %44 = vset.pattern.permute.xlu0 0
    %45 = vperm.xlu0 %44, %v40
    %v46 = vpop.permute.xlu0 %45
    %47 = vset.pattern.permute.xlu0 0
    %48 = vperm.xlu0 %47, %v41
    %v49 = vpop.permute.xlu0 %48
    %vm50 = vcmp.eq.s32.totalorder %v46, %v43
    %vm51 = vcmp.eq.s32.totalorder %v49, %v43
    %v52 = vsel %vm50, 1, 0
    %v53 = vsel %vm51, 1, 0
    %v54 = vcvt.s32.f32 %v52
    %v55 = vcvt.s32.f32 %v53
    %v56 = vld [vmem:[%s1] sm:$0xff]
    %v57 = vld [vmem:[%s1 + $0x8] sm:$0xff]
    %v58 = vld [vmem:[%s1 + $0x10] sm:$0xff]
    %v59 = vld [vmem:[%s1 + $0x18] sm:$0xff]
    %v60 = vld [vmem:[%s1 + $0x20] sm:$0xff]
    %v61 = vld [vmem:[%s1 + $0x28] sm:$0xff]
    %v62 = vld [vmem:[%s1 + $0x30] sm:$0xff]
    %v63 = vld [vmem:[%s1 + $0x38] sm:$0xff]
    %v64 = vld [vmem:[%s1 + $0x40] sm:$0xff]
    %v65 = vld [vmem:[%s1 + $0x48] sm:$0xff]
    %v66 = vld [vmem:[%s1 + $0x50] sm:$0xff]
    %v67 = vld [vmem:[%s1 + $0x58] sm:$0xff]
    %v68 = vld [vmem:[%s1 + $0x60] sm:$0xff]
    %v69 = vld [vmem:[%s1 + $0x68] sm:$0xff]
    %v70 = vld [vmem:[%s1 + $0x70] sm:$0xff]
    %v71 = vld [vmem:[%s1 + $0x78] sm:$0xff]
    %72 = vmatprep.subr.mxu0 0.0
    %73 = vmatpush1.msra.mxu0 %v56
    %74 = vmatprep.subr.mxu0 0.0
    %75 = vmatpush1.msra.mxu0 %v57
    %76 = vmatprep.subr.mxu0 0.0
    %77 = vmatpush1.msra.mxu0 %v58
    %78 = vmatprep.subr.mxu0 0.0
    %79 = vmatpush1.msra.mxu0 %v59
    %80 = vmatprep.subr.mxu0 0.0
    %81 = vmatpush1.msra.mxu0 %v60
    %82 = vmatprep.subr.mxu0 0.0
    %83 = vmatpush1.msra.mxu0 %v61
    %84 = vmatprep.subr.mxu0 0.0
    %85 = vmatpush1.msra.mxu0 %v62
    %86 = vmatprep.subr.mxu0 0.0
    %87 = vmatpush1.msra.mxu0 %v63
    %88 = vmatprep.subr.mxu0 0.0
    %89 = vmatpush1.msra.mxu0 %v64
    %90 = vmatprep.subr.mxu0 0.0
    %91 = vmatpush1.msra.mxu0 %v65
    %92 = vmatprep.subr.mxu0 0.0
    %93 = vmatpush1.msra.mxu0 %v66
    %94 = vmatprep.subr.mxu0 0.0
    %95 = vmatpush1.msra.mxu0 %v67
    %96 = vmatprep.subr.mxu0 0.0
    %97 = vmatpush1.msra.mxu0 %v68
    %98 = vmatprep.subr.mxu0 0.0
    %99 = vmatpush1.msra.mxu0 %v69
    %100 = vmatprep.subr.mxu0 0.0
    %101 = vmatpush1.msra.mxu0 %v70
    %102 = vmatprep.subr.mxu0 0.0
    %103 = vmatpush1.msra.mxu0 %v71
    %104 = vmatprep.subr.mxu0 0.0
    %105 = vmatpush1.msra.mxu0 0.0
    %106 = vmatprep.subr.mxu0 0.0
    %107 = vmatpush1.msra.mxu0 0.0
    %108 = vmatprep.subr.mxu0 0.0
    %109 = vmatpush1.msra.mxu0 0.0
    %110 = vmatprep.subr.mxu0 0.0
    %111 = vmatpush1.msra.mxu0 0.0
    %112 = vmatprep.subr.mxu0 0.0
    %113 = vmatpush1.msra.mxu0 0.0
    %114 = vmatprep.subr.mxu0 0.0
    %115 = vmatpush1.msra.mxu0 0.0
    %116 = vmatprep.subr.mxu0 0.0
    %117 = vmatpush1.msra.mxu0 0.0
    %118 = vmatprep.subr.mxu0 0.0
    %119 = vmatpush1.msra.mxu0 0.0
    %120 = vmatprep.subr.mxu0 0.0
    %121 = vmatpush1.msra.mxu0 0.0
    %122 = vmatprep.subr.mxu0 0.0
    %123 = vmatpush1.msra.mxu0 0.0
    %124 = vmatprep.subr.mxu0 0.0
    %125 = vmatpush1.msra.mxu0 0.0
    %126 = vmatprep.subr.mxu0 0.0
    %127 = vmatpush1.msra.mxu0 0.0
    %128 = vmatprep.subr.mxu0 0.0
    %129 = vmatpush1.msra.mxu0 0.0
    %130 = vmatprep.subr.mxu0 0.0
    %131 = vmatpush1.msra.mxu0 0.0
    %132 = vmatprep.subr.mxu0 0.0
    %133 = vmatpush1.msra.mxu0 0.0
    %134 = vmatprep.subr.mxu0 0.0
    %135 = vmatpush1.msra.mxu0 0.0
    %136 = vmatprep.mubr.f32.mxu0 0.0
    %137 = vmatmul.mubr.f32.gmra.mrb[0].mxu0 %v54
    %v138 = vpop.f32.mrb[0].mxu0
    %v139 = vadd.f32 0.0, %v138
    %v140 = vpop.f32.mrb[0].mxu0
    %141 = vmatprep.mubr.f32.mxu0 0.0
    %142 = vmatmul.mubr.f32.gmra.mrb[0].mxu0 %v55
    %v143 = vpop.f32.mrb[0].mxu0
    %v144 = vadd.f32 0.0, %v143
    %v145 = vpop.f32.mrb[0].mxu0
    %146 = vdwg.mxu0
    %v147 = vld [vmem:[%s2] sm:$0xff]
    %v148 = vld [vmem:[%s2 + $0x8] sm:$0xff]
    %v149 = vld [vmem:[%s3] sm:$0xff]
    %v150 = vld [vmem:[%s3 + $0x8] sm:$0xff]
    %v151 = vld [vmem:[%s4] sm:$0xff]
    %v152 = vld [vmem:[%s4 + $0x8] sm:$0xff]
    %v153 = vld [vmem:[%s4 + $0x10] sm:$0xff]
    %v154 = vld [vmem:[%s4 + $0x18] sm:$0xff]
    %v155 = vld [vmem:[%s4 + $0x20] sm:$0xff]
    %v156 = vld [vmem:[%s4 + $0x28] sm:$0xff]
    %v157 = vld [vmem:[%s4 + $0x30] sm:$0xff]
    %v158 = vld [vmem:[%s4 + $0x38] sm:$0xff]
    %v159 = vld [vmem:[%s5] sm:$0xff]
    %v160 = vld [vmem:[%s5 + $0x8] sm:$0xff]
    %v161 = vld [vmem:[%s6] sm:$0xff]
    %v162 = vld [vmem:[%s6 + $0x8] sm:$0xff]
    %v163 = vld [vmem:[%s6 + $0x10] sm:$0xff]
    %v164 = vld [vmem:[%s6 + $0x18] sm:$0xff]
    %v165 = vld [vmem:[%s6 + $0x20] sm:$0xff]
    %v166 = vld [vmem:[%s6 + $0x28] sm:$0xff]
    %v167 = vld [vmem:[%s6 + $0x30] sm:$0xff]
    %v168 = vld [vmem:[%s6 + $0x38] sm:$0xff]
    %v169 = vmul.f32 %v139, %v139
    %v170 = vmul.f32 %v144, %v144
    %vm171 = vcmask 261120
    %v172 = vsel %vm171, %v169, 0.0
    %173 = vadd.xlane.f32.xlu0 %v172
    %v174 = vpop.xlane.xlu0 %173
    %v175 = vsel %vm171, %v170, 0.0
    %176 = vadd.xlane.f32.xlu0 %v175
    %v177 = vpop.xlane.xlu0 %176
    %v178 = vrcp.pop 32.0
    %v179 = vmul.f32 %v174, %v178
    %v180 = vmul.f32 %v177, %v178
    %v181 = vadd.f32 %v179, 1e-06
    %v182 = vadd.f32 %v180, 1e-06
    %v183 = vrsqrt.pop %v181
    %v184 = vrsqrt.pop %v182
    %v185 = vmul.f32 %v139, %v183
    %v186 = vmul.f32 %v144, %v184
    %v187 = vpack.c.bf16 %v186, %v185
    %v188 = vld [vmem:[%s7] sm:$0xff]
    %v189 = vld [vmem:[%s7 + $0x8] sm:$0xff]
    %v190 = vld [vmem:[%s7 + $0x10] sm:$0xff]
    %v191 = vld [vmem:[%s7 + $0x18] sm:$0xff]
    %v196 = vunpack.c.l.b16 %v188
    %v197 = vunpack.c.h.b16 %v188
    %v198 = vunpack.c.l.b16 %v189
    %v199 = vunpack.c.h.b16 %v189
    %v200 = vunpack.c.l.b16 %v190
    %v201 = vunpack.c.h.b16 %v190
    %v202 = vunpack.c.l.b16 %v191
    %v203 = vunpack.c.h.b16 %v191
    %v204 = vpack.c.b16 %v198, %v196
    %v205 = vpack.c.b16 %v199, %v197
    %v206 = vpack.c.b16 %v202, %v200
    %v207 = vpack.c.b16 %v203, %v201
    %v213 = vsel %vm171, %v187, 0
    %215 = vmatprep.subr.bf16.mxu0 %v205
    %216 = vmatpush1.bf16.msra.mxu0 %v204
    %217 = vmatprep.subr.bf16.mxu0 %v207
    %218 = vmatpush1.bf16.msra.mxu0 %v206
    %219 = vmatprep.subr.bf16.mxu0 0
    %220 = vmatpush1.bf16.msra.mxu0 0
    %221 = vmatprep.subr.bf16.mxu0 0
    %222 = vmatpush1.bf16.msra.mxu0 0
    %223 = vmatprep.subr.bf16.mxu0 0
    %224 = vmatpush1.bf16.msra.mxu0 0
    %225 = vmatprep.subr.bf16.mxu0 0
    %226 = vmatpush1.bf16.msra.mxu0 0
    %227 = vmatprep.subr.bf16.mxu0 0
    %228 = vmatpush1.bf16.msra.mxu0 0
    %229 = vmatprep.subr.bf16.mxu0 0
    %230 = vmatpush1.bf16.msra.mxu0 0
    %231 = vmatprep.subr.bf16.mxu0 0
    %232 = vmatpush1.bf16.msra.mxu0 0
    %233 = vmatprep.subr.bf16.mxu0 0
    %234 = vmatpush1.bf16.msra.mxu0 0
    %235 = vmatprep.subr.bf16.mxu0 0
    %236 = vmatpush1.bf16.msra.mxu0 0
    %237 = vmatprep.subr.bf16.mxu0 0
    %238 = vmatpush1.bf16.msra.mxu0 0
    %239 = vmatprep.subr.bf16.mxu0 0
    %240 = vmatpush1.bf16.msra.mxu0 0
    %241 = vmatprep.subr.bf16.mxu0 0
    %242 = vmatpush1.bf16.msra.mxu0 0
    %243 = vmatprep.subr.bf16.mxu0 0
    %244 = vmatpush1.bf16.msra.mxu0 0
    %245 = vmatprep.subr.bf16.mxu0 0
    %246 = vmatpush1.bf16.msra.mxu0 0
    %247 = vmatprep.mubr.bf16.mxu0 0
    %248 = vmatmul.mubr.bf16.gmra.mrb[0].mxu0 %v213
    %v249 = vpop.f32.mrb[0].mxu0
    %v250 = vadd.f32 0.0, %v249
    %v251 = vpop.f32.mrb[0].mxu0
    %v252 = vadd.f32 0.0, %v251
    %v253 = vpop.f32.mrb[0].mxu0
    %v254 = vadd.f32 0.0, %v253
    %v255 = vpop.f32.mrb[0].mxu0
    %v256 = vadd.f32 0.0, %v255
    %257 = vdwg.mxu0
    %v258 = vmul.f32 %v250, %v147
    %v259 = vmul.f32 %v254, %v148
    %262 = vrot.lane.b32.xlu0 %v149, 64
    %v263 = vpop.permute.xlu0 %262
    %264 = vrot.lane.b32.xlu0 %v150, 64
    %v265 = vpop.permute.xlu0 %264
    %v268 = vmul.f32 %v250, %v263
    %v269 = vmul.f32 %v254, %v265
    %272 = vrot.lane.b32.xlu0 %v268, 64
    %v273 = vpop.permute.xlu0 %272
    %274 = vrot.lane.b32.xlu0 %v269, 64
    %v275 = vpop.permute.xlu0 %274
    %v278 = vadd.f32 %v258, %v273
    %v279 = vadd.f32 %v259, %v275
    %282 = vrot.lane.b32.xlu0 %v278, 96
    %v283 = vpop.permute.xlu0 %282
    %284 = vrot.lane.b32.xlu0 %v279, 96
    %v285 = vpop.permute.xlu0 %284
    %v288 = vmul.f32 %v151, %v283
    %v289 = vmul.f32 %v152, %v285
    %v290 = vmul.f32 %v153, %v283
    %v291 = vmul.f32 %v154, %v285
    %v292 = vmul.f32 %v155, %v283
    %v293 = vmul.f32 %v156, %v285
    %v294 = vmul.f32 %v157, %v283
    %v295 = vmul.f32 %v158, %v285
    %v296 = vmul.f32 %v151, %v252
    %v297 = vmul.f32 %v152, %v256
    %v298 = vmul.f32 %v153, %v252
    %v299 = vmul.f32 %v154, %v256
    %v300 = vmul.f32 %v155, %v252
    %v301 = vmul.f32 %v156, %v256
    %v302 = vmul.f32 %v157, %v252
    %v303 = vmul.f32 %v158, %v256
    %v304 = vsel %vm171, %v278, 0
    %v306 = vsel %vm171, %v279, 0
    %v309 = vsel %vm171, %v288, 0
    %v312 = vsel %vm171, %v289, 0
    %v315 = vsel %vm171, %v290, 0
    %v318 = vsel %vm171, %v291, 0
    %v321 = vsel %vm171, %v292, 0
    %v324 = vsel %vm171, %v293, 0
    %v327 = vsel %vm171, %v294, 0
    %v330 = vsel %vm171, %v295, 0
    %332 = vmatprep.subr.mxu0 0.0
    %333 = vmatpush1.xpose.msra.mxu0 %v309
    %334 = vmatprep.subr.mxu0 0.0
    %335 = vmatpush1.xpose.msra.mxu0 %v312
    %336 = vmatprep.subr.mxu0 0.0
    %337 = vmatpush1.xpose.msra.mxu0 %v315
    %338 = vmatprep.subr.mxu0 0.0
    %339 = vmatpush1.xpose.msra.mxu0 %v318
    %340 = vmatprep.subr.mxu0 0.0
    %341 = vmatpush1.xpose.msra.mxu0 %v321
    %342 = vmatprep.subr.mxu0 0.0
    %343 = vmatpush1.xpose.msra.mxu0 %v324
    %344 = vmatprep.subr.mxu0 0.0
    %345 = vmatpush1.xpose.msra.mxu0 %v327
    %346 = vmatprep.subr.mxu0 0.0
    %347 = vmatpush1.xpose.msra.mxu0 %v330
    %348 = vmatprep.subr.mxu0 0.0
    %349 = vmatpush1.xpose.msra.mxu0 0.0
    %350 = vmatprep.subr.mxu0 0.0
    %351 = vmatpush1.xpose.msra.mxu0 0.0
    %352 = vmatprep.subr.mxu0 0.0
    %353 = vmatpush1.xpose.msra.mxu0 0.0
    %354 = vmatprep.subr.mxu0 0.0
    %355 = vmatpush1.xpose.msra.mxu0 0.0
    %356 = vmatprep.subr.mxu0 0.0
    %357 = vmatpush1.xpose.msra.mxu0 0.0
    %358 = vmatprep.subr.mxu0 0.0
    %359 = vmatpush1.xpose.msra.mxu0 0.0
    %360 = vmatprep.subr.mxu0 0.0
    %361 = vmatpush1.xpose.msra.mxu0 0.0
    %362 = vmatprep.subr.mxu0 0.0
    %363 = vmatpush1.xpose.msra.mxu0 0.0
    %364 = vmatprep.subr.mxu0 0.0
    %365 = vmatpush1.xpose.msra.mxu0 0.0
    %366 = vmatprep.subr.mxu0 0.0
    %367 = vmatpush1.xpose.msra.mxu0 0.0
    %368 = vmatprep.subr.mxu0 0.0
    %369 = vmatpush1.xpose.msra.mxu0 0.0
    %370 = vmatprep.subr.mxu0 0.0
    %371 = vmatpush1.xpose.msra.mxu0 0.0
    %372 = vmatprep.subr.mxu0 0.0
    %373 = vmatpush1.xpose.msra.mxu0 0.0
    %374 = vmatprep.subr.mxu0 0.0
    %375 = vmatpush1.xpose.msra.mxu0 0.0
    %376 = vmatprep.subr.mxu0 0.0
    %377 = vmatpush1.xpose.msra.mxu0 0.0
    %378 = vmatprep.subr.mxu0 0.0
    %379 = vmatpush1.xpose.msra.mxu0 0.0
    %380 = vmatprep.subr.mxu0 0.0
    %381 = vmatpush1.xpose.msra.mxu0 0.0
    %382 = vmatprep.subr.mxu0 0.0
    %383 = vmatpush1.xpose.msra.mxu0 0.0
    %384 = vmatprep.subr.mxu0 0.0
    %385 = vmatpush1.xpose.msra.mxu0 0.0
    %386 = vmatprep.subr.mxu0 0.0
    %387 = vmatpush1.xpose.msra.mxu0 0.0
    %388 = vmatprep.subr.mxu0 0.0
    %389 = vmatpush1.xpose.msra.mxu0 0.0
    %390 = vmatprep.subr.mxu0 0.0
    %391 = vmatpush1.xpose.msra.mxu0 0.0
    %392 = vmatprep.subr.mxu0 0.0
    %393 = vmatpush1.xpose.msra.mxu0 0.0
    %394 = vmatprep.subr.mxu0 0.0
    %395 = vmatpush1.xpose.msra.mxu0 0.0
    %396 = vmatprep.mubr.f32.mxu0 0.0
    %397 = vmatmul.mubr.f32.gmra.mrb[0].mxu0 %v304
    %v398 = vpop.f32.mrb[0].mxu0
    %v399 = vadd.f32 %v159, %v398
    %v400 = vpop.f32.mrb[0].mxu0
    %401 = vmatprep.mubr.f32.mxu0 0.0
    %402 = vmatmul.mubr.f32.gmra.mrb[0].mxu0 %v306
    %v403 = vpop.f32.mrb[0].mxu0
    %v404 = vadd.f32 %v160, %v403
    %v405 = vpop.f32.mrb[0].mxu0
    %406 = vdwg.mxu0
    %vm407 = vcmask 523264
    %v408 = vsel %vm407, %v399, -inf
    %409 = vmax.xlane.f32.xlu0 %v408
    %v410 = vpop.xlane.xlu0 %409
    %v411 = vsel %vm407, %v404, -inf
    %412 = vmax.xlane.f32.xlu0 %v411
    %v413 = vpop.xlane.xlu0 %412
    %v414 = vsub.f32 %v399, %v410
    %v415 = vsub.f32 %v404, %v413
    %v416 = vmul.f32 %v414, 1.442695
    %v417 = vpow.pop %v416
    %v418 = vmul.f32 %v415, 1.442695
    %v419 = vpow.pop %v418
    %v421 = vsel %vm407, %v417, 0
    %v424 = vsel %vm407, %v419, 0
    %426 = vmatprep.subr.mxu0 0.0
    %427 = vmatpush1.msra.mxu0 %v161
    %428 = vmatprep.subr.mxu0 0.0
    %429 = vmatpush1.msra.mxu0 %v162
    %430 = vmatprep.subr.mxu0 0.0
    %431 = vmatpush1.msra.mxu0 %v163
    %432 = vmatprep.subr.mxu0 0.0
    %433 = vmatpush1.msra.mxu0 %v164
    %434 = vmatprep.subr.mxu0 0.0
    %435 = vmatpush1.msra.mxu0 %v165
    %436 = vmatprep.subr.mxu0 0.0
    %437 = vmatpush1.msra.mxu0 %v166
    %438 = vmatprep.subr.mxu0 0.0
    %439 = vmatpush1.msra.mxu0 %v167
    %440 = vmatprep.subr.mxu0 0.0
    %441 = vmatpush1.msra.mxu0 %v168
    %442 = vmatprep.subr.mxu0 0.0
    %443 = vmatpush1.msra.mxu0 0.0
    %444 = vmatprep.subr.mxu0 0.0
    %445 = vmatpush1.msra.mxu0 0.0
    %446 = vmatprep.subr.mxu0 0.0
    %447 = vmatpush1.msra.mxu0 0.0
    %448 = vmatprep.subr.mxu0 0.0
    %449 = vmatpush1.msra.mxu0 0.0
    %450 = vmatprep.subr.mxu0 0.0
    %451 = vmatpush1.msra.mxu0 0.0
    %452 = vmatprep.subr.mxu0 0.0
    %453 = vmatpush1.msra.mxu0 0.0
    %454 = vmatprep.subr.mxu0 0.0
    %455 = vmatpush1.msra.mxu0 0.0
    %456 = vmatprep.subr.mxu0 0.0
    %457 = vmatpush1.msra.mxu0 0.0
    %458 = vmatprep.subr.mxu0 0.0
    %459 = vmatpush1.msra.mxu0 0.0
    %460 = vmatprep.subr.mxu0 0.0
    %461 = vmatpush1.msra.mxu0 0.0
    %462 = vmatprep.subr.mxu0 0.0
    %463 = vmatpush1.msra.mxu0 0.0
    %464 = vmatprep.subr.mxu0 0.0
    %465 = vmatpush1.msra.mxu0 0.0
    %466 = vmatprep.subr.mxu0 0.0
    %467 = vmatpush1.msra.mxu0 0.0
    %468 = vmatprep.subr.mxu0 0.0
    %469 = vmatpush1.msra.mxu0 0.0
    %470 = vmatprep.subr.mxu0 0.0
    %471 = vmatpush1.msra.mxu0 0.0
    %472 = vmatprep.subr.mxu0 0.0
    %473 = vmatpush1.msra.mxu0 0.0
    %474 = vmatprep.subr.mxu0 0.0
    %475 = vmatpush1.msra.mxu0 0.0
    %476 = vmatprep.subr.mxu0 0.0
    %477 = vmatpush1.msra.mxu0 0.0
    %478 = vmatprep.subr.mxu0 0.0
    %479 = vmatpush1.msra.mxu0 0.0
    %480 = vmatprep.subr.mxu0 0.0
    %481 = vmatpush1.msra.mxu0 0.0
    %482 = vmatprep.subr.mxu0 0.0
    %483 = vmatpush1.msra.mxu0 0.0
    %484 = vmatprep.subr.mxu0 0.0
    %485 = vmatpush1.msra.mxu0 0.0
    %486 = vmatprep.subr.mxu0 0.0
    %487 = vmatpush1.msra.mxu0 0.0
    %488 = vmatprep.subr.mxu0 0.0
    %489 = vmatpush1.msra.mxu0 0.0
    %490 = vmatprep.mubr.f32.mxu0 0.0
    %491 = vmatmul.mubr.f32.gmra.mrb[0].mxu0 %v421
    %v492 = vpop.f32.mrb[0].mxu0
    %v493 = vadd.f32 0.0, %v492
    %v494 = vpop.f32.mrb[0].mxu0
    %495 = vmatprep.mubr.f32.mxu0 0.0
    %496 = vmatmul.mubr.f32.gmra.mrb[0].mxu0 %v424
    %v497 = vpop.f32.mrb[0].mxu0
    %v498 = vadd.f32 0.0, %v497
    %v499 = vpop.f32.mrb[0].mxu0
    %500 = vdwg.mxu0
    %v501 = vrcp.pop %v493
    %v502 = vrcp.pop %v498
    %v503 = vmul.f32 %v417, %v501
    %v504 = vmul.f32 %v419, %v502
    %v506 = vsel %vm407, %v503, 0
    %v509 = vsel %vm407, %v504, 0
    %511 = vmatprep.subr.mxu0 0.0
    %512 = vmatpush1.msra.mxu0 %v296
    %513 = vmatprep.subr.mxu0 0.0
    %514 = vmatpush1.msra.mxu0 %v297
    %515 = vmatprep.subr.mxu0 0.0
    %516 = vmatpush1.msra.mxu0 %v298
    %517 = vmatprep.subr.mxu0 0.0
    %518 = vmatpush1.msra.mxu0 %v299
    %519 = vmatprep.subr.mxu0 0.0
    %520 = vmatpush1.msra.mxu0 %v300
    %521 = vmatprep.subr.mxu0 0.0
    %522 = vmatpush1.msra.mxu0 %v301
    %523 = vmatprep.subr.mxu0 0.0
    %524 = vmatpush1.msra.mxu0 %v302
    %525 = vmatprep.subr.mxu0 0.0
    %526 = vmatpush1.msra.mxu0 %v303
    %527 = vmatprep.subr.mxu0 0.0
    %528 = vmatpush1.msra.mxu0 0.0
    %529 = vmatprep.subr.mxu0 0.0
    %530 = vmatpush1.msra.mxu0 0.0
    %531 = vmatprep.subr.mxu0 0.0
    %532 = vmatpush1.msra.mxu0 0.0
    %533 = vmatprep.subr.mxu0 0.0
    %534 = vmatpush1.msra.mxu0 0.0
    %535 = vmatprep.subr.mxu0 0.0
    %536 = vmatpush1.msra.mxu0 0.0
    %537 = vmatprep.subr.mxu0 0.0
    %538 = vmatpush1.msra.mxu0 0.0
    %539 = vmatprep.subr.mxu0 0.0
    %540 = vmatpush1.msra.mxu0 0.0
    %541 = vmatprep.subr.mxu0 0.0
    %542 = vmatpush1.msra.mxu0 0.0
    %543 = vmatprep.subr.mxu0 0.0
    %544 = vmatpush1.msra.mxu0 0.0
    %545 = vmatprep.subr.mxu0 0.0
    %546 = vmatpush1.msra.mxu0 0.0
    %547 = vmatprep.subr.mxu0 0.0
    %548 = vmatpush1.msra.mxu0 0.0
    %549 = vmatprep.subr.mxu0 0.0
    %550 = vmatpush1.msra.mxu0 0.0
    %551 = vmatprep.subr.mxu0 0.0
    %552 = vmatpush1.msra.mxu0 0.0
    %553 = vmatprep.subr.mxu0 0.0
    %554 = vmatpush1.msra.mxu0 0.0
    %555 = vmatprep.subr.mxu0 0.0
    %556 = vmatpush1.msra.mxu0 0.0
    %557 = vmatprep.subr.mxu0 0.0
    %558 = vmatpush1.msra.mxu0 0.0
    %559 = vmatprep.subr.mxu0 0.0
    %560 = vmatpush1.msra.mxu0 0.0
    %561 = vmatprep.subr.mxu0 0.0
    %562 = vmatpush1.msra.mxu0 0.0
    %563 = vmatprep.subr.mxu0 0.0
    %564 = vmatpush1.msra.mxu0 0.0
    %565 = vmatprep.subr.mxu0 0.0
    %566 = vmatpush1.msra.mxu0 0.0
    %567 = vmatprep.subr.mxu0 0.0
    %568 = vmatpush1.msra.mxu0 0.0
    %569 = vmatprep.subr.mxu0 0.0
    %570 = vmatpush1.msra.mxu0 0.0
    %571 = vmatprep.subr.mxu0 0.0
    %572 = vmatpush1.msra.mxu0 0.0
    %573 = vmatprep.subr.mxu0 0.0
    %574 = vmatpush1.msra.mxu0 0.0
    %575 = vmatprep.mubr.f32.mxu0 0.0
    %576 = vmatmul.mubr.f32.gmra.mrb[0].mxu0 %v506
    %v577 = vpop.f32.mrb[0].mxu0
    %v578 = vadd.f32 0.0, %v577
    %v579 = vpop.f32.mrb[0].mxu0
    %580 = vmatprep.mubr.f32.mxu0 0.0
    %581 = vmatmul.mubr.f32.gmra.mrb[0].mxu0 %v509
    %v582 = vpop.f32.mrb[0].mxu0
    %v583 = vadd.f32 0.0, %v582
    %v584 = vpop.f32.mrb[0].mxu0
    %585 = vdwg.mxu0
    %v586 = vpack.c.bf16 %v583, %v578
    %v587 = vld [vmem:[%s8] sm:$0xf]
    %v588 = vld [vmem:[%s8 + $0x4] sm:$0xf]
    %v589 = vld [vmem:[%s8 + $0x8] sm:$0xf]
    %v590 = vld [vmem:[%s8 + $0xc] sm:$0xf]
    %v595 = vunpack.c.l.b16 %v587
    %v596 = vunpack.c.l.b16 %v588
    %v597 = vunpack.c.l.b16 %v589
    %v598 = vunpack.c.l.b16 %v590
    %v599 = vpack.c.b16 %v596, %v595
    %v600 = vpack.c.b16 %v598, %v597
    %v604 = vsel %vm171, %v586, 0
    %606 = vmatprep.subr.bf16.mxu0 0
    %607 = vmatpush1.bf16.msra.mxu0 %v599
    %608 = vmatprep.subr.bf16.mxu0 0
    %609 = vmatpush1.bf16.msra.mxu0 %v600
    %610 = vmatprep.subr.bf16.mxu0 0
    %611 = vmatpush1.bf16.msra.mxu0 0
    %612 = vmatprep.subr.bf16.mxu0 0
    %613 = vmatpush1.bf16.msra.mxu0 0
    %614 = vmatprep.subr.bf16.mxu0 0
    %615 = vmatpush1.bf16.msra.mxu0 0
    %616 = vmatprep.subr.bf16.mxu0 0
    %617 = vmatpush1.bf16.msra.mxu0 0
    %618 = vmatprep.subr.bf16.mxu0 0
    %619 = vmatpush1.bf16.msra.mxu0 0
    %620 = vmatprep.subr.bf16.mxu0 0
    %621 = vmatpush1.bf16.msra.mxu0 0
    %622 = vmatprep.subr.bf16.mxu0 0
    %623 = vmatpush1.bf16.msra.mxu0 0
    %624 = vmatprep.subr.bf16.mxu0 0
    %625 = vmatpush1.bf16.msra.mxu0 0
    %626 = vmatprep.subr.bf16.mxu0 0
    %627 = vmatpush1.bf16.msra.mxu0 0
    %628 = vmatprep.subr.bf16.mxu0 0
    %629 = vmatpush1.bf16.msra.mxu0 0
    %630 = vmatprep.subr.bf16.mxu0 0
    %631 = vmatpush1.bf16.msra.mxu0 0
    %632 = vmatprep.subr.bf16.mxu0 0
    %633 = vmatpush1.bf16.msra.mxu0 0
    %634 = vmatprep.subr.bf16.mxu0 0
    %635 = vmatpush1.bf16.msra.mxu0 0
    %636 = vmatprep.subr.bf16.mxu0 0
    %637 = vmatpush1.bf16.msra.mxu0 0
    %638 = vmatprep.mubr.bf16.mxu0 0
    %639 = vmatmul.mubr.bf16.gmra.mrb[0].mxu0 %v604
    %v640 = vpop.f32.mrb[0].mxu0
    %v641 = vadd.f32 0.0, %v640
    %v642 = vpop.f32.mrb[0].mxu0
    %v643 = vpop.f32.mrb[0].mxu0
    %v644 = vadd.f32 0.0, %v643
    %v645 = vpop.f32.mrb[0].mxu0
    %646 = vdwg.mxu0
    %v647 = vadd.f32 %v139, %v641
    %v648 = vadd.f32 %v144, %v644
    %v649 = vmul.f32 %v647, %v647
    %v650 = vmul.f32 %v648, %v648
    %v651 = vsel %vm171, %v649, 0.0
    %652 = vadd.xlane.f32.xlu0 %v651
    %v653 = vpop.xlane.xlu0 %652
    %v654 = vsel %vm171, %v650, 0.0
    %655 = vadd.xlane.f32.xlu0 %v654
    %v656 = vpop.xlane.xlu0 %655
    %v657 = vmul.f32 %v653, %v178
    %v658 = vmul.f32 %v656, %v178
    %v659 = vadd.f32 %v657, 1e-06
    %v660 = vadd.f32 %v658, 1e-06
    %v661 = vrsqrt.pop %v659
    %v662 = vrsqrt.pop %v660
    %v663 = vmul.f32 %v647, %v661
    %v664 = vmul.f32 %v648, %v662
    %v665 = vpack.c.bf16 %v664, %v663
    %v666 = vld [vmem:[%s9] sm:$0xf]
    %v667 = vld [vmem:[%s9 + $0x4] sm:$0xf]
    %v668 = vld [vmem:[%s9 + $0x8] sm:$0xf]
    %v669 = vld [vmem:[%s9 + $0xc] sm:$0xf]
    %v674 = vunpack.c.l.b16 %v666
    %v675 = vunpack.c.l.b16 %v667
    %v676 = vunpack.c.l.b16 %v668
    %v677 = vunpack.c.l.b16 %v669
    %v678 = vpack.c.b16 %v675, %v674
    %v679 = vpack.c.b16 %v677, %v676
    %v683 = vsel %vm171, %v665, 0
    %685 = vmatprep.subr.bf16.mxu0 0
    %686 = vmatpush1.bf16.msra.mxu0 %v678
    %687 = vmatprep.subr.bf16.mxu0 0
    %688 = vmatpush1.bf16.msra.mxu0 %v679
    %689 = vmatprep.subr.bf16.mxu0 0
    %690 = vmatpush1.bf16.msra.mxu0 0
    %691 = vmatprep.subr.bf16.mxu0 0
    %692 = vmatpush1.bf16.msra.mxu0 0
    %693 = vmatprep.subr.bf16.mxu0 0
    %694 = vmatpush1.bf16.msra.mxu0 0
    %695 = vmatprep.subr.bf16.mxu0 0
    %696 = vmatpush1.bf16.msra.mxu0 0
    %697 = vmatprep.subr.bf16.mxu0 0
    %698 = vmatpush1.bf16.msra.mxu0 0
    %699 = vmatprep.subr.bf16.mxu0 0
    %700 = vmatpush1.bf16.msra.mxu0 0
    %701 = vmatprep.subr.bf16.mxu0 0
    %702 = vmatpush1.bf16.msra.mxu0 0
    %703 = vmatprep.subr.bf16.mxu0 0
    %704 = vmatpush1.bf16.msra.mxu0 0
    %705 = vmatprep.subr.bf16.mxu0 0
    %706 = vmatpush1.bf16.msra.mxu0 0
    %707 = vmatprep.subr.bf16.mxu0 0
    %708 = vmatpush1.bf16.msra.mxu0 0
    %709 = vmatprep.subr.bf16.mxu0 0
    %710 = vmatpush1.bf16.msra.mxu0 0
    %711 = vmatprep.subr.bf16.mxu0 0
    %712 = vmatpush1.bf16.msra.mxu0 0
    %713 = vmatprep.subr.bf16.mxu0 0
    %714 = vmatpush1.bf16.msra.mxu0 0
    %715 = vmatprep.subr.bf16.mxu0 0
    %716 = vmatpush1.bf16.msra.mxu0 0
    %717 = vmatprep.mubr.bf16.mxu0 0
    %718 = vmatmul.mubr.bf16.gmra.mrb[0].mxu0 %v683
    %v719 = vpop.f32.mrb[0].mxu0
    %v720 = vadd.f32 0.0, %v719
    %v721 = vpop.f32.mrb[0].mxu0
    %v722 = vpop.f32.mrb[0].mxu0
    %v723 = vadd.f32 0.0, %v722
    %v724 = vpop.f32.mrb[0].mxu0
    %725 = vdwg.mxu0
    %v726 = vxor.u32 %v720, 2147483648
    %v727 = vxor.u32 %v723, 2147483648
    %v728 = vmul.f32 %v726, 1.442695
    %v729 = vpow.pop %v728
    %v730 = vmul.f32 %v727, 1.442695
    %v731 = vpow.pop %v730
    %v732 = vadd.f32 %v729, 1.0
    %v733 = vadd.f32 %v731, 1.0
    %v734 = vrcp.pop %v732
    %v735 = vmul.f32 1.0, %v734
    %v736 = vrcp.pop %v733
    %v737 = vmul.f32 1.0, %v736
    %v738 = vmul.f32 %v720, %v735
    %v739 = vmul.f32 %v723, %v737
    %742 = vrot.lane.b32.xlu0 %v720, 64
    %v743 = vpop.permute.xlu0 %742
    %744 = vrot.lane.b32.xlu0 %v723, 64
    %v745 = vpop.permute.xlu0 %744
    %v748 = vmul.f32 %v738, %v743
    %v749 = vmul.f32 %v739, %v745
    %v750 = vpack.c.bf16 %v749, %v748
    %v751 = vld [vmem:[%s10] sm:$0xf]
    %v752 = vld [vmem:[%s10 + $0x4] sm:$0xf]
    %v753 = vld [vmem:[%s10 + $0x8] sm:$0xf]
    %v754 = vld [vmem:[%s10 + $0xc] sm:$0xf]
    %v755 = vld [vmem:[%s10 + $0x10] sm:$0xf]
    %v756 = vld [vmem:[%s10 + $0x14] sm:$0xf]
    %v757 = vld [vmem:[%s10 + $0x18] sm:$0xf]
    %v758 = vld [vmem:[%s10 + $0x1c] sm:$0xf]
    %v767 = vunpack.c.l.b16 %v751
    %v768 = vunpack.c.l.b16 %v752
    %v769 = vunpack.c.l.b16 %v753
    %v770 = vunpack.c.l.b16 %v754
    %v771 = vunpack.c.l.b16 %v755
    %v772 = vunpack.c.l.b16 %v756
    %v773 = vunpack.c.l.b16 %v757
    %v774 = vunpack.c.l.b16 %v758
    %v775 = vpack.c.b16 %v768, %v767
    %v776 = vpack.c.b16 %v770, %v769
    %v777 = vpack.c.b16 %v772, %v771
    %v778 = vpack.c.b16 %v774, %v773
    %v784 = vsel %vm407, %v750, 0
    %786 = vmatprep.subr.bf16.mxu0 0
    %787 = vmatpush1.bf16.msra.mxu0 %v775
    %788 = vmatprep.subr.bf16.mxu0 0
    %789 = vmatpush1.bf16.msra.mxu0 %v776
    %790 = vmatprep.subr.bf16.mxu0 0
    %791 = vmatpush1.bf16.msra.mxu0 %v777
    %792 = vmatprep.subr.bf16.mxu0 0
    %793 = vmatpush1.bf16.msra.mxu0 %v778
    %794 = vmatprep.subr.bf16.mxu0 0
    %795 = vmatpush1.bf16.msra.mxu0 0
    %796 = vmatprep.subr.bf16.mxu0 0
    %797 = vmatpush1.bf16.msra.mxu0 0
    %798 = vmatprep.subr.bf16.mxu0 0
    %799 = vmatpush1.bf16.msra.mxu0 0
    %800 = vmatprep.subr.bf16.mxu0 0
    %801 = vmatpush1.bf16.msra.mxu0 0
    %802 = vmatprep.subr.bf16.mxu0 0
    %803 = vmatpush1.bf16.msra.mxu0 0
    %804 = vmatprep.subr.bf16.mxu0 0
    %805 = vmatpush1.bf16.msra.mxu0 0
    %806 = vmatprep.subr.bf16.mxu0 0
    %807 = vmatpush1.bf16.msra.mxu0 0
    %808 = vmatprep.subr.bf16.mxu0 0
    %809 = vmatpush1.bf16.msra.mxu0 0
    %810 = vmatprep.subr.bf16.mxu0 0
    %811 = vmatpush1.bf16.msra.mxu0 0
    %812 = vmatprep.subr.bf16.mxu0 0
    %813 = vmatpush1.bf16.msra.mxu0 0
    %814 = vmatprep.subr.bf16.mxu0 0
    %815 = vmatpush1.bf16.msra.mxu0 0
    %816 = vmatprep.subr.bf16.mxu0 0
    %817 = vmatpush1.bf16.msra.mxu0 0
    %818 = vmatprep.mubr.bf16.mxu0 0
    %819 = vmatmul.mubr.bf16.gmra.mrb[0].mxu0 %v784
    %v820 = vpop.f32.mrb[0].mxu0
    %v821 = vadd.f32 0.0, %v820
    %v822 = vpop.f32.mrb[0].mxu0
    %v823 = vpop.f32.mrb[0].mxu0
    %v824 = vadd.f32 0.0, %v823
    %v825 = vpop.f32.mrb[0].mxu0
    %826 = vdwg.mxu0
    %v827 = vadd.f32 %v647, %v821
    %v828 = vadd.f32 %v648, %v824
    %v829 = vmul.f32 %v827, %v827
    %v830 = vmul.f32 %v828, %v828
    %v831 = vsel %vm171, %v829, 0.0
    %832 = vadd.xlane.f32.xlu0 %v831
    %v833 = vpop.xlane.xlu0 %832
    %v834 = vsel %vm171, %v830, 0.0
    %835 = vadd.xlane.f32.xlu0 %v834
    %v836 = vpop.xlane.xlu0 %835
    %v837 = vmul.f32 %v833, %v178
    %v838 = vmul.f32 %v836, %v178
    %v839 = vadd.f32 %v837, 1e-06
    %v840 = vadd.f32 %v838, 1e-06
    %v841 = vrsqrt.pop %v839
    %v842 = vrsqrt.pop %v840
    %v843 = vmul.f32 %v827, %v841
    %v844 = vmul.f32 %v828, %v842
    %v845 = vpack.c.bf16 %v844, %v843
    %s846 = scalar_lea.vmem %s7, 32
    %v847 = vld [vmem:[%s846] sm:$0xff]
    %v848 = vld [vmem:[%s846 + $0x8] sm:$0xff]
    %v849 = vld [vmem:[%s846 + $0x10] sm:$0xff]
    %v850 = vld [vmem:[%s846 + $0x18] sm:$0xff]
    %v855 = vunpack.c.l.b16 %v847
    %v856 = vunpack.c.h.b16 %v847
    %v857 = vunpack.c.l.b16 %v848
    %v858 = vunpack.c.h.b16 %v848
    %v859 = vunpack.c.l.b16 %v849
    %v860 = vunpack.c.h.b16 %v849
    %v861 = vunpack.c.l.b16 %v850
    %v862 = vunpack.c.h.b16 %v850
    %v863 = vpack.c.b16 %v857, %v855
    %v864 = vpack.c.b16 %v858, %v856
    %v865 = vpack.c.b16 %v861, %v859
    %v866 = vpack.c.b16 %v862, %v860
    %v872 = vsel %vm171, %v845, 0
    %874 = vmatprep.subr.bf16.mxu0 %v864
    %875 = vmatpush1.bf16.msra.mxu0 %v863
    %876 = vmatprep.subr.bf16.mxu0 %v866
    %877 = vmatpush1.bf16.msra.mxu0 %v865
    %878 = vmatprep.subr.bf16.mxu0 0
    %879 = vmatpush1.bf16.msra.mxu0 0
    %880 = vmatprep.subr.bf16.mxu0 0
    %881 = vmatpush1.bf16.msra.mxu0 0
    %882 = vmatprep.subr.bf16.mxu0 0
    %883 = vmatpush1.bf16.msra.mxu0 0
    %884 = vmatprep.subr.bf16.mxu0 0
    %885 = vmatpush1.bf16.msra.mxu0 0
    %886 = vmatprep.subr.bf16.mxu0 0
    %887 = vmatpush1.bf16.msra.mxu0 0
    %888 = vmatprep.subr.bf16.mxu0 0
    %889 = vmatpush1.bf16.msra.mxu0 0
    %890 = vmatprep.subr.bf16.mxu0 0
    %891 = vmatpush1.bf16.msra.mxu0 0
    %892 = vmatprep.subr.bf16.mxu0 0
    %893 = vmatpush1.bf16.msra.mxu0 0
    %894 = vmatprep.subr.bf16.mxu0 0
    %895 = vmatpush1.bf16.msra.mxu0 0
    %896 = vmatprep.subr.bf16.mxu0 0
    %897 = vmatpush1.bf16.msra.mxu0 0
    %898 = vmatprep.subr.bf16.mxu0 0
    %899 = vmatpush1.bf16.msra.mxu0 0
    %900 = vmatprep.subr.bf16.mxu0 0
    %901 = vmatpush1.bf16.msra.mxu0 0
    %902 = vmatprep.subr.bf16.mxu0 0
    %903 = vmatpush1.bf16.msra.mxu0 0
    %904 = vmatprep.subr.bf16.mxu0 0
    %905 = vmatpush1.bf16.msra.mxu0 0
    %906 = vmatprep.mubr.bf16.mxu0 0
    %907 = vmatmul.mubr.bf16.gmra.mrb[0].mxu0 %v872
    %v908 = vpop.f32.mrb[0].mxu0
    %v909 = vadd.f32 0.0, %v908
    %v910 = vpop.f32.mrb[0].mxu0
    %v911 = vadd.f32 0.0, %v910
    %v912 = vpop.f32.mrb[0].mxu0
    %v913 = vadd.f32 0.0, %v912
    %v914 = vpop.f32.mrb[0].mxu0
    %v915 = vadd.f32 0.0, %v914
    %916 = vdwg.mxu0
    %v917 = vmul.f32 %v909, %v147
    %v918 = vmul.f32 %v913, %v148
    %v919 = vmul.f32 %v909, %v263
    %v920 = vmul.f32 %v913, %v265
    %923 = vrot.lane.b32.xlu0 %v919, 64
    %v924 = vpop.permute.xlu0 %923
    %925 = vrot.lane.b32.xlu0 %v920, 64
    %v926 = vpop.permute.xlu0 %925
    %v929 = vadd.f32 %v917, %v924
    %v930 = vadd.f32 %v918, %v926
    %933 = vrot.lane.b32.xlu0 %v929, 96
    %v934 = vpop.permute.xlu0 %933
    %935 = vrot.lane.b32.xlu0 %v930, 96
    %v936 = vpop.permute.xlu0 %935
    %v939 = vmul.f32 %v151, %v934
    %v940 = vmul.f32 %v152, %v936
    %v941 = vmul.f32 %v153, %v934
    %v942 = vmul.f32 %v154, %v936
    %v943 = vmul.f32 %v155, %v934
    %v944 = vmul.f32 %v156, %v936
    %v945 = vmul.f32 %v157, %v934
    %v946 = vmul.f32 %v158, %v936
    %v947 = vmul.f32 %v151, %v911
    %v948 = vmul.f32 %v152, %v915
    %v949 = vmul.f32 %v153, %v911
    %v950 = vmul.f32 %v154, %v915
    %v951 = vmul.f32 %v155, %v911
    %v952 = vmul.f32 %v156, %v915
    %v953 = vmul.f32 %v157, %v911
    %v954 = vmul.f32 %v158, %v915
    %v955 = vsel %vm171, %v929, 0
    %v957 = vsel %vm171, %v930, 0
    %v960 = vsel %vm171, %v939, 0
    %v963 = vsel %vm171, %v940, 0
    %v966 = vsel %vm171, %v941, 0
    %v969 = vsel %vm171, %v942, 0
    %v972 = vsel %vm171, %v943, 0
    %v975 = vsel %vm171, %v944, 0
    %v978 = vsel %vm171, %v945, 0
    %v981 = vsel %vm171, %v946, 0
    %983 = vmatprep.subr.mxu0 0.0
    %984 = vmatpush1.xpose.msra.mxu0 %v960
    %985 = vmatprep.subr.mxu0 0.0
    %986 = vmatpush1.xpose.msra.mxu0 %v963
    %987 = vmatprep.subr.mxu0 0.0
    %988 = vmatpush1.xpose.msra.mxu0 %v966
    %989 = vmatprep.subr.mxu0 0.0
    %990 = vmatpush1.xpose.msra.mxu0 %v969
    %991 = vmatprep.subr.mxu0 0.0
    %992 = vmatpush1.xpose.msra.mxu0 %v972
    %993 = vmatprep.subr.mxu0 0.0
    %994 = vmatpush1.xpose.msra.mxu0 %v975
    %995 = vmatprep.subr.mxu0 0.0
    %996 = vmatpush1.xpose.msra.mxu0 %v978
    %997 = vmatprep.subr.mxu0 0.0
    %998 = vmatpush1.xpose.msra.mxu0 %v981
    %999 = vmatprep.subr.mxu0 0.0
    %1000 = vmatpush1.xpose.msra.mxu0 0.0
    %1001 = vmatprep.subr.mxu0 0.0
    %1002 = vmatpush1.xpose.msra.mxu0 0.0
    %1003 = vmatprep.subr.mxu0 0.0
    %1004 = vmatpush1.xpose.msra.mxu0 0.0
    %1005 = vmatprep.subr.mxu0 0.0
    %1006 = vmatpush1.xpose.msra.mxu0 0.0
    %1007 = vmatprep.subr.mxu0 0.0
    %1008 = vmatpush1.xpose.msra.mxu0 0.0
    %1009 = vmatprep.subr.mxu0 0.0
    %1010 = vmatpush1.xpose.msra.mxu0 0.0
    %1011 = vmatprep.subr.mxu0 0.0
    %1012 = vmatpush1.xpose.msra.mxu0 0.0
    %1013 = vmatprep.subr.mxu0 0.0
    %1014 = vmatpush1.xpose.msra.mxu0 0.0
    %1015 = vmatprep.subr.mxu0 0.0
    %1016 = vmatpush1.xpose.msra.mxu0 0.0
    %1017 = vmatprep.subr.mxu0 0.0
    %1018 = vmatpush1.xpose.msra.mxu0 0.0
    %1019 = vmatprep.subr.mxu0 0.0
    %1020 = vmatpush1.xpose.msra.mxu0 0.0
    %1021 = vmatprep.subr.mxu0 0.0
    %1022 = vmatpush1.xpose.msra.mxu0 0.0
    %1023 = vmatprep.subr.mxu0 0.0
    %1024 = vmatpush1.xpose.msra.mxu0 0.0
    %1025 = vmatprep.subr.mxu0 0.0
    %1026 = vmatpush1.xpose.msra.mxu0 0.0
    %1027 = vmatprep.subr.mxu0 0.0
    %1028 = vmatpush1.xpose.msra.mxu0 0.0
    %1029 = vmatprep.subr.mxu0 0.0
    %1030 = vmatpush1.xpose.msra.mxu0 0.0
    %1031 = vmatprep.subr.mxu0 0.0
    %1032 = vmatpush1.xpose.msra.mxu0 0.0
    %1033 = vmatprep.subr.mxu0 0.0
    %1034 = vmatpush1.xpose.msra.mxu0 0.0
    %1035 = vmatprep.subr.mxu0 0.0
    %1036 = vmatpush1.xpose.msra.mxu0 0.0
    %1037 = vmatprep.subr.mxu0 0.0
    %1038 = vmatpush1.xpose.msra.mxu0 0.0
    %1039 = vmatprep.subr.mxu0 0.0
    %1040 = vmatpush1.xpose.msra.mxu0 0.0
    %1041 = vmatprep.subr.mxu0 0.0
    %1042 = vmatpush1.xpose.msra.mxu0 0.0
    %1043 = vmatprep.subr.mxu0 0.0
    %1044 = vmatpush1.xpose.msra.mxu0 0.0
    %1045 = vmatprep.subr.mxu0 0.0
    %1046 = vmatpush1.xpose.msra.mxu0 0.0
    %1047 = vmatprep.mubr.f32.mxu0 0.0
    %1048 = vmatmul.mubr.f32.gmra.mrb[0].mxu0 %v955
    %v1049 = vpop.f32.mrb[0].mxu0
    %v1050 = vadd.f32 %v159, %v1049
    %v1051 = vpop.f32.mrb[0].mxu0
    %1052 = vmatprep.mubr.f32.mxu0 0.0
    %1053 = vmatmul.mubr.f32.gmra.mrb[0].mxu0 %v957
    %v1054 = vpop.f32.mrb[0].mxu0
    %v1055 = vadd.f32 %v160, %v1054
    %v1056 = vpop.f32.mrb[0].mxu0
    %1057 = vdwg.mxu0
    %v1058 = vsel %vm407, %v1050, -inf
    %1059 = vmax.xlane.f32.xlu0 %v1058
    %v1060 = vpop.xlane.xlu0 %1059
    %v1061 = vsel %vm407, %v1055, -inf
    %1062 = vmax.xlane.f32.xlu0 %v1061
    %v1063 = vpop.xlane.xlu0 %1062
    %v1064 = vsub.f32 %v1050, %v1060
    %v1065 = vsub.f32 %v1055, %v1063
    %v1066 = vmul.f32 %v1064, 1.442695
    %v1067 = vpow.pop %v1066
    %v1068 = vmul.f32 %v1065, 1.442695
    %v1069 = vpow.pop %v1068
    %v1071 = vsel %vm407, %v1067, 0
    %v1074 = vsel %vm407, %v1069, 0
    %1076 = vmatprep.subr.mxu0 0.0
    %1077 = vmatpush1.msra.mxu0 %v161
    %1078 = vmatprep.subr.mxu0 0.0
    %1079 = vmatpush1.msra.mxu0 %v162
    %1080 = vmatprep.subr.mxu0 0.0
    %1081 = vmatpush1.msra.mxu0 %v163
    %1082 = vmatprep.subr.mxu0 0.0
    %1083 = vmatpush1.msra.mxu0 %v164
    %1084 = vmatprep.subr.mxu0 0.0
    %1085 = vmatpush1.msra.mxu0 %v165
    %1086 = vmatprep.subr.mxu0 0.0
    %1087 = vmatpush1.msra.mxu0 %v166
    %1088 = vmatprep.subr.mxu0 0.0
    %1089 = vmatpush1.msra.mxu0 %v167
    %1090 = vmatprep.subr.mxu0 0.0
    %1091 = vmatpush1.msra.mxu0 %v168
    %1092 = vmatprep.subr.mxu0 0.0
    %1093 = vmatpush1.msra.mxu0 0.0
    %1094 = vmatprep.subr.mxu0 0.0
    %1095 = vmatpush1.msra.mxu0 0.0
    %1096 = vmatprep.subr.mxu0 0.0
    %1097 = vmatpush1.msra.mxu0 0.0
    %1098 = vmatprep.subr.mxu0 0.0
    %1099 = vmatpush1.msra.mxu0 0.0
    %1100 = vmatprep.subr.mxu0 0.0
    %1101 = vmatpush1.msra.mxu0 0.0
    %1102 = vmatprep.subr.mxu0 0.0
    %1103 = vmatpush1.msra.mxu0 0.0
    %1104 = vmatprep.subr.mxu0 0.0
    %1105 = vmatpush1.msra.mxu0 0.0
    %1106 = vmatprep.subr.mxu0 0.0
    %1107 = vmatpush1.msra.mxu0 0.0
    %1108 = vmatprep.subr.mxu0 0.0
    %1109 = vmatpush1.msra.mxu0 0.0
    %1110 = vmatprep.subr.mxu0 0.0
    %1111 = vmatpush1.msra.mxu0 0.0
    %1112 = vmatprep.subr.mxu0 0.0
    %1113 = vmatpush1.msra.mxu0 0.0
    %1114 = vmatprep.subr.mxu0 0.0
    %1115 = vmatpush1.msra.mxu0 0.0
    %1116 = vmatprep.subr.mxu0 0.0
    %1117 = vmatpush1.msra.mxu0 0.0
    %1118 = vmatprep.subr.mxu0 0.0
    %1119 = vmatpush1.msra.mxu0 0.0
    %1120 = vmatprep.subr.mxu0 0.0
    %1121 = vmatpush1.msra.mxu0 0.0
    %1122 = vmatprep.subr.mxu0 0.0
    %1123 = vmatpush1.msra.mxu0 0.0
    %1124 = vmatprep.subr.mxu0 0.0
    %1125 = vmatpush1.msra.mxu0 0.0
    %1126 = vmatprep.subr.mxu0 0.0
    %1127 = vmatpush1.msra.mxu0 0.0
    %1128 = vmatprep.subr.mxu0 0.0
    %1129 = vmatpush1.msra.mxu0 0.0
    %1130 = vmatprep.subr.mxu0 0.0
    %1131 = vmatpush1.msra.mxu0 0.0
    %1132 = vmatprep.subr.mxu0 0.0
    %1133 = vmatpush1.msra.mxu0 0.0
    %1134 = vmatprep.subr.mxu0 0.0
    %1135 = vmatpush1.msra.mxu0 0.0
    %1136 = vmatprep.subr.mxu0 0.0
    %1137 = vmatpush1.msra.mxu0 0.0
    %1138 = vmatprep.subr.mxu0 0.0
    %1139 = vmatpush1.msra.mxu0 0.0
    %1140 = vmatprep.mubr.f32.mxu0 0.0
    %1141 = vmatmul.mubr.f32.gmra.mrb[0].mxu0 %v1071
    %v1142 = vpop.f32.mrb[0].mxu0
    %v1143 = vadd.f32 0.0, %v1142
    %v1144 = vpop.f32.mrb[0].mxu0
    %1145 = vmatprep.mubr.f32.mxu0 0.0
    %1146 = vmatmul.mubr.f32.gmra.mrb[0].mxu0 %v1074
    %v1147 = vpop.f32.mrb[0].mxu0
    %v1148 = vadd.f32 0.0, %v1147
    %v1149 = vpop.f32.mrb[0].mxu0
    %1150 = vdwg.mxu0
    %v1151 = vrcp.pop %v1143
    %v1152 = vrcp.pop %v1148
    %v1153 = vmul.f32 %v1067, %v1151
    %v1154 = vmul.f32 %v1069, %v1152
    %v1156 = vsel %vm407, %v1153, 0
    %v1159 = vsel %vm407, %v1154, 0
    %1161 = vmatprep.subr.mxu0 0.0
    %1162 = vmatpush1.msra.mxu0 %v947
    %1163 = vmatprep.subr.mxu0 0.0
    %1164 = vmatpush1.msra.mxu0 %v948
    %1165 = vmatprep.subr.mxu0 0.0
    %1166 = vmatpush1.msra.mxu0 %v949
    %1167 = vmatprep.subr.mxu0 0.0
    %1168 = vmatpush1.msra.mxu0 %v950
    %1169 = vmatprep.subr.mxu0 0.0
    %1170 = vmatpush1.msra.mxu0 %v951
    %1171 = vmatprep.subr.mxu0 0.0
    %1172 = vmatpush1.msra.mxu0 %v952
    %1173 = vmatprep.subr.mxu0 0.0
    %1174 = vmatpush1.msra.mxu0 %v953
    %1175 = vmatprep.subr.mxu0 0.0
    %1176 = vmatpush1.msra.mxu0 %v954
    %1177 = vmatprep.subr.mxu0 0.0
    %1178 = vmatpush1.msra.mxu0 0.0
    %1179 = vmatprep.subr.mxu0 0.0
    %1180 = vmatpush1.msra.mxu0 0.0
    %1181 = vmatprep.subr.mxu0 0.0
    %1182 = vmatpush1.msra.mxu0 0.0
    %1183 = vmatprep.subr.mxu0 0.0
    %1184 = vmatpush1.msra.mxu0 0.0
    %1185 = vmatprep.subr.mxu0 0.0
    %1186 = vmatpush1.msra.mxu0 0.0
    %1187 = vmatprep.subr.mxu0 0.0
    %1188 = vmatpush1.msra.mxu0 0.0
    %1189 = vmatprep.subr.mxu0 0.0
    %1190 = vmatpush1.msra.mxu0 0.0
    %1191 = vmatprep.subr.mxu0 0.0
    %1192 = vmatpush1.msra.mxu0 0.0
    %1193 = vmatprep.subr.mxu0 0.0
    %1194 = vmatpush1.msra.mxu0 0.0
    %1195 = vmatprep.subr.mxu0 0.0
    %1196 = vmatpush1.msra.mxu0 0.0
    %1197 = vmatprep.subr.mxu0 0.0
    %1198 = vmatpush1.msra.mxu0 0.0
    %1199 = vmatprep.subr.mxu0 0.0
    %1200 = vmatpush1.msra.mxu0 0.0
    %1201 = vmatprep.subr.mxu0 0.0
    %1202 = vmatpush1.msra.mxu0 0.0
    %1203 = vmatprep.subr.mxu0 0.0
    %1204 = vmatpush1.msra.mxu0 0.0
    %1205 = vmatprep.subr.mxu0 0.0
    %1206 = vmatpush1.msra.mxu0 0.0
    %1207 = vmatprep.subr.mxu0 0.0
    %1208 = vmatpush1.msra.mxu0 0.0
    %1209 = vmatprep.subr.mxu0 0.0
    %1210 = vmatpush1.msra.mxu0 0.0
    %1211 = vmatprep.subr.mxu0 0.0
    %1212 = vmatpush1.msra.mxu0 0.0
    %1213 = vmatprep.subr.mxu0 0.0
    %1214 = vmatpush1.msra.mxu0 0.0
    %1215 = vmatprep.subr.mxu0 0.0
    %1216 = vmatpush1.msra.mxu0 0.0
    %1217 = vmatprep.subr.mxu0 0.0
    %1218 = vmatpush1.msra.mxu0 0.0
    %1219 = vmatprep.subr.mxu0 0.0
    %1220 = vmatpush1.msra.mxu0 0.0
    %1221 = vmatprep.subr.mxu0 0.0
    %1222 = vmatpush1.msra.mxu0 0.0
    %1223 = vmatprep.subr.mxu0 0.0
    %1224 = vmatpush1.msra.mxu0 0.0
    %1225 = vmatprep.mubr.f32.mxu0 0.0
    %1226 = vmatmul.mubr.f32.gmra.mrb[0].mxu0 %v1156
    %v1227 = vpop.f32.mrb[0].mxu0
    %v1228 = vadd.f32 0.0, %v1227
    %v1229 = vpop.f32.mrb[0].mxu0
    %1230 = vmatprep.mubr.f32.mxu0 0.0
    %1231 = vmatmul.mubr.f32.gmra.mrb[0].mxu0 %v1159
    %v1232 = vpop.f32.mrb[0].mxu0
    %v1233 = vadd.f32 0.0, %v1232
    %v1234 = vpop.f32.mrb[0].mxu0
    %1235 = vdwg.mxu0
    %v1236 = vpack.c.bf16 %v1233, %v1228
    %s1237 = scalar_lea.vmem %s8, 16
    %v1238 = vld [vmem:[%s1237] sm:$0xf]
    %v1239 = vld [vmem:[%s1237 + $0x4] sm:$0xf]
    %v1240 = vld [vmem:[%s1237 + $0x8] sm:$0xf]
    %v1241 = vld [vmem:[%s1237 + $0xc] sm:$0xf]
    %v1246 = vunpack.c.l.b16 %v1238
    %v1247 = vunpack.c.l.b16 %v1239
    %v1248 = vunpack.c.l.b16 %v1240
    %v1249 = vunpack.c.l.b16 %v1241
    %v1250 = vpack.c.b16 %v1247, %v1246
    %v1251 = vpack.c.b16 %v1249, %v1248
    %v1255 = vsel %vm171, %v1236, 0
    %1257 = vmatprep.subr.bf16.mxu0 0
    %1258 = vmatpush1.bf16.msra.mxu0 %v1250
    %1259 = vmatprep.subr.bf16.mxu0 0
    %1260 = vmatpush1.bf16.msra.mxu0 %v1251
    %1261 = vmatprep.subr.bf16.mxu0 0
    %1262 = vmatpush1.bf16.msra.mxu0 0
    %1263 = vmatprep.subr.bf16.mxu0 0
    %1264 = vmatpush1.bf16.msra.mxu0 0
    %1265 = vmatprep.subr.bf16.mxu0 0
    %1266 = vmatpush1.bf16.msra.mxu0 0
    %1267 = vmatprep.subr.bf16.mxu0 0
    %1268 = vmatpush1.bf16.msra.mxu0 0
    %1269 = vmatprep.subr.bf16.mxu0 0
    %1270 = vmatpush1.bf16.msra.mxu0 0
    %1271 = vmatprep.subr.bf16.mxu0 0
    %1272 = vmatpush1.bf16.msra.mxu0 0
    %1273 = vmatprep.subr.bf16.mxu0 0
    %1274 = vmatpush1.bf16.msra.mxu0 0
    %1275 = vmatprep.subr.bf16.mxu0 0
    %1276 = vmatpush1.bf16.msra.mxu0 0
    %1277 = vmatprep.subr.bf16.mxu0 0
    %1278 = vmatpush1.bf16.msra.mxu0 0
    %1279 = vmatprep.subr.bf16.mxu0 0
    %1280 = vmatpush1.bf16.msra.mxu0 0
    %1281 = vmatprep.subr.bf16.mxu0 0
    %1282 = vmatpush1.bf16.msra.mxu0 0
    %1283 = vmatprep.subr.bf16.mxu0 0
    %1284 = vmatpush1.bf16.msra.mxu0 0
    %1285 = vmatprep.subr.bf16.mxu0 0
    %1286 = vmatpush1.bf16.msra.mxu0 0
    %1287 = vmatprep.subr.bf16.mxu0 0
    %1288 = vmatpush1.bf16.msra.mxu0 0
    %1289 = vmatprep.mubr.bf16.mxu0 0
    %1290 = vmatmul.mubr.bf16.gmra.mrb[0].mxu0 %v1255
    %v1291 = vpop.f32.mrb[0].mxu0
    %v1292 = vadd.f32 0.0, %v1291
    %v1293 = vpop.f32.mrb[0].mxu0
    %v1294 = vpop.f32.mrb[0].mxu0
    %v1295 = vadd.f32 0.0, %v1294
    %v1296 = vpop.f32.mrb[0].mxu0
    %1297 = vdwg.mxu0
    %v1298 = vadd.f32 %v827, %v1292
    %v1299 = vadd.f32 %v828, %v1295
    %v1300 = vmul.f32 %v1298, %v1298
    %v1301 = vmul.f32 %v1299, %v1299
    %v1302 = vsel %vm171, %v1300, 0.0
    %1303 = vadd.xlane.f32.xlu0 %v1302
    %v1304 = vpop.xlane.xlu0 %1303
    %v1305 = vsel %vm171, %v1301, 0.0
    %1306 = vadd.xlane.f32.xlu0 %v1305
    %v1307 = vpop.xlane.xlu0 %1306
    %v1308 = vmul.f32 %v1304, %v178
    %v1309 = vmul.f32 %v1307, %v178
    %v1310 = vadd.f32 %v1308, 1e-06
    %v1311 = vadd.f32 %v1309, 1e-06
    %v1312 = vrsqrt.pop %v1310
    %v1313 = vrsqrt.pop %v1311
    %v1314 = vmul.f32 %v1298, %v1312
    %v1315 = vmul.f32 %v1299, %v1313
    %v1316 = vpack.c.bf16 %v1315, %v1314
    %s1317 = scalar_lea.vmem %s9, 16
    %v1318 = vld [vmem:[%s1317] sm:$0xf]
    %v1319 = vld [vmem:[%s1317 + $0x4] sm:$0xf]
    %v1320 = vld [vmem:[%s1317 + $0x8] sm:$0xf]
    %v1321 = vld [vmem:[%s1317 + $0xc] sm:$0xf]
    %v1326 = vunpack.c.l.b16 %v1318
    %v1327 = vunpack.c.l.b16 %v1319
    %v1328 = vunpack.c.l.b16 %v1320
    %v1329 = vunpack.c.l.b16 %v1321
    %v1330 = vpack.c.b16 %v1327, %v1326
    %v1331 = vpack.c.b16 %v1329, %v1328
    %v1335 = vsel %vm171, %v1316, 0
    %1337 = vmatprep.subr.bf16.mxu0 0
    %1338 = vmatpush1.bf16.msra.mxu0 %v1330
    %1339 = vmatprep.subr.bf16.mxu0 0
    %1340 = vmatpush1.bf16.msra.mxu0 %v1331
    %1341 = vmatprep.subr.bf16.mxu0 0
    %1342 = vmatpush1.bf16.msra.mxu0 0
    %1343 = vmatprep.subr.bf16.mxu0 0
    %1344 = vmatpush1.bf16.msra.mxu0 0
    %1345 = vmatprep.subr.bf16.mxu0 0
    %1346 = vmatpush1.bf16.msra.mxu0 0
    %1347 = vmatprep.subr.bf16.mxu0 0
    %1348 = vmatpush1.bf16.msra.mxu0 0
    %1349 = vmatprep.subr.bf16.mxu0 0
    %1350 = vmatpush1.bf16.msra.mxu0 0
    %1351 = vmatprep.subr.bf16.mxu0 0
    %1352 = vmatpush1.bf16.msra.mxu0 0
    %1353 = vmatprep.subr.bf16.mxu0 0
    %1354 = vmatpush1.bf16.msra.mxu0 0
    %1355 = vmatprep.subr.bf16.mxu0 0
    %1356 = vmatpush1.bf16.msra.mxu0 0
    %1357 = vmatprep.subr.bf16.mxu0 0
    %1358 = vmatpush1.bf16.msra.mxu0 0
    %1359 = vmatprep.subr.bf16.mxu0 0
    %1360 = vmatpush1.bf16.msra.mxu0 0
    %1361 = vmatprep.subr.bf16.mxu0 0
    %1362 = vmatpush1.bf16.msra.mxu0 0
    %1363 = vmatprep.subr.bf16.mxu0 0
    %1364 = vmatpush1.bf16.msra.mxu0 0
    %1365 = vmatprep.subr.bf16.mxu0 0
    %1366 = vmatpush1.bf16.msra.mxu0 0
    %1367 = vmatprep.subr.bf16.mxu0 0
    %1368 = vmatpush1.bf16.msra.mxu0 0
    %1369 = vmatprep.mubr.bf16.mxu0 0
    %1370 = vmatmul.mubr.bf16.gmra.mrb[0].mxu0 %v1335
    %v1371 = vpop.f32.mrb[0].mxu0
    %v1372 = vadd.f32 0.0, %v1371
    %v1373 = vpop.f32.mrb[0].mxu0
    %v1374 = vpop.f32.mrb[0].mxu0
    %v1375 = vadd.f32 0.0, %v1374
    %v1376 = vpop.f32.mrb[0].mxu0
    %1377 = vdwg.mxu0
    %v1378 = vxor.u32 %v1372, 2147483648
    %v1379 = vxor.u32 %v1375, 2147483648
    %v1380 = vmul.f32 %v1378, 1.442695
    %v1381 = vpow.pop %v1380
    %v1382 = vmul.f32 %v1379, 1.442695
    %v1383 = vpow.pop %v1382
    %v1384 = vadd.f32 %v1381, 1.0
    %v1385 = vadd.f32 %v1383, 1.0
    %v1386 = vrcp.pop %v1384
    %v1387 = vmul.f32 1.0, %v1386
    %v1388 = vrcp.pop %v1385
    %v1389 = vmul.f32 1.0, %v1388
    %v1390 = vmul.f32 %v1372, %v1387
    %v1391 = vmul.f32 %v1375, %v1389
    %1394 = vrot.lane.b32.xlu0 %v1372, 64
    %v1395 = vpop.permute.xlu0 %1394
    %1396 = vrot.lane.b32.xlu0 %v1375, 64
    %v1397 = vpop.permute.xlu0 %1396
    %v1400 = vmul.f32 %v1390, %v1395
    %v1401 = vmul.f32 %v1391, %v1397
    %v1402 = vpack.c.bf16 %v1401, %v1400
    %s1403 = scalar_lea.vmem %s10, 32
    %v1404 = vld [vmem:[%s1403] sm:$0xf]
    %v1405 = vld [vmem:[%s1403 + $0x4] sm:$0xf]
    %v1406 = vld [vmem:[%s1403 + $0x8] sm:$0xf]
    %v1407 = vld [vmem:[%s1403 + $0xc] sm:$0xf]
    %v1408 = vld [vmem:[%s1403 + $0x10] sm:$0xf]
    %v1409 = vld [vmem:[%s1403 + $0x14] sm:$0xf]
    %v1410 = vld [vmem:[%s1403 + $0x18] sm:$0xf]
    %v1411 = vld [vmem:[%s1403 + $0x1c] sm:$0xf]
    %v1420 = vunpack.c.l.b16 %v1404
    %v1421 = vunpack.c.l.b16 %v1405
    %v1422 = vunpack.c.l.b16 %v1406
    %v1423 = vunpack.c.l.b16 %v1407
    %v1424 = vunpack.c.l.b16 %v1408
    %v1425 = vunpack.c.l.b16 %v1409
    %v1426 = vunpack.c.l.b16 %v1410
    %v1427 = vunpack.c.l.b16 %v1411
    %v1428 = vpack.c.b16 %v1421, %v1420
    %v1429 = vpack.c.b16 %v1423, %v1422
    %v1430 = vpack.c.b16 %v1425, %v1424
    %v1431 = vpack.c.b16 %v1427, %v1426
    %v1437 = vsel %vm407, %v1402, 0
    %1439 = vmatprep.subr.bf16.mxu0 0
    %1440 = vmatpush1.bf16.msra.mxu0 %v1428
    %1441 = vmatprep.subr.bf16.mxu0 0
    %1442 = vmatpush1.bf16.msra.mxu0 %v1429
    %1443 = vmatprep.subr.bf16.mxu0 0
    %1444 = vmatpush1.bf16.msra.mxu0 %v1430
    %1445 = vmatprep.subr.bf16.mxu0 0
    %1446 = vmatpush1.bf16.msra.mxu0 %v1431
    %1447 = vmatprep.subr.bf16.mxu0 0
    %1448 = vmatpush1.bf16.msra.mxu0 0
    %1449 = vmatprep.subr.bf16.mxu0 0
    %1450 = vmatpush1.bf16.msra.mxu0 0
    %1451 = vmatprep.subr.bf16.mxu0 0
    %1452 = vmatpush1.bf16.msra.mxu0 0
    %1453 = vmatprep.subr.bf16.mxu0 0
    %1454 = vmatpush1.bf16.msra.mxu0 0
    %1455 = vmatprep.subr.bf16.mxu0 0
    %1456 = vmatpush1.bf16.msra.mxu0 0
    %1457 = vmatprep.subr.bf16.mxu0 0
    %1458 = vmatpush1.bf16.msra.mxu0 0
    %1459 = vmatprep.subr.bf16.mxu0 0
    %1460 = vmatpush1.bf16.msra.mxu0 0
    %1461 = vmatprep.subr.bf16.mxu0 0
    %1462 = vmatpush1.bf16.msra.mxu0 0
    %1463 = vmatprep.subr.bf16.mxu0 0
    %1464 = vmatpush1.bf16.msra.mxu0 0
    %1465 = vmatprep.subr.bf16.mxu0 0
    %1466 = vmatpush1.bf16.msra.mxu0 0
    %1467 = vmatprep.subr.bf16.mxu0 0
    %1468 = vmatpush1.bf16.msra.mxu0 0
    %1469 = vmatprep.subr.bf16.mxu0 0
    %1470 = vmatpush1.bf16.msra.mxu0 0
    %1471 = vmatprep.mubr.bf16.mxu0 0
    %1472 = vmatmul.mubr.bf16.gmra.mrb[0].mxu0 %v1437
    %v1473 = vpop.f32.mrb[0].mxu0
    %v1474 = vadd.f32 0.0, %v1473
    %v1475 = vpop.f32.mrb[0].mxu0
    %v1476 = vpop.f32.mrb[0].mxu0
    %v1477 = vadd.f32 0.0, %v1476
    %v1478 = vpop.f32.mrb[0].mxu0
    %1479 = vdwg.mxu0
    %v1480 = vadd.f32 %v1298, %v1474
    %v1481 = vadd.f32 %v1299, %v1477
    %v1482 = vmul.f32 %v1480, %v1480
    %v1483 = vmul.f32 %v1481, %v1481
    %v1484 = vsel %vm171, %v1482, 0.0
    %1485 = vadd.xlane.f32.xlu0 %v1484
    %v1486 = vpop.xlane.xlu0 %1485
    %v1487 = vsel %vm171, %v1483, 0.0
    %1488 = vadd.xlane.f32.xlu0 %v1487
    %v1489 = vpop.xlane.xlu0 %1488
    %v1490 = vmul.f32 %v1486, %v178
    %v1491 = vmul.f32 %v1489, %v178
    %v1492 = vadd.f32 %v1490, 1e-06
    %v1493 = vadd.f32 %v1491, 1e-06
    %v1494 = vrsqrt.pop %v1492
    %v1495 = vrsqrt.pop %v1493
    %v1496 = vmul.f32 %v1480, %v1494
    %v1497 = vmul.f32 %v1481, %v1495
    %v1498 = vpack.c.bf16 %v1497, %v1496
    %s1499 = scalar_lea.vmem %s7, 64
    %v1500 = vld [vmem:[%s1499] sm:$0xff]
    %v1501 = vld [vmem:[%s1499 + $0x8] sm:$0xff]
    %v1502 = vld [vmem:[%s1499 + $0x10] sm:$0xff]
    %v1503 = vld [vmem:[%s1499 + $0x18] sm:$0xff]
    %v1508 = vunpack.c.l.b16 %v1500
    %v1509 = vunpack.c.h.b16 %v1500
    %v1510 = vunpack.c.l.b16 %v1501
    %v1511 = vunpack.c.h.b16 %v1501
    %v1512 = vunpack.c.l.b16 %v1502
    %v1513 = vunpack.c.h.b16 %v1502
    %v1514 = vunpack.c.l.b16 %v1503
    %v1515 = vunpack.c.h.b16 %v1503
    %v1516 = vpack.c.b16 %v1510, %v1508
    %v1517 = vpack.c.b16 %v1511, %v1509
    %v1518 = vpack.c.b16 %v1514, %v1512
    %v1519 = vpack.c.b16 %v1515, %v1513
    %v1525 = vsel %vm171, %v1498, 0
    %1527 = vmatprep.subr.bf16.mxu0 %v1517
    %1528 = vmatpush1.bf16.msra.mxu0 %v1516
    %1529 = vmatprep.subr.bf16.mxu0 %v1519
    %1530 = vmatpush1.bf16.msra.mxu0 %v1518
    %1531 = vmatprep.subr.bf16.mxu0 0
    %1532 = vmatpush1.bf16.msra.mxu0 0
    %1533 = vmatprep.subr.bf16.mxu0 0
    %1534 = vmatpush1.bf16.msra.mxu0 0
    %1535 = vmatprep.subr.bf16.mxu0 0
    %1536 = vmatpush1.bf16.msra.mxu0 0
    %1537 = vmatprep.subr.bf16.mxu0 0
    %1538 = vmatpush1.bf16.msra.mxu0 0
    %1539 = vmatprep.subr.bf16.mxu0 0
    %1540 = vmatpush1.bf16.msra.mxu0 0
    %1541 = vmatprep.subr.bf16.mxu0 0
    %1542 = vmatpush1.bf16.msra.mxu0 0
    %1543 = vmatprep.subr.bf16.mxu0 0
    %1544 = vmatpush1.bf16.msra.mxu0 0
    %1545 = vmatprep.subr.bf16.mxu0 0
    %1546 = vmatpush1.bf16.msra.mxu0 0
    %1547 = vmatprep.subr.bf16.mxu0 0
    %1548 = vmatpush1.bf16.msra.mxu0 0
    %1549 = vmatprep.subr.bf16.mxu0 0
    %1550 = vmatpush1.bf16.msra.mxu0 0
    %1551 = vmatprep.subr.bf16.mxu0 0
    %1552 = vmatpush1.bf16.msra.mxu0 0
    %1553 = vmatprep.subr.bf16.mxu0 0
    %1554 = vmatpush1.bf16.msra.mxu0 0
    %1555 = vmatprep.subr.bf16.mxu0 0
    %1556 = vmatpush1.bf16.msra.mxu0 0
    %1557 = vmatprep.subr.bf16.mxu0 0
    %1558 = vmatpush1.bf16.msra.mxu0 0
    %1559 = vmatprep.mubr.bf16.mxu0 0
    %1560 = vmatmul.mubr.bf16.gmra.mrb[0].mxu0 %v1525
    %v1561 = vpop.f32.mrb[0].mxu0
    %v1562 = vadd.f32 0.0, %v1561
    %v1563 = vpop.f32.mrb[0].mxu0
    %v1564 = vadd.f32 0.0, %v1563
    %v1565 = vpop.f32.mrb[0].mxu0
    %v1566 = vadd.f32 0.0, %v1565
    %v1567 = vpop.f32.mrb[0].mxu0
    %v1568 = vadd.f32 0.0, %v1567
    %1569 = vdwg.mxu0
    %v1570 = vmul.f32 %v1562, %v147
    %v1571 = vmul.f32 %v1566, %v148
    %v1572 = vmul.f32 %v1562, %v263
    %v1573 = vmul.f32 %v1566, %v265
    %1576 = vrot.lane.b32.xlu0 %v1572, 64
    %v1577 = vpop.permute.xlu0 %1576
    %1578 = vrot.lane.b32.xlu0 %v1573, 64
    %v1579 = vpop.permute.xlu0 %1578
    %v1582 = vadd.f32 %v1570, %v1577
    %v1583 = vadd.f32 %v1571, %v1579
    %1586 = vrot.lane.b32.xlu0 %v1582, 96
    %v1587 = vpop.permute.xlu0 %1586
    %1588 = vrot.lane.b32.xlu0 %v1583, 96
    %v1589 = vpop.permute.xlu0 %1588
    %v1592 = vmul.f32 %v151, %v1587
    %v1593 = vmul.f32 %v152, %v1589
    %v1594 = vmul.f32 %v153, %v1587
    %v1595 = vmul.f32 %v154, %v1589
    %v1596 = vmul.f32 %v155, %v1587
    %v1597 = vmul.f32 %v156, %v1589
    %v1598 = vmul.f32 %v157, %v1587
    %v1599 = vmul.f32 %v158, %v1589
    %v1600 = vmul.f32 %v151, %v1564
    %v1601 = vmul.f32 %v152, %v1568
    %v1602 = vmul.f32 %v153, %v1564
    %v1603 = vmul.f32 %v154, %v1568
    %v1604 = vmul.f32 %v155, %v1564
    %v1605 = vmul.f32 %v156, %v1568
    %v1606 = vmul.f32 %v157, %v1564
    %v1607 = vmul.f32 %v158, %v1568
    %v1608 = vsel %vm171, %v1582, 0
    %v1610 = vsel %vm171, %v1583, 0
    %v1613 = vsel %vm171, %v1592, 0
    %v1616 = vsel %vm171, %v1593, 0
    %v1619 = vsel %vm171, %v1594, 0
    %v1622 = vsel %vm171, %v1595, 0
    %v1625 = vsel %vm171, %v1596, 0
    %v1628 = vsel %vm171, %v1597, 0
    %v1631 = vsel %vm171, %v1598, 0
    %v1634 = vsel %vm171, %v1599, 0
    %1636 = vmatprep.subr.mxu0 0.0
    %1637 = vmatpush1.xpose.msra.mxu0 %v1613
    %1638 = vmatprep.subr.mxu0 0.0
    %1639 = vmatpush1.xpose.msra.mxu0 %v1616
    %1640 = vmatprep.subr.mxu0 0.0
    %1641 = vmatpush1.xpose.msra.mxu0 %v1619
    %1642 = vmatprep.subr.mxu0 0.0
    %1643 = vmatpush1.xpose.msra.mxu0 %v1622
    %1644 = vmatprep.subr.mxu0 0.0
    %1645 = vmatpush1.xpose.msra.mxu0 %v1625
    %1646 = vmatprep.subr.mxu0 0.0
    %1647 = vmatpush1.xpose.msra.mxu0 %v1628
    %1648 = vmatprep.subr.mxu0 0.0
    %1649 = vmatpush1.xpose.msra.mxu0 %v1631
    %1650 = vmatprep.subr.mxu0 0.0
    %1651 = vmatpush1.xpose.msra.mxu0 %v1634
    %1652 = vmatprep.subr.mxu0 0.0
    %1653 = vmatpush1.xpose.msra.mxu0 0.0
    %1654 = vmatprep.subr.mxu0 0.0
    %1655 = vmatpush1.xpose.msra.mxu0 0.0
    %1656 = vmatprep.subr.mxu0 0.0
    %1657 = vmatpush1.xpose.msra.mxu0 0.0
    %1658 = vmatprep.subr.mxu0 0.0
    %1659 = vmatpush1.xpose.msra.mxu0 0.0
    %1660 = vmatprep.subr.mxu0 0.0
    %1661 = vmatpush1.xpose.msra.mxu0 0.0
    %1662 = vmatprep.subr.mxu0 0.0
    %1663 = vmatpush1.xpose.msra.mxu0 0.0
    %1664 = vmatprep.subr.mxu0 0.0
    %1665 = vmatpush1.xpose.msra.mxu0 0.0
    %1666 = vmatprep.subr.mxu0 0.0
    %1667 = vmatpush1.xpose.msra.mxu0 0.0
    %1668 = vmatprep.subr.mxu0 0.0
    %1669 = vmatpush1.xpose.msra.mxu0 0.0
    %1670 = vmatprep.subr.mxu0 0.0
    %1671 = vmatpush1.xpose.msra.mxu0 0.0
    %1672 = vmatprep.subr.mxu0 0.0
    %1673 = vmatpush1.xpose.msra.mxu0 0.0
    %1674 = vmatprep.subr.mxu0 0.0
    %1675 = vmatpush1.xpose.msra.mxu0 0.0
    %1676 = vmatprep.subr.mxu0 0.0
    %1677 = vmatpush1.xpose.msra.mxu0 0.0
    %1678 = vmatprep.subr.mxu0 0.0
    %1679 = vmatpush1.xpose.msra.mxu0 0.0
    %1680 = vmatprep.subr.mxu0 0.0
    %1681 = vmatpush1.xpose.msra.mxu0 0.0
    %1682 = vmatprep.subr.mxu0 0.0
    %1683 = vmatpush1.xpose.msra.mxu0 0.0
    %1684 = vmatprep.subr.mxu0 0.0
    %1685 = vmatpush1.xpose.msra.mxu0 0.0
    %1686 = vmatprep.subr.mxu0 0.0
    %1687 = vmatpush1.xpose.msra.mxu0 0.0
    %1688 = vmatprep.subr.mxu0 0.0
    %1689 = vmatpush1.xpose.msra.mxu0 0.0
    %1690 = vmatprep.subr.mxu0 0.0
    %1691 = vmatpush1.xpose.msra.mxu0 0.0
    %1692 = vmatprep.subr.mxu0 0.0
    %1693 = vmatpush1.xpose.msra.mxu0 0.0
    %1694 = vmatprep.subr.mxu0 0.0
    %1695 = vmatpush1.xpose.msra.mxu0 0.0
    %1696 = vmatprep.subr.mxu0 0.0
    %1697 = vmatpush1.xpose.msra.mxu0 0.0
    %1698 = vmatprep.subr.mxu0 0.0
    %1699 = vmatpush1.xpose.msra.mxu0 0.0
    %1700 = vmatprep.mubr.f32.mxu0 0.0
    %1701 = vmatmul.mubr.f32.gmra.mrb[0].mxu0 %v1608
    %v1702 = vpop.f32.mrb[0].mxu0
    %v1703 = vadd.f32 %v159, %v1702
    %v1704 = vpop.f32.mrb[0].mxu0
    %1705 = vmatprep.mubr.f32.mxu0 0.0
    %1706 = vmatmul.mubr.f32.gmra.mrb[0].mxu0 %v1610
    %v1707 = vpop.f32.mrb[0].mxu0
    %v1708 = vadd.f32 %v160, %v1707
    %v1709 = vpop.f32.mrb[0].mxu0
    %1710 = vdwg.mxu0
    %v1711 = vsel %vm407, %v1703, -inf
    %1712 = vmax.xlane.f32.xlu0 %v1711
    %v1713 = vpop.xlane.xlu0 %1712
    %v1714 = vsel %vm407, %v1708, -inf
    %1715 = vmax.xlane.f32.xlu0 %v1714
    %v1716 = vpop.xlane.xlu0 %1715
    %v1717 = vsub.f32 %v1703, %v1713
    %v1718 = vsub.f32 %v1708, %v1716
    %v1719 = vmul.f32 %v1717, 1.442695
    %v1720 = vpow.pop %v1719
    %v1721 = vmul.f32 %v1718, 1.442695
    %v1722 = vpow.pop %v1721
    %v1724 = vsel %vm407, %v1720, 0
    %v1727 = vsel %vm407, %v1722, 0
    %1729 = vmatprep.subr.mxu0 0.0
    %1730 = vmatpush1.msra.mxu0 %v161
    %1731 = vmatprep.subr.mxu0 0.0
    %1732 = vmatpush1.msra.mxu0 %v162
    %1733 = vmatprep.subr.mxu0 0.0
    %1734 = vmatpush1.msra.mxu0 %v163
    %1735 = vmatprep.subr.mxu0 0.0
    %1736 = vmatpush1.msra.mxu0 %v164
    %1737 = vmatprep.subr.mxu0 0.0
    %1738 = vmatpush1.msra.mxu0 %v165
    %1739 = vmatprep.subr.mxu0 0.0
    %1740 = vmatpush1.msra.mxu0 %v166
    %1741 = vmatprep.subr.mxu0 0.0
    %1742 = vmatpush1.msra.mxu0 %v167
    %1743 = vmatprep.subr.mxu0 0.0
    %1744 = vmatpush1.msra.mxu0 %v168
    %1745 = vmatprep.subr.mxu0 0.0
    %1746 = vmatpush1.msra.mxu0 0.0
    %1747 = vmatprep.subr.mxu0 0.0
    %1748 = vmatpush1.msra.mxu0 0.0
    %1749 = vmatprep.subr.mxu0 0.0
    %1750 = vmatpush1.msra.mxu0 0.0
    %1751 = vmatprep.subr.mxu0 0.0
    %1752 = vmatpush1.msra.mxu0 0.0
    %1753 = vmatprep.subr.mxu0 0.0
    %1754 = vmatpush1.msra.mxu0 0.0
    %1755 = vmatprep.subr.mxu0 0.0
    %1756 = vmatpush1.msra.mxu0 0.0
    %1757 = vmatprep.subr.mxu0 0.0
    %1758 = vmatpush1.msra.mxu0 0.0
    %1759 = vmatprep.subr.mxu0 0.0
    %1760 = vmatpush1.msra.mxu0 0.0
    %1761 = vmatprep.subr.mxu0 0.0
    %1762 = vmatpush1.msra.mxu0 0.0
    %1763 = vmatprep.subr.mxu0 0.0
    %1764 = vmatpush1.msra.mxu0 0.0
    %1765 = vmatprep.subr.mxu0 0.0
    %1766 = vmatpush1.msra.mxu0 0.0
    %1767 = vmatprep.subr.mxu0 0.0
    %1768 = vmatpush1.msra.mxu0 0.0
    %1769 = vmatprep.subr.mxu0 0.0
    %1770 = vmatpush1.msra.mxu0 0.0
    %1771 = vmatprep.subr.mxu0 0.0
    %1772 = vmatpush1.msra.mxu0 0.0
    %1773 = vmatprep.subr.mxu0 0.0
    %1774 = vmatpush1.msra.mxu0 0.0
    %1775 = vmatprep.subr.mxu0 0.0
    %1776 = vmatpush1.msra.mxu0 0.0
    %1777 = vmatprep.subr.mxu0 0.0
    %1778 = vmatpush1.msra.mxu0 0.0
    %1779 = vmatprep.subr.mxu0 0.0
    %1780 = vmatpush1.msra.mxu0 0.0
    %1781 = vmatprep.subr.mxu0 0.0
    %1782 = vmatpush1.msra.mxu0 0.0
    %1783 = vmatprep.subr.mxu0 0.0
    %1784 = vmatpush1.msra.mxu0 0.0
    %1785 = vmatprep.subr.mxu0 0.0
    %1786 = vmatpush1.msra.mxu0 0.0
    %1787 = vmatprep.subr.mxu0 0.0
    %1788 = vmatpush1.msra.mxu0 0.0
    %1789 = vmatprep.subr.mxu0 0.0
    %1790 = vmatpush1.msra.mxu0 0.0
    %1791 = vmatprep.subr.mxu0 0.0
    %1792 = vmatpush1.msra.mxu0 0.0
    %1793 = vmatprep.mubr.f32.mxu0 0.0
    %1794 = vmatmul.mubr.f32.gmra.mrb[0].mxu0 %v1724
    %v1795 = vpop.f32.mrb[0].mxu0
    %v1796 = vadd.f32 0.0, %v1795
    %v1797 = vpop.f32.mrb[0].mxu0
    %1798 = vmatprep.mubr.f32.mxu0 0.0
    %1799 = vmatmul.mubr.f32.gmra.mrb[0].mxu0 %v1727
    %v1800 = vpop.f32.mrb[0].mxu0
    %v1801 = vadd.f32 0.0, %v1800
    %v1802 = vpop.f32.mrb[0].mxu0
    %1803 = vdwg.mxu0
    %v1804 = vrcp.pop %v1796
    %v1805 = vrcp.pop %v1801
    %v1806 = vmul.f32 %v1720, %v1804
    %v1807 = vmul.f32 %v1722, %v1805
    %v1809 = vsel %vm407, %v1806, 0
    %v1812 = vsel %vm407, %v1807, 0
    %1814 = vmatprep.subr.mxu0 0.0
    %1815 = vmatpush1.msra.mxu0 %v1600
    %1816 = vmatprep.subr.mxu0 0.0
    %1817 = vmatpush1.msra.mxu0 %v1601
    %1818 = vmatprep.subr.mxu0 0.0
    %1819 = vmatpush1.msra.mxu0 %v1602
    %1820 = vmatprep.subr.mxu0 0.0
    %1821 = vmatpush1.msra.mxu0 %v1603
    %1822 = vmatprep.subr.mxu0 0.0
    %1823 = vmatpush1.msra.mxu0 %v1604
    %1824 = vmatprep.subr.mxu0 0.0
    %1825 = vmatpush1.msra.mxu0 %v1605
    %1826 = vmatprep.subr.mxu0 0.0
    %1827 = vmatpush1.msra.mxu0 %v1606
    %1828 = vmatprep.subr.mxu0 0.0
    %1829 = vmatpush1.msra.mxu0 %v1607
    %1830 = vmatprep.subr.mxu0 0.0
    %1831 = vmatpush1.msra.mxu0 0.0
    %1832 = vmatprep.subr.mxu0 0.0
    %1833 = vmatpush1.msra.mxu0 0.0
    %1834 = vmatprep.subr.mxu0 0.0
    %1835 = vmatpush1.msra.mxu0 0.0
    %1836 = vmatprep.subr.mxu0 0.0
    %1837 = vmatpush1.msra.mxu0 0.0
    %1838 = vmatprep.subr.mxu0 0.0
    %1839 = vmatpush1.msra.mxu0 0.0
    %1840 = vmatprep.subr.mxu0 0.0
    %1841 = vmatpush1.msra.mxu0 0.0
    %1842 = vmatprep.subr.mxu0 0.0
    %1843 = vmatpush1.msra.mxu0 0.0
    %1844 = vmatprep.subr.mxu0 0.0
    %1845 = vmatpush1.msra.mxu0 0.0
    %1846 = vmatprep.subr.mxu0 0.0
    %1847 = vmatpush1.msra.mxu0 0.0
    %1848 = vmatprep.subr.mxu0 0.0
    %1849 = vmatpush1.msra.mxu0 0.0
    %1850 = vmatprep.subr.mxu0 0.0
    %1851 = vmatpush1.msra.mxu0 0.0
    %1852 = vmatprep.subr.mxu0 0.0
    %1853 = vmatpush1.msra.mxu0 0.0
    %1854 = vmatprep.subr.mxu0 0.0
    %1855 = vmatpush1.msra.mxu0 0.0
    %1856 = vmatprep.subr.mxu0 0.0
    %1857 = vmatpush1.msra.mxu0 0.0
    %1858 = vmatprep.subr.mxu0 0.0
    %1859 = vmatpush1.msra.mxu0 0.0
    %1860 = vmatprep.subr.mxu0 0.0
    %1861 = vmatpush1.msra.mxu0 0.0
    %1862 = vmatprep.subr.mxu0 0.0
    %1863 = vmatpush1.msra.mxu0 0.0
    %1864 = vmatprep.subr.mxu0 0.0
    %1865 = vmatpush1.msra.mxu0 0.0
    %1866 = vmatprep.subr.mxu0 0.0
    %1867 = vmatpush1.msra.mxu0 0.0
    %1868 = vmatprep.subr.mxu0 0.0
    %1869 = vmatpush1.msra.mxu0 0.0
    %1870 = vmatprep.subr.mxu0 0.0
    %1871 = vmatpush1.msra.mxu0 0.0
    %1872 = vmatprep.subr.mxu0 0.0
    %1873 = vmatpush1.msra.mxu0 0.0
    %1874 = vmatprep.subr.mxu0 0.0
    %1875 = vmatpush1.msra.mxu0 0.0
    %1876 = vmatprep.subr.mxu0 0.0
    %1877 = vmatpush1.msra.mxu0 0.0
    %1878 = vmatprep.mubr.f32.mxu0 0.0
    %1879 = vmatmul.mubr.f32.gmra.mrb[0].mxu0 %v1809
    %v1880 = vpop.f32.mrb[0].mxu0
    %v1881 = vadd.f32 0.0, %v1880
    %v1882 = vpop.f32.mrb[0].mxu0
    %1883 = vmatprep.mubr.f32.mxu0 0.0
    %1884 = vmatmul.mubr.f32.gmra.mrb[0].mxu0 %v1812
    %v1885 = vpop.f32.mrb[0].mxu0
    %v1886 = vadd.f32 0.0, %v1885
    %v1887 = vpop.f32.mrb[0].mxu0
    %1888 = vdwg.mxu0
    %v1889 = vpack.c.bf16 %v1886, %v1881
    %s1890 = scalar_lea.vmem %s8, 32
    %v1891 = vld [vmem:[%s1890] sm:$0xf]
    %v1892 = vld [vmem:[%s1890 + $0x4] sm:$0xf]
    %v1893 = vld [vmem:[%s1890 + $0x8] sm:$0xf]
    %v1894 = vld [vmem:[%s1890 + $0xc] sm:$0xf]
    %v1899 = vunpack.c.l.b16 %v1891
    %v1900 = vunpack.c.l.b16 %v1892
    %v1901 = vunpack.c.l.b16 %v1893
    %v1902 = vunpack.c.l.b16 %v1894
    %v1903 = vpack.c.b16 %v1900, %v1899
    %v1904 = vpack.c.b16 %v1902, %v1901
    %v1908 = vsel %vm171, %v1889, 0
    %1910 = vmatprep.subr.bf16.mxu0 0
    %1911 = vmatpush1.bf16.msra.mxu0 %v1903
    %1912 = vmatprep.subr.bf16.mxu0 0
    %1913 = vmatpush1.bf16.msra.mxu0 %v1904
    %1914 = vmatprep.subr.bf16.mxu0 0
    %1915 = vmatpush1.bf16.msra.mxu0 0
    %1916 = vmatprep.subr.bf16.mxu0 0
    %1917 = vmatpush1.bf16.msra.mxu0 0
    %1918 = vmatprep.subr.bf16.mxu0 0
    %1919 = vmatpush1.bf16.msra.mxu0 0
    %1920 = vmatprep.subr.bf16.mxu0 0
    %1921 = vmatpush1.bf16.msra.mxu0 0
    %1922 = vmatprep.subr.bf16.mxu0 0
    %1923 = vmatpush1.bf16.msra.mxu0 0
    %1924 = vmatprep.subr.bf16.mxu0 0
    %1925 = vmatpush1.bf16.msra.mxu0 0
    %1926 = vmatprep.subr.bf16.mxu0 0
    %1927 = vmatpush1.bf16.msra.mxu0 0
    %1928 = vmatprep.subr.bf16.mxu0 0
    %1929 = vmatpush1.bf16.msra.mxu0 0
    %1930 = vmatprep.subr.bf16.mxu0 0
    %1931 = vmatpush1.bf16.msra.mxu0 0
    %1932 = vmatprep.subr.bf16.mxu0 0
    %1933 = vmatpush1.bf16.msra.mxu0 0
    %1934 = vmatprep.subr.bf16.mxu0 0
    %1935 = vmatpush1.bf16.msra.mxu0 0
    %1936 = vmatprep.subr.bf16.mxu0 0
    %1937 = vmatpush1.bf16.msra.mxu0 0
    %1938 = vmatprep.subr.bf16.mxu0 0
    %1939 = vmatpush1.bf16.msra.mxu0 0
    %1940 = vmatprep.subr.bf16.mxu0 0
    %1941 = vmatpush1.bf16.msra.mxu0 0
    %1942 = vmatprep.mubr.bf16.mxu0 0
    %1943 = vmatmul.mubr.bf16.gmra.mrb[0].mxu0 %v1908
    %v1944 = vpop.f32.mrb[0].mxu0
    %v1945 = vadd.f32 0.0, %v1944
    %v1946 = vpop.f32.mrb[0].mxu0
    %v1947 = vpop.f32.mrb[0].mxu0
    %v1948 = vadd.f32 0.0, %v1947
    %v1949 = vpop.f32.mrb[0].mxu0
    %1950 = vdwg.mxu0
    %v1951 = vadd.f32 %v1480, %v1945
    %v1952 = vadd.f32 %v1481, %v1948
    %v1953 = vmul.f32 %v1951, %v1951
    %v1954 = vmul.f32 %v1952, %v1952
    %v1955 = vsel %vm171, %v1953, 0.0
    %1956 = vadd.xlane.f32.xlu0 %v1955
    %v1957 = vpop.xlane.xlu0 %1956
    %v1958 = vsel %vm171, %v1954, 0.0
    %1959 = vadd.xlane.f32.xlu0 %v1958
    %v1960 = vpop.xlane.xlu0 %1959
    %v1961 = vmul.f32 %v1957, %v178
    %v1962 = vmul.f32 %v1960, %v178
    %v1963 = vadd.f32 %v1961, 1e-06
    %v1964 = vadd.f32 %v1962, 1e-06
    %v1965 = vrsqrt.pop %v1963
    %v1966 = vrsqrt.pop %v1964
    %v1967 = vmul.f32 %v1951, %v1965
    %v1968 = vmul.f32 %v1952, %v1966
    %v1969 = vpack.c.bf16 %v1968, %v1967
    %s1970 = scalar_lea.vmem %s9, 32
    %v1971 = vld [vmem:[%s1970] sm:$0xf]
    %v1972 = vld [vmem:[%s1970 + $0x4] sm:$0xf]
    %v1973 = vld [vmem:[%s1970 + $0x8] sm:$0xf]
    %v1974 = vld [vmem:[%s1970 + $0xc] sm:$0xf]
    %v1979 = vunpack.c.l.b16 %v1971
    %v1980 = vunpack.c.l.b16 %v1972
    %v1981 = vunpack.c.l.b16 %v1973
    %v1982 = vunpack.c.l.b16 %v1974
    %v1983 = vpack.c.b16 %v1980, %v1979
    %v1984 = vpack.c.b16 %v1982, %v1981
    %v1988 = vsel %vm171, %v1969, 0
    %1990 = vmatprep.subr.bf16.mxu0 0
    %1991 = vmatpush1.bf16.msra.mxu0 %v1983
    %1992 = vmatprep.subr.bf16.mxu0 0
    %1993 = vmatpush1.bf16.msra.mxu0 %v1984
    %1994 = vmatprep.subr.bf16.mxu0 0
    %1995 = vmatpush1.bf16.msra.mxu0 0
    %1996 = vmatprep.subr.bf16.mxu0 0
    %1997 = vmatpush1.bf16.msra.mxu0 0
    %1998 = vmatprep.subr.bf16.mxu0 0
    %1999 = vmatpush1.bf16.msra.mxu0 0
    %2000 = vmatprep.subr.bf16.mxu0 0
    %2001 = vmatpush1.bf16.msra.mxu0 0
    %2002 = vmatprep.subr.bf16.mxu0 0
    %2003 = vmatpush1.bf16.msra.mxu0 0
    %2004 = vmatprep.subr.bf16.mxu0 0
    %2005 = vmatpush1.bf16.msra.mxu0 0
    %2006 = vmatprep.subr.bf16.mxu0 0
    %2007 = vmatpush1.bf16.msra.mxu0 0
    %2008 = vmatprep.subr.bf16.mxu0 0
    %2009 = vmatpush1.bf16.msra.mxu0 0
    %2010 = vmatprep.subr.bf16.mxu0 0
    %2011 = vmatpush1.bf16.msra.mxu0 0
    %2012 = vmatprep.subr.bf16.mxu0 0
    %2013 = vmatpush1.bf16.msra.mxu0 0
    %2014 = vmatprep.subr.bf16.mxu0 0
    %2015 = vmatpush1.bf16.msra.mxu0 0
    %2016 = vmatprep.subr.bf16.mxu0 0
    %2017 = vmatpush1.bf16.msra.mxu0 0
    %2018 = vmatprep.subr.bf16.mxu0 0
    %2019 = vmatpush1.bf16.msra.mxu0 0
    %2020 = vmatprep.subr.bf16.mxu0 0
    %2021 = vmatpush1.bf16.msra.mxu0 0
    %2022 = vmatprep.mubr.bf16.mxu0 0
    %2023 = vmatmul.mubr.bf16.gmra.mrb[0].mxu0 %v1988
    %v2024 = vpop.f32.mrb[0].mxu0
    %v2025 = vadd.f32 0.0, %v2024
    %v2026 = vpop.f32.mrb[0].mxu0
    %v2027 = vpop.f32.mrb[0].mxu0
    %v2028 = vadd.f32 0.0, %v2027
    %v2029 = vpop.f32.mrb[0].mxu0
    %2030 = vdwg.mxu0
    %v2031 = vxor.u32 %v2025, 2147483648
    %v2032 = vxor.u32 %v2028, 2147483648
    %v2033 = vmul.f32 %v2031, 1.442695
    %v2034 = vpow.pop %v2033
    %v2035 = vmul.f32 %v2032, 1.442695
    %v2036 = vpow.pop %v2035
    %v2037 = vadd.f32 %v2034, 1.0
    %v2038 = vadd.f32 %v2036, 1.0
    %v2039 = vrcp.pop %v2037
    %v2040 = vmul.f32 1.0, %v2039
    %v2041 = vrcp.pop %v2038
    %v2042 = vmul.f32 1.0, %v2041
    %v2043 = vmul.f32 %v2025, %v2040
    %v2044 = vmul.f32 %v2028, %v2042
    %2047 = vrot.lane.b32.xlu0 %v2025, 64
    %v2048 = vpop.permute.xlu0 %2047
    %2049 = vrot.lane.b32.xlu0 %v2028, 64
    %v2050 = vpop.permute.xlu0 %2049
    %v2053 = vmul.f32 %v2043, %v2048
    %v2054 = vmul.f32 %v2044, %v2050
    %v2055 = vpack.c.bf16 %v2054, %v2053
    %s2056 = scalar_lea.vmem %s10, 64
    %v2057 = vld [vmem:[%s2056] sm:$0xf]
    %v2058 = vld [vmem:[%s2056 + $0x4] sm:$0xf]
    %v2059 = vld [vmem:[%s2056 + $0x8] sm:$0xf]
    %v2060 = vld [vmem:[%s2056 + $0xc] sm:$0xf]
    %v2061 = vld [vmem:[%s2056 + $0x10] sm:$0xf]
    %v2062 = vld [vmem:[%s2056 + $0x14] sm:$0xf]
    %v2063 = vld [vmem:[%s2056 + $0x18] sm:$0xf]
    %v2064 = vld [vmem:[%s2056 + $0x1c] sm:$0xf]
    %v2073 = vunpack.c.l.b16 %v2057
    %v2074 = vunpack.c.l.b16 %v2058
    %v2075 = vunpack.c.l.b16 %v2059
    %v2076 = vunpack.c.l.b16 %v2060
    %v2077 = vunpack.c.l.b16 %v2061
    %v2078 = vunpack.c.l.b16 %v2062
    %v2079 = vunpack.c.l.b16 %v2063
    %v2080 = vunpack.c.l.b16 %v2064
    %v2081 = vpack.c.b16 %v2074, %v2073
    %v2082 = vpack.c.b16 %v2076, %v2075
    %v2083 = vpack.c.b16 %v2078, %v2077
    %v2084 = vpack.c.b16 %v2080, %v2079
    %v2090 = vsel %vm407, %v2055, 0
    %2092 = vmatprep.subr.bf16.mxu0 0
    %2093 = vmatpush1.bf16.msra.mxu0 %v2081
    %2094 = vmatprep.subr.bf16.mxu0 0
    %2095 = vmatpush1.bf16.msra.mxu0 %v2082
    %2096 = vmatprep.subr.bf16.mxu0 0
    %2097 = vmatpush1.bf16.msra.mxu0 %v2083
    %2098 = vmatprep.subr.bf16.mxu0 0
    %2099 = vmatpush1.bf16.msra.mxu0 %v2084
    %2100 = vmatprep.subr.bf16.mxu0 0
    %2101 = vmatpush1.bf16.msra.mxu0 0
    %2102 = vmatprep.subr.bf16.mxu0 0
    %2103 = vmatpush1.bf16.msra.mxu0 0
    %2104 = vmatprep.subr.bf16.mxu0 0
    %2105 = vmatpush1.bf16.msra.mxu0 0
    %2106 = vmatprep.subr.bf16.mxu0 0
    %2107 = vmatpush1.bf16.msra.mxu0 0
    %2108 = vmatprep.subr.bf16.mxu0 0
    %2109 = vmatpush1.bf16.msra.mxu0 0
    %2110 = vmatprep.subr.bf16.mxu0 0
    %2111 = vmatpush1.bf16.msra.mxu0 0
    %2112 = vmatprep.subr.bf16.mxu0 0
    %2113 = vmatpush1.bf16.msra.mxu0 0
    %2114 = vmatprep.subr.bf16.mxu0 0
    %2115 = vmatpush1.bf16.msra.mxu0 0
    %2116 = vmatprep.subr.bf16.mxu0 0
    %2117 = vmatpush1.bf16.msra.mxu0 0
    %2118 = vmatprep.subr.bf16.mxu0 0
    %2119 = vmatpush1.bf16.msra.mxu0 0
    %2120 = vmatprep.subr.bf16.mxu0 0
    %2121 = vmatpush1.bf16.msra.mxu0 0
    %2122 = vmatprep.subr.bf16.mxu0 0
    %2123 = vmatpush1.bf16.msra.mxu0 0
    %2124 = vmatprep.mubr.bf16.mxu0 0
    %2125 = vmatmul.mubr.bf16.gmra.mrb[0].mxu0 %v2090
    %v2126 = vpop.f32.mrb[0].mxu0
    %v2127 = vadd.f32 0.0, %v2126
    %v2128 = vpop.f32.mrb[0].mxu0
    %v2129 = vpop.f32.mrb[0].mxu0
    %v2130 = vadd.f32 0.0, %v2129
    %v2131 = vpop.f32.mrb[0].mxu0
    %2132 = vdwg.mxu0
    %v2133 = vadd.f32 %v1951, %v2127
    %v2134 = vadd.f32 %v1952, %v2130
    %v2135 = vmul.f32 %v2133, %v2133
    %v2136 = vmul.f32 %v2134, %v2134
    %v2137 = vsel %vm171, %v2135, 0.0
    %2138 = vadd.xlane.f32.xlu0 %v2137
    %v2139 = vpop.xlane.xlu0 %2138
    %v2140 = vsel %vm171, %v2136, 0.0
    %2141 = vadd.xlane.f32.xlu0 %v2140
    %v2142 = vpop.xlane.xlu0 %2141
    %v2143 = vmul.f32 %v2139, %v178
    %v2144 = vmul.f32 %v2142, %v178
    %v2145 = vadd.f32 %v2143, 1e-06
    %v2146 = vadd.f32 %v2144, 1e-06
    %v2147 = vrsqrt.pop %v2145
    %v2148 = vrsqrt.pop %v2146
    %v2149 = vmul.f32 %v2133, %v2147
    %v2150 = vmul.f32 %v2134, %v2148
    %v2151 = vpack.c.bf16 %v2150, %v2149
    %s2152 = scalar_lea.vmem %s7, 96
    %v2153 = vld [vmem:[%s2152] sm:$0xff]
    %v2154 = vld [vmem:[%s2152 + $0x8] sm:$0xff]
    %v2155 = vld [vmem:[%s2152 + $0x10] sm:$0xff]
    %v2156 = vld [vmem:[%s2152 + $0x18] sm:$0xff]
    %v2161 = vunpack.c.l.b16 %v2153
    %v2162 = vunpack.c.h.b16 %v2153
    %v2163 = vunpack.c.l.b16 %v2154
    %v2164 = vunpack.c.h.b16 %v2154
    %v2165 = vunpack.c.l.b16 %v2155
    %v2166 = vunpack.c.h.b16 %v2155
    %v2167 = vunpack.c.l.b16 %v2156
    %v2168 = vunpack.c.h.b16 %v2156
    %v2169 = vpack.c.b16 %v2163, %v2161
    %v2170 = vpack.c.b16 %v2164, %v2162
    %v2171 = vpack.c.b16 %v2167, %v2165
    %v2172 = vpack.c.b16 %v2168, %v2166
    %v2178 = vsel %vm171, %v2151, 0
    %2180 = vmatprep.subr.bf16.mxu0 %v2170
    %2181 = vmatpush1.bf16.msra.mxu0 %v2169
    %2182 = vmatprep.subr.bf16.mxu0 %v2172
    %2183 = vmatpush1.bf16.msra.mxu0 %v2171
    %2184 = vmatprep.subr.bf16.mxu0 0
    %2185 = vmatpush1.bf16.msra.mxu0 0
    %2186 = vmatprep.subr.bf16.mxu0 0
    %2187 = vmatpush1.bf16.msra.mxu0 0
    %2188 = vmatprep.subr.bf16.mxu0 0
    %2189 = vmatpush1.bf16.msra.mxu0 0
    %2190 = vmatprep.subr.bf16.mxu0 0
    %2191 = vmatpush1.bf16.msra.mxu0 0
    %2192 = vmatprep.subr.bf16.mxu0 0
    %2193 = vmatpush1.bf16.msra.mxu0 0
    %2194 = vmatprep.subr.bf16.mxu0 0
    %2195 = vmatpush1.bf16.msra.mxu0 0
    %2196 = vmatprep.subr.bf16.mxu0 0
    %2197 = vmatpush1.bf16.msra.mxu0 0
    %2198 = vmatprep.subr.bf16.mxu0 0
    %2199 = vmatpush1.bf16.msra.mxu0 0
    %2200 = vmatprep.subr.bf16.mxu0 0
    %2201 = vmatpush1.bf16.msra.mxu0 0
    %2202 = vmatprep.subr.bf16.mxu0 0
    %2203 = vmatpush1.bf16.msra.mxu0 0
    %2204 = vmatprep.subr.bf16.mxu0 0
    %2205 = vmatpush1.bf16.msra.mxu0 0
    %2206 = vmatprep.subr.bf16.mxu0 0
    %2207 = vmatpush1.bf16.msra.mxu0 0
    %2208 = vmatprep.subr.bf16.mxu0 0
    %2209 = vmatpush1.bf16.msra.mxu0 0
    %2210 = vmatprep.subr.bf16.mxu0 0
    %2211 = vmatpush1.bf16.msra.mxu0 0
    %2212 = vmatprep.mubr.bf16.mxu0 0
    %2213 = vmatmul.mubr.bf16.gmra.mrb[0].mxu0 %v2178
    %v2214 = vpop.f32.mrb[0].mxu0
    %v2215 = vadd.f32 0.0, %v2214
    %v2216 = vpop.f32.mrb[0].mxu0
    %v2217 = vadd.f32 0.0, %v2216
    %v2218 = vpop.f32.mrb[0].mxu0
    %v2219 = vadd.f32 0.0, %v2218
    %v2220 = vpop.f32.mrb[0].mxu0
    %v2221 = vadd.f32 0.0, %v2220
    %2222 = vdwg.mxu0
    %v2223 = vmul.f32 %v2215, %v147
    %v2224 = vmul.f32 %v2219, %v148
    %v2225 = vmul.f32 %v2215, %v263
    %v2226 = vmul.f32 %v2219, %v265
    %2229 = vrot.lane.b32.xlu0 %v2225, 64
    %v2230 = vpop.permute.xlu0 %2229
    %2231 = vrot.lane.b32.xlu0 %v2226, 64
    %v2232 = vpop.permute.xlu0 %2231
    %v2235 = vadd.f32 %v2223, %v2230
    %v2236 = vadd.f32 %v2224, %v2232
    %2239 = vrot.lane.b32.xlu0 %v2235, 96
    %v2240 = vpop.permute.xlu0 %2239
    %2241 = vrot.lane.b32.xlu0 %v2236, 96
    %v2242 = vpop.permute.xlu0 %2241
    %v2245 = vmul.f32 %v151, %v2240
    %v2246 = vmul.f32 %v152, %v2242
    %v2247 = vmul.f32 %v153, %v2240
    %v2248 = vmul.f32 %v154, %v2242
    %v2249 = vmul.f32 %v155, %v2240
    %v2250 = vmul.f32 %v156, %v2242
    %v2251 = vmul.f32 %v157, %v2240
    %v2252 = vmul.f32 %v158, %v2242
    %v2253 = vmul.f32 %v151, %v2217
    %v2254 = vmul.f32 %v152, %v2221
    %v2255 = vmul.f32 %v153, %v2217
    %v2256 = vmul.f32 %v154, %v2221
    %v2257 = vmul.f32 %v155, %v2217
    %v2258 = vmul.f32 %v156, %v2221
    %v2259 = vmul.f32 %v157, %v2217
    %v2260 = vmul.f32 %v158, %v2221
    %v2261 = vsel %vm171, %v2235, 0
    %v2263 = vsel %vm171, %v2236, 0
    %v2266 = vsel %vm171, %v2245, 0
    %v2269 = vsel %vm171, %v2246, 0
    %v2272 = vsel %vm171, %v2247, 0
    %v2275 = vsel %vm171, %v2248, 0
    %v2278 = vsel %vm171, %v2249, 0
    %v2281 = vsel %vm171, %v2250, 0
    %v2284 = vsel %vm171, %v2251, 0
    %v2287 = vsel %vm171, %v2252, 0
    %2289 = vmatprep.subr.mxu0 0.0
    %2290 = vmatpush1.xpose.msra.mxu0 %v2266
    %2291 = vmatprep.subr.mxu0 0.0
    %2292 = vmatpush1.xpose.msra.mxu0 %v2269
    %2293 = vmatprep.subr.mxu0 0.0
    %2294 = vmatpush1.xpose.msra.mxu0 %v2272
    %2295 = vmatprep.subr.mxu0 0.0
    %2296 = vmatpush1.xpose.msra.mxu0 %v2275
    %2297 = vmatprep.subr.mxu0 0.0
    %2298 = vmatpush1.xpose.msra.mxu0 %v2278
    %2299 = vmatprep.subr.mxu0 0.0
    %2300 = vmatpush1.xpose.msra.mxu0 %v2281
    %2301 = vmatprep.subr.mxu0 0.0
    %2302 = vmatpush1.xpose.msra.mxu0 %v2284
    %2303 = vmatprep.subr.mxu0 0.0
    %2304 = vmatpush1.xpose.msra.mxu0 %v2287
    %2305 = vmatprep.subr.mxu0 0.0
    %2306 = vmatpush1.xpose.msra.mxu0 0.0
    %2307 = vmatprep.subr.mxu0 0.0
    %2308 = vmatpush1.xpose.msra.mxu0 0.0
    %2309 = vmatprep.subr.mxu0 0.0
    %2310 = vmatpush1.xpose.msra.mxu0 0.0
    %2311 = vmatprep.subr.mxu0 0.0
    %2312 = vmatpush1.xpose.msra.mxu0 0.0
    %2313 = vmatprep.subr.mxu0 0.0
    %2314 = vmatpush1.xpose.msra.mxu0 0.0
    %2315 = vmatprep.subr.mxu0 0.0
    %2316 = vmatpush1.xpose.msra.mxu0 0.0
    %2317 = vmatprep.subr.mxu0 0.0
    %2318 = vmatpush1.xpose.msra.mxu0 0.0
    %2319 = vmatprep.subr.mxu0 0.0
    %2320 = vmatpush1.xpose.msra.mxu0 0.0
    %2321 = vmatprep.subr.mxu0 0.0
    %2322 = vmatpush1.xpose.msra.mxu0 0.0
    %2323 = vmatprep.subr.mxu0 0.0
    %2324 = vmatpush1.xpose.msra.mxu0 0.0
    %2325 = vmatprep.subr.mxu0 0.0
    %2326 = vmatpush1.xpose.msra.mxu0 0.0
    %2327 = vmatprep.subr.mxu0 0.0
    %2328 = vmatpush1.xpose.msra.mxu0 0.0
    %2329 = vmatprep.subr.mxu0 0.0
    %2330 = vmatpush1.xpose.msra.mxu0 0.0
    %2331 = vmatprep.subr.mxu0 0.0
    %2332 = vmatpush1.xpose.msra.mxu0 0.0
    %2333 = vmatprep.subr.mxu0 0.0
    %2334 = vmatpush1.xpose.msra.mxu0 0.0
    %2335 = vmatprep.subr.mxu0 0.0
    %2336 = vmatpush1.xpose.msra.mxu0 0.0
    %2337 = vmatprep.subr.mxu0 0.0
    %2338 = vmatpush1.xpose.msra.mxu0 0.0
    %2339 = vmatprep.subr.mxu0 0.0
    %2340 = vmatpush1.xpose.msra.mxu0 0.0
    %2341 = vmatprep.subr.mxu0 0.0
    %2342 = vmatpush1.xpose.msra.mxu0 0.0
    %2343 = vmatprep.subr.mxu0 0.0
    %2344 = vmatpush1.xpose.msra.mxu0 0.0
    %2345 = vmatprep.subr.mxu0 0.0
    %2346 = vmatpush1.xpose.msra.mxu0 0.0
    %2347 = vmatprep.subr.mxu0 0.0
    %2348 = vmatpush1.xpose.msra.mxu0 0.0
    %2349 = vmatprep.subr.mxu0 0.0
    %2350 = vmatpush1.xpose.msra.mxu0 0.0
    %2351 = vmatprep.subr.mxu0 0.0
    %2352 = vmatpush1.xpose.msra.mxu0 0.0
    %2353 = vmatprep.mubr.f32.mxu0 0.0
    %2354 = vmatmul.mubr.f32.gmra.mrb[0].mxu0 %v2261
    %v2355 = vpop.f32.mrb[0].mxu0
    %v2356 = vadd.f32 %v159, %v2355
    %v2357 = vpop.f32.mrb[0].mxu0
    %2358 = vmatprep.mubr.f32.mxu0 0.0
    %2359 = vmatmul.mubr.f32.gmra.mrb[0].mxu0 %v2263
    %v2360 = vpop.f32.mrb[0].mxu0
    %v2361 = vadd.f32 %v160, %v2360
    %v2362 = vpop.f32.mrb[0].mxu0
    %2363 = vdwg.mxu0
    %v2364 = vsel %vm407, %v2356, -inf
    %2365 = vmax.xlane.f32.xlu0 %v2364
    %v2366 = vpop.xlane.xlu0 %2365
    %v2367 = vsel %vm407, %v2361, -inf
    %2368 = vmax.xlane.f32.xlu0 %v2367
    %v2369 = vpop.xlane.xlu0 %2368
    %v2370 = vsub.f32 %v2356, %v2366
    %v2371 = vsub.f32 %v2361, %v2369
    %v2372 = vmul.f32 %v2370, 1.442695
    %v2373 = vpow.pop %v2372
    %v2374 = vmul.f32 %v2371, 1.442695
    %v2375 = vpow.pop %v2374
    %v2377 = vsel %vm407, %v2373, 0
    %v2380 = vsel %vm407, %v2375, 0
    %2382 = vmatprep.subr.mxu0 0.0
    %2383 = vmatpush1.msra.mxu0 %v161
    %2384 = vmatprep.subr.mxu0 0.0
    %2385 = vmatpush1.msra.mxu0 %v162
    %2386 = vmatprep.subr.mxu0 0.0
    %2387 = vmatpush1.msra.mxu0 %v163
    %2388 = vmatprep.subr.mxu0 0.0
    %2389 = vmatpush1.msra.mxu0 %v164
    %2390 = vmatprep.subr.mxu0 0.0
    %2391 = vmatpush1.msra.mxu0 %v165
    %2392 = vmatprep.subr.mxu0 0.0
    %2393 = vmatpush1.msra.mxu0 %v166
    %2394 = vmatprep.subr.mxu0 0.0
    %2395 = vmatpush1.msra.mxu0 %v167
    %2396 = vmatprep.subr.mxu0 0.0
    %2397 = vmatpush1.msra.mxu0 %v168
    %2398 = vmatprep.subr.mxu0 0.0
    %2399 = vmatpush1.msra.mxu0 0.0
    %2400 = vmatprep.subr.mxu0 0.0
    %2401 = vmatpush1.msra.mxu0 0.0
    %2402 = vmatprep.subr.mxu0 0.0
    %2403 = vmatpush1.msra.mxu0 0.0
    %2404 = vmatprep.subr.mxu0 0.0
    %2405 = vmatpush1.msra.mxu0 0.0
    %2406 = vmatprep.subr.mxu0 0.0
    %2407 = vmatpush1.msra.mxu0 0.0
    %2408 = vmatprep.subr.mxu0 0.0
    %2409 = vmatpush1.msra.mxu0 0.0
    %2410 = vmatprep.subr.mxu0 0.0
    %2411 = vmatpush1.msra.mxu0 0.0
    %2412 = vmatprep.subr.mxu0 0.0
    %2413 = vmatpush1.msra.mxu0 0.0
    %2414 = vmatprep.subr.mxu0 0.0
    %2415 = vmatpush1.msra.mxu0 0.0
    %2416 = vmatprep.subr.mxu0 0.0
    %2417 = vmatpush1.msra.mxu0 0.0
    %2418 = vmatprep.subr.mxu0 0.0
    %2419 = vmatpush1.msra.mxu0 0.0
    %2420 = vmatprep.subr.mxu0 0.0
    %2421 = vmatpush1.msra.mxu0 0.0
    %2422 = vmatprep.subr.mxu0 0.0
    %2423 = vmatpush1.msra.mxu0 0.0
    %2424 = vmatprep.subr.mxu0 0.0
    %2425 = vmatpush1.msra.mxu0 0.0
    %2426 = vmatprep.subr.mxu0 0.0
    %2427 = vmatpush1.msra.mxu0 0.0
    %2428 = vmatprep.subr.mxu0 0.0
    %2429 = vmatpush1.msra.mxu0 0.0
    %2430 = vmatprep.subr.mxu0 0.0
    %2431 = vmatpush1.msra.mxu0 0.0
    %2432 = vmatprep.subr.mxu0 0.0
    %2433 = vmatpush1.msra.mxu0 0.0
    %2434 = vmatprep.subr.mxu0 0.0
    %2435 = vmatpush1.msra.mxu0 0.0
    %2436 = vmatprep.subr.mxu0 0.0
    %2437 = vmatpush1.msra.mxu0 0.0
    %2438 = vmatprep.subr.mxu0 0.0
    %2439 = vmatpush1.msra.mxu0 0.0
    %2440 = vmatprep.subr.mxu0 0.0
    %2441 = vmatpush1.msra.mxu0 0.0
    %2442 = vmatprep.subr.mxu0 0.0
    %2443 = vmatpush1.msra.mxu0 0.0
    %2444 = vmatprep.subr.mxu0 0.0
    %2445 = vmatpush1.msra.mxu0 0.0
    %2446 = vmatprep.mubr.f32.mxu0 0.0
    %2447 = vmatmul.mubr.f32.gmra.mrb[0].mxu0 %v2377
    %v2448 = vpop.f32.mrb[0].mxu0
    %v2449 = vadd.f32 0.0, %v2448
    %v2450 = vpop.f32.mrb[0].mxu0
    %2451 = vmatprep.mubr.f32.mxu0 0.0
    %2452 = vmatmul.mubr.f32.gmra.mrb[0].mxu0 %v2380
    %v2453 = vpop.f32.mrb[0].mxu0
    %v2454 = vadd.f32 0.0, %v2453
    %v2455 = vpop.f32.mrb[0].mxu0
    %2456 = vdwg.mxu0
    %v2457 = vrcp.pop %v2449
    %v2458 = vrcp.pop %v2454
    %v2459 = vmul.f32 %v2373, %v2457
    %v2460 = vmul.f32 %v2375, %v2458
    %v2462 = vsel %vm407, %v2459, 0
    %v2465 = vsel %vm407, %v2460, 0
    %2467 = vmatprep.subr.mxu0 0.0
    %2468 = vmatpush1.msra.mxu0 %v2253
    %2469 = vmatprep.subr.mxu0 0.0
    %2470 = vmatpush1.msra.mxu0 %v2254
    %2471 = vmatprep.subr.mxu0 0.0
    %2472 = vmatpush1.msra.mxu0 %v2255
    %2473 = vmatprep.subr.mxu0 0.0
    %2474 = vmatpush1.msra.mxu0 %v2256
    %2475 = vmatprep.subr.mxu0 0.0
    %2476 = vmatpush1.msra.mxu0 %v2257
    %2477 = vmatprep.subr.mxu0 0.0
    %2478 = vmatpush1.msra.mxu0 %v2258
    %2479 = vmatprep.subr.mxu0 0.0
    %2480 = vmatpush1.msra.mxu0 %v2259
    %2481 = vmatprep.subr.mxu0 0.0
    %2482 = vmatpush1.msra.mxu0 %v2260
    %2483 = vmatprep.subr.mxu0 0.0
    %2484 = vmatpush1.msra.mxu0 0.0
    %2485 = vmatprep.subr.mxu0 0.0
    %2486 = vmatpush1.msra.mxu0 0.0
    %2487 = vmatprep.subr.mxu0 0.0
    %2488 = vmatpush1.msra.mxu0 0.0
    %2489 = vmatprep.subr.mxu0 0.0
    %2490 = vmatpush1.msra.mxu0 0.0
    %2491 = vmatprep.subr.mxu0 0.0
    %2492 = vmatpush1.msra.mxu0 0.0
    %2493 = vmatprep.subr.mxu0 0.0
    %2494 = vmatpush1.msra.mxu0 0.0
    %2495 = vmatprep.subr.mxu0 0.0
    %2496 = vmatpush1.msra.mxu0 0.0
    %2497 = vmatprep.subr.mxu0 0.0
    %2498 = vmatpush1.msra.mxu0 0.0
    %2499 = vmatprep.subr.mxu0 0.0
    %2500 = vmatpush1.msra.mxu0 0.0
    %2501 = vmatprep.subr.mxu0 0.0
    %2502 = vmatpush1.msra.mxu0 0.0
    %2503 = vmatprep.subr.mxu0 0.0
    %2504 = vmatpush1.msra.mxu0 0.0
    %2505 = vmatprep.subr.mxu0 0.0
    %2506 = vmatpush1.msra.mxu0 0.0
    %2507 = vmatprep.subr.mxu0 0.0
    %2508 = vmatpush1.msra.mxu0 0.0
    %2509 = vmatprep.subr.mxu0 0.0
    %2510 = vmatpush1.msra.mxu0 0.0
    %2511 = vmatprep.subr.mxu0 0.0
    %2512 = vmatpush1.msra.mxu0 0.0
    %2513 = vmatprep.subr.mxu0 0.0
    %2514 = vmatpush1.msra.mxu0 0.0
    %2515 = vmatprep.subr.mxu0 0.0
    %2516 = vmatpush1.msra.mxu0 0.0
    %2517 = vmatprep.subr.mxu0 0.0
    %2518 = vmatpush1.msra.mxu0 0.0
    %2519 = vmatprep.subr.mxu0 0.0
    %2520 = vmatpush1.msra.mxu0 0.0
    %2521 = vmatprep.subr.mxu0 0.0
    %2522 = vmatpush1.msra.mxu0 0.0
    %2523 = vmatprep.subr.mxu0 0.0
    %2524 = vmatpush1.msra.mxu0 0.0
    %2525 = vmatprep.subr.mxu0 0.0
    %2526 = vmatpush1.msra.mxu0 0.0
    %2527 = vmatprep.subr.mxu0 0.0
    %2528 = vmatpush1.msra.mxu0 0.0
    %2529 = vmatprep.subr.mxu0 0.0
    %2530 = vmatpush1.msra.mxu0 0.0
    %2531 = vmatprep.mubr.f32.mxu0 0.0
    %2532 = vmatmul.mubr.f32.gmra.mrb[0].mxu0 %v2462
    %v2533 = vpop.f32.mrb[0].mxu0
    %v2534 = vadd.f32 0.0, %v2533
    %v2535 = vpop.f32.mrb[0].mxu0
    %2536 = vmatprep.mubr.f32.mxu0 0.0
    %2537 = vmatmul.mubr.f32.gmra.mrb[0].mxu0 %v2465
    %v2538 = vpop.f32.mrb[0].mxu0
    %v2539 = vadd.f32 0.0, %v2538
    %v2540 = vpop.f32.mrb[0].mxu0
    %2541 = vdwg.mxu0
    %v2542 = vpack.c.bf16 %v2539, %v2534
    %s2543 = scalar_lea.vmem %s8, 48
    %v2544 = vld [vmem:[%s2543] sm:$0xf]
    %v2545 = vld [vmem:[%s2543 + $0x4] sm:$0xf]
    %v2546 = vld [vmem:[%s2543 + $0x8] sm:$0xf]
    %v2547 = vld [vmem:[%s2543 + $0xc] sm:$0xf]
    %v2552 = vunpack.c.l.b16 %v2544
    %v2553 = vunpack.c.l.b16 %v2545
    %v2554 = vunpack.c.l.b16 %v2546
    %v2555 = vunpack.c.l.b16 %v2547
    %v2556 = vpack.c.b16 %v2553, %v2552
    %v2557 = vpack.c.b16 %v2555, %v2554
    %v2561 = vsel %vm171, %v2542, 0
    %2563 = vmatprep.subr.bf16.mxu0 0
    %2564 = vmatpush1.bf16.msra.mxu0 %v2556
    %2565 = vmatprep.subr.bf16.mxu0 0
    %2566 = vmatpush1.bf16.msra.mxu0 %v2557
    %2567 = vmatprep.subr.bf16.mxu0 0
    %2568 = vmatpush1.bf16.msra.mxu0 0
    %2569 = vmatprep.subr.bf16.mxu0 0
    %2570 = vmatpush1.bf16.msra.mxu0 0
    %2571 = vmatprep.subr.bf16.mxu0 0
    %2572 = vmatpush1.bf16.msra.mxu0 0
    %2573 = vmatprep.subr.bf16.mxu0 0
    %2574 = vmatpush1.bf16.msra.mxu0 0
    %2575 = vmatprep.subr.bf16.mxu0 0
    %2576 = vmatpush1.bf16.msra.mxu0 0
    %2577 = vmatprep.subr.bf16.mxu0 0
    %2578 = vmatpush1.bf16.msra.mxu0 0
    %2579 = vmatprep.subr.bf16.mxu0 0
    %2580 = vmatpush1.bf16.msra.mxu0 0
    %2581 = vmatprep.subr.bf16.mxu0 0
    %2582 = vmatpush1.bf16.msra.mxu0 0
    %2583 = vmatprep.subr.bf16.mxu0 0
    %2584 = vmatpush1.bf16.msra.mxu0 0
    %2585 = vmatprep.subr.bf16.mxu0 0
    %2586 = vmatpush1.bf16.msra.mxu0 0
    %2587 = vmatprep.subr.bf16.mxu0 0
    %2588 = vmatpush1.bf16.msra.mxu0 0
    %2589 = vmatprep.subr.bf16.mxu0 0
    %2590 = vmatpush1.bf16.msra.mxu0 0
    %2591 = vmatprep.subr.bf16.mxu0 0
    %2592 = vmatpush1.bf16.msra.mxu0 0
    %2593 = vmatprep.subr.bf16.mxu0 0
    %2594 = vmatpush1.bf16.msra.mxu0 0
    %2595 = vmatprep.mubr.bf16.mxu0 0
    %2596 = vmatmul.mubr.bf16.gmra.mrb[0].mxu0 %v2561
    %v2597 = vpop.f32.mrb[0].mxu0
    %v2598 = vadd.f32 0.0, %v2597
    %v2599 = vpop.f32.mrb[0].mxu0
    %v2600 = vpop.f32.mrb[0].mxu0
    %v2601 = vadd.f32 0.0, %v2600
    %v2602 = vpop.f32.mrb[0].mxu0
    %2603 = vdwg.mxu0
    %v2604 = vadd.f32 %v2133, %v2598
    %v2605 = vadd.f32 %v2134, %v2601
    %v2606 = vmul.f32 %v2604, %v2604
    %v2607 = vmul.f32 %v2605, %v2605
    %v2608 = vsel %vm171, %v2606, 0.0
    %2609 = vadd.xlane.f32.xlu0 %v2608
    %v2610 = vpop.xlane.xlu0 %2609
    %v2611 = vsel %vm171, %v2607, 0.0
    %2612 = vadd.xlane.f32.xlu0 %v2611
    %v2613 = vpop.xlane.xlu0 %2612
    %v2614 = vmul.f32 %v2610, %v178
    %v2615 = vmul.f32 %v2613, %v178
    %v2616 = vadd.f32 %v2614, 1e-06
    %v2617 = vadd.f32 %v2615, 1e-06
    %v2618 = vrsqrt.pop %v2616
    %v2619 = vrsqrt.pop %v2617
    %v2620 = vmul.f32 %v2604, %v2618
    %v2621 = vmul.f32 %v2605, %v2619
    %v2622 = vpack.c.bf16 %v2621, %v2620
    %s2623 = scalar_lea.vmem %s9, 48
    %v2624 = vld [vmem:[%s2623] sm:$0xf]
    %v2625 = vld [vmem:[%s2623 + $0x4] sm:$0xf]
    %v2626 = vld [vmem:[%s2623 + $0x8] sm:$0xf]
    %v2627 = vld [vmem:[%s2623 + $0xc] sm:$0xf]
    %v2632 = vunpack.c.l.b16 %v2624
    %v2633 = vunpack.c.l.b16 %v2625
    %v2634 = vunpack.c.l.b16 %v2626
    %v2635 = vunpack.c.l.b16 %v2627
    %v2636 = vpack.c.b16 %v2633, %v2632
    %v2637 = vpack.c.b16 %v2635, %v2634
    %v2641 = vsel %vm171, %v2622, 0
    %2643 = vmatprep.subr.bf16.mxu0 0
    %2644 = vmatpush1.bf16.msra.mxu0 %v2636
    %2645 = vmatprep.subr.bf16.mxu0 0
    %2646 = vmatpush1.bf16.msra.mxu0 %v2637
    %2647 = vmatprep.subr.bf16.mxu0 0
    %2648 = vmatpush1.bf16.msra.mxu0 0
    %2649 = vmatprep.subr.bf16.mxu0 0
    %2650 = vmatpush1.bf16.msra.mxu0 0
    %2651 = vmatprep.subr.bf16.mxu0 0
    %2652 = vmatpush1.bf16.msra.mxu0 0
    %2653 = vmatprep.subr.bf16.mxu0 0
    %2654 = vmatpush1.bf16.msra.mxu0 0
    %2655 = vmatprep.subr.bf16.mxu0 0
    %2656 = vmatpush1.bf16.msra.mxu0 0
    %2657 = vmatprep.subr.bf16.mxu0 0
    %2658 = vmatpush1.bf16.msra.mxu0 0
    %2659 = vmatprep.subr.bf16.mxu0 0
    %2660 = vmatpush1.bf16.msra.mxu0 0
    %2661 = vmatprep.subr.bf16.mxu0 0
    %2662 = vmatpush1.bf16.msra.mxu0 0
    %2663 = vmatprep.subr.bf16.mxu0 0
    %2664 = vmatpush1.bf16.msra.mxu0 0
    %2665 = vmatprep.subr.bf16.mxu0 0
    %2666 = vmatpush1.bf16.msra.mxu0 0
    %2667 = vmatprep.subr.bf16.mxu0 0
    %2668 = vmatpush1.bf16.msra.mxu0 0
    %2669 = vmatprep.subr.bf16.mxu0 0
    %2670 = vmatpush1.bf16.msra.mxu0 0
    %2671 = vmatprep.subr.bf16.mxu0 0
    %2672 = vmatpush1.bf16.msra.mxu0 0
    %2673 = vmatprep.subr.bf16.mxu0 0
    %2674 = vmatpush1.bf16.msra.mxu0 0
    %2675 = vmatprep.mubr.bf16.mxu0 0
    %2676 = vmatmul.mubr.bf16.gmra.mrb[0].mxu0 %v2641
    %v2677 = vpop.f32.mrb[0].mxu0
    %v2678 = vadd.f32 0.0, %v2677
    %v2679 = vpop.f32.mrb[0].mxu0
    %v2680 = vpop.f32.mrb[0].mxu0
    %v2681 = vadd.f32 0.0, %v2680
    %v2682 = vpop.f32.mrb[0].mxu0
    %2683 = vdwg.mxu0
    %v2684 = vxor.u32 %v2678, 2147483648
    %v2685 = vxor.u32 %v2681, 2147483648
    %v2686 = vmul.f32 %v2684, 1.442695
    %v2687 = vpow.pop %v2686
    %v2688 = vmul.f32 %v2685, 1.442695
    %v2689 = vpow.pop %v2688
    %v2690 = vadd.f32 %v2687, 1.0
    %v2691 = vadd.f32 %v2689, 1.0
    %v2692 = vrcp.pop %v2690
    %v2693 = vmul.f32 1.0, %v2692
    %v2694 = vrcp.pop %v2691
    %v2695 = vmul.f32 1.0, %v2694
    %v2696 = vmul.f32 %v2678, %v2693
    %v2697 = vmul.f32 %v2681, %v2695
    %2700 = vrot.lane.b32.xlu0 %v2678, 64
    %v2701 = vpop.permute.xlu0 %2700
    %2702 = vrot.lane.b32.xlu0 %v2681, 64
    %v2703 = vpop.permute.xlu0 %2702
    %v2706 = vmul.f32 %v2696, %v2701
    %v2707 = vmul.f32 %v2697, %v2703
    %v2708 = vpack.c.bf16 %v2707, %v2706
    %s2709 = scalar_lea.vmem %s10, 96
    %v2710 = vld [vmem:[%s2709] sm:$0xf]
    %v2711 = vld [vmem:[%s2709 + $0x4] sm:$0xf]
    %v2712 = vld [vmem:[%s2709 + $0x8] sm:$0xf]
    %v2713 = vld [vmem:[%s2709 + $0xc] sm:$0xf]
    %v2714 = vld [vmem:[%s2709 + $0x10] sm:$0xf]
    %v2715 = vld [vmem:[%s2709 + $0x14] sm:$0xf]
    %v2716 = vld [vmem:[%s2709 + $0x18] sm:$0xf]
    %v2717 = vld [vmem:[%s2709 + $0x1c] sm:$0xf]
    %v2726 = vunpack.c.l.b16 %v2710
    %v2727 = vunpack.c.l.b16 %v2711
    %v2728 = vunpack.c.l.b16 %v2712
    %v2729 = vunpack.c.l.b16 %v2713
    %v2730 = vunpack.c.l.b16 %v2714
    %v2731 = vunpack.c.l.b16 %v2715
    %v2732 = vunpack.c.l.b16 %v2716
    %v2733 = vunpack.c.l.b16 %v2717
    %v2734 = vpack.c.b16 %v2727, %v2726
    %v2735 = vpack.c.b16 %v2729, %v2728
    %v2736 = vpack.c.b16 %v2731, %v2730
    %v2737 = vpack.c.b16 %v2733, %v2732
    %v2743 = vsel %vm407, %v2708, 0
    %2745 = vmatprep.subr.bf16.mxu0 0
    %2746 = vmatpush1.bf16.msra.mxu0 %v2734
    %2747 = vmatprep.subr.bf16.mxu0 0
    %2748 = vmatpush1.bf16.msra.mxu0 %v2735
    %2749 = vmatprep.subr.bf16.mxu0 0
    %2750 = vmatpush1.bf16.msra.mxu0 %v2736
    %2751 = vmatprep.subr.bf16.mxu0 0
    %2752 = vmatpush1.bf16.msra.mxu0 %v2737
    %2753 = vmatprep.subr.bf16.mxu0 0
    %2754 = vmatpush1.bf16.msra.mxu0 0
    %2755 = vmatprep.subr.bf16.mxu0 0
    %2756 = vmatpush1.bf16.msra.mxu0 0
    %2757 = vmatprep.subr.bf16.mxu0 0
    %2758 = vmatpush1.bf16.msra.mxu0 0
    %2759 = vmatprep.subr.bf16.mxu0 0
    %2760 = vmatpush1.bf16.msra.mxu0 0
    %2761 = vmatprep.subr.bf16.mxu0 0
    %2762 = vmatpush1.bf16.msra.mxu0 0
    %2763 = vmatprep.subr.bf16.mxu0 0
    %2764 = vmatpush1.bf16.msra.mxu0 0
    %2765 = vmatprep.subr.bf16.mxu0 0
    %2766 = vmatpush1.bf16.msra.mxu0 0
    %2767 = vmatprep.subr.bf16.mxu0 0
    %2768 = vmatpush1.bf16.msra.mxu0 0
    %2769 = vmatprep.subr.bf16.mxu0 0
    %2770 = vmatpush1.bf16.msra.mxu0 0
    %2771 = vmatprep.subr.bf16.mxu0 0
    %2772 = vmatpush1.bf16.msra.mxu0 0
    %2773 = vmatprep.subr.bf16.mxu0 0
    %2774 = vmatpush1.bf16.msra.mxu0 0
    %2775 = vmatprep.subr.bf16.mxu0 0
    %2776 = vmatpush1.bf16.msra.mxu0 0
    %2777 = vmatprep.mubr.bf16.mxu0 0
    %2778 = vmatmul.mubr.bf16.gmra.mrb[0].mxu0 %v2743
    %v2779 = vpop.f32.mrb[0].mxu0
    %v2780 = vadd.f32 0.0, %v2779
    %v2781 = vpop.f32.mrb[0].mxu0
    %v2782 = vpop.f32.mrb[0].mxu0
    %v2783 = vadd.f32 0.0, %v2782
    %v2784 = vpop.f32.mrb[0].mxu0
    %2785 = vdwg.mxu0
    %v2786 = vadd.f32 %v2604, %v2780
    %v2787 = vadd.f32 %v2605, %v2783
    %v2788 = vmul.f32 %v2786, %v2786
    %v2789 = vmul.f32 %v2787, %v2787
    %v2790 = vsel %vm171, %v2788, 0.0
    %2791 = vadd.xlane.f32.xlu0 %v2790
    %v2792 = vpop.xlane.xlu0 %2791
    %v2793 = vsel %vm171, %v2789, 0.0
    %2794 = vadd.xlane.f32.xlu0 %v2793
    %v2795 = vpop.xlane.xlu0 %2794
    %v2796 = vmul.f32 %v2792, %v178
    %v2797 = vmul.f32 %v2795, %v178
    %v2798 = vadd.f32 %v2796, 1e-06
    %v2799 = vadd.f32 %v2797, 1e-06
    %v2800 = vrsqrt.pop %v2798
    %v2801 = vrsqrt.pop %v2799
    %v2802 = vmul.f32 %v2786, %v2800
    %v2803 = vmul.f32 %v2787, %v2801
    %v2804 = vpack.c.bf16 %v2803, %v2802
    %s2805 = scalar_lea.vmem %s7, 128
    %v2806 = vld [vmem:[%s2805] sm:$0xff]
    %v2807 = vld [vmem:[%s2805 + $0x8] sm:$0xff]
    %v2808 = vld [vmem:[%s2805 + $0x10] sm:$0xff]
    %v2809 = vld [vmem:[%s2805 + $0x18] sm:$0xff]
    %v2814 = vunpack.c.l.b16 %v2806
    %v2815 = vunpack.c.h.b16 %v2806
    %v2816 = vunpack.c.l.b16 %v2807
    %v2817 = vunpack.c.h.b16 %v2807
    %v2818 = vunpack.c.l.b16 %v2808
    %v2819 = vunpack.c.h.b16 %v2808
    %v2820 = vunpack.c.l.b16 %v2809
    %v2821 = vunpack.c.h.b16 %v2809
    %v2822 = vpack.c.b16 %v2816, %v2814
    %v2823 = vpack.c.b16 %v2817, %v2815
    %v2824 = vpack.c.b16 %v2820, %v2818
    %v2825 = vpack.c.b16 %v2821, %v2819
    %v2831 = vsel %vm171, %v2804, 0
    %2833 = vmatprep.subr.bf16.mxu0 %v2823
    %2834 = vmatpush1.bf16.msra.mxu0 %v2822
    %2835 = vmatprep.subr.bf16.mxu0 %v2825
    %2836 = vmatpush1.bf16.msra.mxu0 %v2824
    %2837 = vmatprep.subr.bf16.mxu0 0
    %2838 = vmatpush1.bf16.msra.mxu0 0
    %2839 = vmatprep.subr.bf16.mxu0 0
    %2840 = vmatpush1.bf16.msra.mxu0 0
    %2841 = vmatprep.subr.bf16.mxu0 0
    %2842 = vmatpush1.bf16.msra.mxu0 0
    %2843 = vmatprep.subr.bf16.mxu0 0
    %2844 = vmatpush1.bf16.msra.mxu0 0
    %2845 = vmatprep.subr.bf16.mxu0 0
    %2846 = vmatpush1.bf16.msra.mxu0 0
    %2847 = vmatprep.subr.bf16.mxu0 0
    %2848 = vmatpush1.bf16.msra.mxu0 0
    %2849 = vmatprep.subr.bf16.mxu0 0
    %2850 = vmatpush1.bf16.msra.mxu0 0
    %2851 = vmatprep.subr.bf16.mxu0 0
    %2852 = vmatpush1.bf16.msra.mxu0 0
    %2853 = vmatprep.subr.bf16.mxu0 0
    %2854 = vmatpush1.bf16.msra.mxu0 0
    %2855 = vmatprep.subr.bf16.mxu0 0
    %2856 = vmatpush1.bf16.msra.mxu0 0
    %2857 = vmatprep.subr.bf16.mxu0 0
    %2858 = vmatpush1.bf16.msra.mxu0 0
    %2859 = vmatprep.subr.bf16.mxu0 0
    %2860 = vmatpush1.bf16.msra.mxu0 0
    %2861 = vmatprep.subr.bf16.mxu0 0
    %2862 = vmatpush1.bf16.msra.mxu0 0
    %2863 = vmatprep.subr.bf16.mxu0 0
    %2864 = vmatpush1.bf16.msra.mxu0 0
    %2865 = vmatprep.mubr.bf16.mxu0 0
    %2866 = vmatmul.mubr.bf16.gmra.mrb[0].mxu0 %v2831
    %v2867 = vpop.f32.mrb[0].mxu0
    %v2868 = vadd.f32 0.0, %v2867
    %v2869 = vpop.f32.mrb[0].mxu0
    %v2870 = vadd.f32 0.0, %v2869
    %v2871 = vpop.f32.mrb[0].mxu0
    %v2872 = vadd.f32 0.0, %v2871
    %v2873 = vpop.f32.mrb[0].mxu0
    %v2874 = vadd.f32 0.0, %v2873
    %2875 = vdwg.mxu0
    %v2876 = vmul.f32 %v2868, %v147
    %v2877 = vmul.f32 %v2872, %v148
    %v2878 = vmul.f32 %v2868, %v263
    %v2879 = vmul.f32 %v2872, %v265
    %2882 = vrot.lane.b32.xlu0 %v2878, 64
    %v2883 = vpop.permute.xlu0 %2882
    %2884 = vrot.lane.b32.xlu0 %v2879, 64
    %v2885 = vpop.permute.xlu0 %2884
    %v2888 = vadd.f32 %v2876, %v2883
    %v2889 = vadd.f32 %v2877, %v2885
    %2892 = vrot.lane.b32.xlu0 %v2888, 96
    %v2893 = vpop.permute.xlu0 %2892
    %2894 = vrot.lane.b32.xlu0 %v2889, 96
    %v2895 = vpop.permute.xlu0 %2894
    %v2898 = vmul.f32 %v151, %v2893
    %v2899 = vmul.f32 %v152, %v2895
    %v2900 = vmul.f32 %v153, %v2893
    %v2901 = vmul.f32 %v154, %v2895
    %v2902 = vmul.f32 %v155, %v2893
    %v2903 = vmul.f32 %v156, %v2895
    %v2904 = vmul.f32 %v157, %v2893
    %v2905 = vmul.f32 %v158, %v2895
    %v2906 = vmul.f32 %v151, %v2870
    %v2907 = vmul.f32 %v152, %v2874
    %v2908 = vmul.f32 %v153, %v2870
    %v2909 = vmul.f32 %v154, %v2874
    %v2910 = vmul.f32 %v155, %v2870
    %v2911 = vmul.f32 %v156, %v2874
    %v2912 = vmul.f32 %v157, %v2870
    %v2913 = vmul.f32 %v158, %v2874
    %v2914 = vsel %vm171, %v2888, 0
    %v2916 = vsel %vm171, %v2889, 0
    %v2919 = vsel %vm171, %v2898, 0
    %v2922 = vsel %vm171, %v2899, 0
    %v2925 = vsel %vm171, %v2900, 0
    %v2928 = vsel %vm171, %v2901, 0
    %v2931 = vsel %vm171, %v2902, 0
    %v2934 = vsel %vm171, %v2903, 0
    %v2937 = vsel %vm171, %v2904, 0
    %v2940 = vsel %vm171, %v2905, 0
    %2942 = vmatprep.subr.mxu0 0.0
    %2943 = vmatpush1.xpose.msra.mxu0 %v2919
    %2944 = vmatprep.subr.mxu0 0.0
    %2945 = vmatpush1.xpose.msra.mxu0 %v2922
    %2946 = vmatprep.subr.mxu0 0.0
    %2947 = vmatpush1.xpose.msra.mxu0 %v2925
    %2948 = vmatprep.subr.mxu0 0.0
    %2949 = vmatpush1.xpose.msra.mxu0 %v2928
    %2950 = vmatprep.subr.mxu0 0.0
    %2951 = vmatpush1.xpose.msra.mxu0 %v2931
    %2952 = vmatprep.subr.mxu0 0.0
    %2953 = vmatpush1.xpose.msra.mxu0 %v2934
    %2954 = vmatprep.subr.mxu0 0.0
    %2955 = vmatpush1.xpose.msra.mxu0 %v2937
    %2956 = vmatprep.subr.mxu0 0.0
    %2957 = vmatpush1.xpose.msra.mxu0 %v2940
    %2958 = vmatprep.subr.mxu0 0.0
    %2959 = vmatpush1.xpose.msra.mxu0 0.0
    %2960 = vmatprep.subr.mxu0 0.0
    %2961 = vmatpush1.xpose.msra.mxu0 0.0
    %2962 = vmatprep.subr.mxu0 0.0
    %2963 = vmatpush1.xpose.msra.mxu0 0.0
    %2964 = vmatprep.subr.mxu0 0.0
    %2965 = vmatpush1.xpose.msra.mxu0 0.0
    %2966 = vmatprep.subr.mxu0 0.0
    %2967 = vmatpush1.xpose.msra.mxu0 0.0
    %2968 = vmatprep.subr.mxu0 0.0
    %2969 = vmatpush1.xpose.msra.mxu0 0.0
    %2970 = vmatprep.subr.mxu0 0.0
    %2971 = vmatpush1.xpose.msra.mxu0 0.0
    %2972 = vmatprep.subr.mxu0 0.0
    %2973 = vmatpush1.xpose.msra.mxu0 0.0
    %2974 = vmatprep.subr.mxu0 0.0
    %2975 = vmatpush1.xpose.msra.mxu0 0.0
    %2976 = vmatprep.subr.mxu0 0.0
    %2977 = vmatpush1.xpose.msra.mxu0 0.0
    %2978 = vmatprep.subr.mxu0 0.0
    %2979 = vmatpush1.xpose.msra.mxu0 0.0
    %2980 = vmatprep.subr.mxu0 0.0
    %2981 = vmatpush1.xpose.msra.mxu0 0.0
    %2982 = vmatprep.subr.mxu0 0.0
    %2983 = vmatpush1.xpose.msra.mxu0 0.0
    %2984 = vmatprep.subr.mxu0 0.0
    %2985 = vmatpush1.xpose.msra.mxu0 0.0
    %2986 = vmatprep.subr.mxu0 0.0
    %2987 = vmatpush1.xpose.msra.mxu0 0.0
    %2988 = vmatprep.subr.mxu0 0.0
    %2989 = vmatpush1.xpose.msra.mxu0 0.0
    %2990 = vmatprep.subr.mxu0 0.0
    %2991 = vmatpush1.xpose.msra.mxu0 0.0
    %2992 = vmatprep.subr.mxu0 0.0
    %2993 = vmatpush1.xpose.msra.mxu0 0.0
    %2994 = vmatprep.subr.mxu0 0.0
    %2995 = vmatpush1.xpose.msra.mxu0 0.0
    %2996 = vmatprep.subr.mxu0 0.0
    %2997 = vmatpush1.xpose.msra.mxu0 0.0
    %2998 = vmatprep.subr.mxu0 0.0
    %2999 = vmatpush1.xpose.msra.mxu0 0.0
    %3000 = vmatprep.subr.mxu0 0.0
    %3001 = vmatpush1.xpose.msra.mxu0 0.0
    %3002 = vmatprep.subr.mxu0 0.0
    %3003 = vmatpush1.xpose.msra.mxu0 0.0
    %3004 = vmatprep.subr.mxu0 0.0
    %3005 = vmatpush1.xpose.msra.mxu0 0.0
    %3006 = vmatprep.mubr.f32.mxu0 0.0
    %3007 = vmatmul.mubr.f32.gmra.mrb[0].mxu0 %v2914
    %v3008 = vpop.f32.mrb[0].mxu0
    %v3009 = vadd.f32 %v159, %v3008
    %v3010 = vpop.f32.mrb[0].mxu0
    %3011 = vmatprep.mubr.f32.mxu0 0.0
    %3012 = vmatmul.mubr.f32.gmra.mrb[0].mxu0 %v2916
    %v3013 = vpop.f32.mrb[0].mxu0
    %v3014 = vadd.f32 %v160, %v3013
    %v3015 = vpop.f32.mrb[0].mxu0
    %3016 = vdwg.mxu0
    %v3017 = vsel %vm407, %v3009, -inf
    %3018 = vmax.xlane.f32.xlu0 %v3017
    %v3019 = vpop.xlane.xlu0 %3018
    %v3020 = vsel %vm407, %v3014, -inf
    %3021 = vmax.xlane.f32.xlu0 %v3020
    %v3022 = vpop.xlane.xlu0 %3021
    %v3023 = vsub.f32 %v3009, %v3019
    %v3024 = vsub.f32 %v3014, %v3022
    %v3025 = vmul.f32 %v3023, 1.442695
    %v3026 = vpow.pop %v3025
    %v3027 = vmul.f32 %v3024, 1.442695
    %v3028 = vpow.pop %v3027
    %v3030 = vsel %vm407, %v3026, 0
    %v3033 = vsel %vm407, %v3028, 0
    %3035 = vmatprep.subr.mxu0 0.0
    %3036 = vmatpush1.msra.mxu0 %v161
    %3037 = vmatprep.subr.mxu0 0.0
    %3038 = vmatpush1.msra.mxu0 %v162
    %3039 = vmatprep.subr.mxu0 0.0
    %3040 = vmatpush1.msra.mxu0 %v163
    %3041 = vmatprep.subr.mxu0 0.0
    %3042 = vmatpush1.msra.mxu0 %v164
    %3043 = vmatprep.subr.mxu0 0.0
    %3044 = vmatpush1.msra.mxu0 %v165
    %3045 = vmatprep.subr.mxu0 0.0
    %3046 = vmatpush1.msra.mxu0 %v166
    %3047 = vmatprep.subr.mxu0 0.0
    %3048 = vmatpush1.msra.mxu0 %v167
    %3049 = vmatprep.subr.mxu0 0.0
    %3050 = vmatpush1.msra.mxu0 %v168
    %3051 = vmatprep.subr.mxu0 0.0
    %3052 = vmatpush1.msra.mxu0 0.0
    %3053 = vmatprep.subr.mxu0 0.0
    %3054 = vmatpush1.msra.mxu0 0.0
    %3055 = vmatprep.subr.mxu0 0.0
    %3056 = vmatpush1.msra.mxu0 0.0
    %3057 = vmatprep.subr.mxu0 0.0
    %3058 = vmatpush1.msra.mxu0 0.0
    %3059 = vmatprep.subr.mxu0 0.0
    %3060 = vmatpush1.msra.mxu0 0.0
    %3061 = vmatprep.subr.mxu0 0.0
    %3062 = vmatpush1.msra.mxu0 0.0
    %3063 = vmatprep.subr.mxu0 0.0
    %3064 = vmatpush1.msra.mxu0 0.0
    %3065 = vmatprep.subr.mxu0 0.0
    %3066 = vmatpush1.msra.mxu0 0.0
    %3067 = vmatprep.subr.mxu0 0.0
    %3068 = vmatpush1.msra.mxu0 0.0
    %3069 = vmatprep.subr.mxu0 0.0
    %3070 = vmatpush1.msra.mxu0 0.0
    %3071 = vmatprep.subr.mxu0 0.0
    %3072 = vmatpush1.msra.mxu0 0.0
    %3073 = vmatprep.subr.mxu0 0.0
    %3074 = vmatpush1.msra.mxu0 0.0
    %3075 = vmatprep.subr.mxu0 0.0
    %3076 = vmatpush1.msra.mxu0 0.0
    %3077 = vmatprep.subr.mxu0 0.0
    %3078 = vmatpush1.msra.mxu0 0.0
    %3079 = vmatprep.subr.mxu0 0.0
    %3080 = vmatpush1.msra.mxu0 0.0
    %3081 = vmatprep.subr.mxu0 0.0
    %3082 = vmatpush1.msra.mxu0 0.0
    %3083 = vmatprep.subr.mxu0 0.0
    %3084 = vmatpush1.msra.mxu0 0.0
    %3085 = vmatprep.subr.mxu0 0.0
    %3086 = vmatpush1.msra.mxu0 0.0
    %3087 = vmatprep.subr.mxu0 0.0
    %3088 = vmatpush1.msra.mxu0 0.0
    %3089 = vmatprep.subr.mxu0 0.0
    %3090 = vmatpush1.msra.mxu0 0.0
    %3091 = vmatprep.subr.mxu0 0.0
    %3092 = vmatpush1.msra.mxu0 0.0
    %3093 = vmatprep.subr.mxu0 0.0
    %3094 = vmatpush1.msra.mxu0 0.0
    %3095 = vmatprep.subr.mxu0 0.0
    %3096 = vmatpush1.msra.mxu0 0.0
    %3097 = vmatprep.subr.mxu0 0.0
    %3098 = vmatpush1.msra.mxu0 0.0
    %3099 = vmatprep.mubr.f32.mxu0 0.0
    %3100 = vmatmul.mubr.f32.gmra.mrb[0].mxu0 %v3030
    %v3101 = vpop.f32.mrb[0].mxu0
    %v3102 = vadd.f32 0.0, %v3101
    %v3103 = vpop.f32.mrb[0].mxu0
    %3104 = vmatprep.mubr.f32.mxu0 0.0
    %3105 = vmatmul.mubr.f32.gmra.mrb[0].mxu0 %v3033
    %v3106 = vpop.f32.mrb[0].mxu0
    %v3107 = vadd.f32 0.0, %v3106
    %v3108 = vpop.f32.mrb[0].mxu0
    %3109 = vdwg.mxu0
    %v3110 = vrcp.pop %v3102
    %v3111 = vrcp.pop %v3107
    %v3112 = vmul.f32 %v3026, %v3110
    %v3113 = vmul.f32 %v3028, %v3111
    %v3115 = vsel %vm407, %v3112, 0
    %v3118 = vsel %vm407, %v3113, 0
    %3120 = vmatprep.subr.mxu0 0.0
    %3121 = vmatpush1.msra.mxu0 %v2906
    %3122 = vmatprep.subr.mxu0 0.0
    %3123 = vmatpush1.msra.mxu0 %v2907
    %3124 = vmatprep.subr.mxu0 0.0
    %3125 = vmatpush1.msra.mxu0 %v2908
    %3126 = vmatprep.subr.mxu0 0.0
    %3127 = vmatpush1.msra.mxu0 %v2909
    %3128 = vmatprep.subr.mxu0 0.0
    %3129 = vmatpush1.msra.mxu0 %v2910
    %3130 = vmatprep.subr.mxu0 0.0
    %3131 = vmatpush1.msra.mxu0 %v2911
    %3132 = vmatprep.subr.mxu0 0.0
    %3133 = vmatpush1.msra.mxu0 %v2912
    %3134 = vmatprep.subr.mxu0 0.0
    %3135 = vmatpush1.msra.mxu0 %v2913
    %3136 = vmatprep.subr.mxu0 0.0
    %3137 = vmatpush1.msra.mxu0 0.0
    %3138 = vmatprep.subr.mxu0 0.0
    %3139 = vmatpush1.msra.mxu0 0.0
    %3140 = vmatprep.subr.mxu0 0.0
    %3141 = vmatpush1.msra.mxu0 0.0
    %3142 = vmatprep.subr.mxu0 0.0
    %3143 = vmatpush1.msra.mxu0 0.0
    %3144 = vmatprep.subr.mxu0 0.0
    %3145 = vmatpush1.msra.mxu0 0.0
    %3146 = vmatprep.subr.mxu0 0.0
    %3147 = vmatpush1.msra.mxu0 0.0
    %3148 = vmatprep.subr.mxu0 0.0
    %3149 = vmatpush1.msra.mxu0 0.0
    %3150 = vmatprep.subr.mxu0 0.0
    %3151 = vmatpush1.msra.mxu0 0.0
    %3152 = vmatprep.subr.mxu0 0.0
    %3153 = vmatpush1.msra.mxu0 0.0
    %3154 = vmatprep.subr.mxu0 0.0
    %3155 = vmatpush1.msra.mxu0 0.0
    %3156 = vmatprep.subr.mxu0 0.0
    %3157 = vmatpush1.msra.mxu0 0.0
    %3158 = vmatprep.subr.mxu0 0.0
    %3159 = vmatpush1.msra.mxu0 0.0
    %3160 = vmatprep.subr.mxu0 0.0
    %3161 = vmatpush1.msra.mxu0 0.0
    %3162 = vmatprep.subr.mxu0 0.0
    %3163 = vmatpush1.msra.mxu0 0.0
    %3164 = vmatprep.subr.mxu0 0.0
    %3165 = vmatpush1.msra.mxu0 0.0
    %3166 = vmatprep.subr.mxu0 0.0
    %3167 = vmatpush1.msra.mxu0 0.0
    %3168 = vmatprep.subr.mxu0 0.0
    %3169 = vmatpush1.msra.mxu0 0.0
    %3170 = vmatprep.subr.mxu0 0.0
    %3171 = vmatpush1.msra.mxu0 0.0
    %3172 = vmatprep.subr.mxu0 0.0
    %3173 = vmatpush1.msra.mxu0 0.0
    %3174 = vmatprep.subr.mxu0 0.0
    %3175 = vmatpush1.msra.mxu0 0.0
    %3176 = vmatprep.subr.mxu0 0.0
    %3177 = vmatpush1.msra.mxu0 0.0
    %3178 = vmatprep.subr.mxu0 0.0
    %3179 = vmatpush1.msra.mxu0 0.0
    %3180 = vmatprep.subr.mxu0 0.0
    %3181 = vmatpush1.msra.mxu0 0.0
    %3182 = vmatprep.subr.mxu0 0.0
    %3183 = vmatpush1.msra.mxu0 0.0
    %3184 = vmatprep.mubr.f32.mxu0 0.0
    %3185 = vmatmul.mubr.f32.gmra.mrb[0].mxu0 %v3115
    %v3186 = vpop.f32.mrb[0].mxu0
    %v3187 = vadd.f32 0.0, %v3186
    %v3188 = vpop.f32.mrb[0].mxu0
    %3189 = vmatprep.mubr.f32.mxu0 0.0
    %3190 = vmatmul.mubr.f32.gmra.mrb[0].mxu0 %v3118
    %v3191 = vpop.f32.mrb[0].mxu0
    %v3192 = vadd.f32 0.0, %v3191
    %v3193 = vpop.f32.mrb[0].mxu0
    %3194 = vdwg.mxu0
    %v3195 = vpack.c.bf16 %v3192, %v3187
    %s3196 = scalar_lea.vmem %s8, 64
    %v3197 = vld [vmem:[%s3196] sm:$0xf]
    %v3198 = vld [vmem:[%s3196 + $0x4] sm:$0xf]
    %v3199 = vld [vmem:[%s3196 + $0x8] sm:$0xf]
    %v3200 = vld [vmem:[%s3196 + $0xc] sm:$0xf]
    %v3205 = vunpack.c.l.b16 %v3197
    %v3206 = vunpack.c.l.b16 %v3198
    %v3207 = vunpack.c.l.b16 %v3199
    %v3208 = vunpack.c.l.b16 %v3200
    %v3209 = vpack.c.b16 %v3206, %v3205
    %v3210 = vpack.c.b16 %v3208, %v3207
    %v3214 = vsel %vm171, %v3195, 0
    %3216 = vmatprep.subr.bf16.mxu0 0
    %3217 = vmatpush1.bf16.msra.mxu0 %v3209
    %3218 = vmatprep.subr.bf16.mxu0 0
    %3219 = vmatpush1.bf16.msra.mxu0 %v3210
    %3220 = vmatprep.subr.bf16.mxu0 0
    %3221 = vmatpush1.bf16.msra.mxu0 0
    %3222 = vmatprep.subr.bf16.mxu0 0
    %3223 = vmatpush1.bf16.msra.mxu0 0
    %3224 = vmatprep.subr.bf16.mxu0 0
    %3225 = vmatpush1.bf16.msra.mxu0 0
    %3226 = vmatprep.subr.bf16.mxu0 0
    %3227 = vmatpush1.bf16.msra.mxu0 0
    %3228 = vmatprep.subr.bf16.mxu0 0
    %3229 = vmatpush1.bf16.msra.mxu0 0
    %3230 = vmatprep.subr.bf16.mxu0 0
    %3231 = vmatpush1.bf16.msra.mxu0 0
    %3232 = vmatprep.subr.bf16.mxu0 0
    %3233 = vmatpush1.bf16.msra.mxu0 0
    %3234 = vmatprep.subr.bf16.mxu0 0
    %3235 = vmatpush1.bf16.msra.mxu0 0
    %3236 = vmatprep.subr.bf16.mxu0 0
    %3237 = vmatpush1.bf16.msra.mxu0 0
    %3238 = vmatprep.subr.bf16.mxu0 0
    %3239 = vmatpush1.bf16.msra.mxu0 0
    %3240 = vmatprep.subr.bf16.mxu0 0
    %3241 = vmatpush1.bf16.msra.mxu0 0
    %3242 = vmatprep.subr.bf16.mxu0 0
    %3243 = vmatpush1.bf16.msra.mxu0 0
    %3244 = vmatprep.subr.bf16.mxu0 0
    %3245 = vmatpush1.bf16.msra.mxu0 0
    %3246 = vmatprep.subr.bf16.mxu0 0
    %3247 = vmatpush1.bf16.msra.mxu0 0
    %3248 = vmatprep.mubr.bf16.mxu0 0
    %3249 = vmatmul.mubr.bf16.gmra.mrb[0].mxu0 %v3214
    %v3250 = vpop.f32.mrb[0].mxu0
    %v3251 = vadd.f32 0.0, %v3250
    %v3252 = vpop.f32.mrb[0].mxu0
    %v3253 = vpop.f32.mrb[0].mxu0
    %v3254 = vadd.f32 0.0, %v3253
    %v3255 = vpop.f32.mrb[0].mxu0
    %3256 = vdwg.mxu0
    %v3257 = vadd.f32 %v2786, %v3251
    %v3258 = vadd.f32 %v2787, %v3254
    %v3259 = vmul.f32 %v3257, %v3257
    %v3260 = vmul.f32 %v3258, %v3258
    %v3261 = vsel %vm171, %v3259, 0.0
    %3262 = vadd.xlane.f32.xlu0 %v3261
    %v3263 = vpop.xlane.xlu0 %3262
    %v3264 = vsel %vm171, %v3260, 0.0
    %3265 = vadd.xlane.f32.xlu0 %v3264
    %v3266 = vpop.xlane.xlu0 %3265
    %v3267 = vmul.f32 %v3263, %v178
    %v3268 = vmul.f32 %v3266, %v178
    %v3269 = vadd.f32 %v3267, 1e-06
    %v3270 = vadd.f32 %v3268, 1e-06
    %v3271 = vrsqrt.pop %v3269
    %v3272 = vrsqrt.pop %v3270
    %v3273 = vmul.f32 %v3257, %v3271
    %v3274 = vmul.f32 %v3258, %v3272
    %v3275 = vpack.c.bf16 %v3274, %v3273
    %s3276 = scalar_lea.vmem %s9, 64
    %v3277 = vld [vmem:[%s3276] sm:$0xf]
    %v3278 = vld [vmem:[%s3276 + $0x4] sm:$0xf]
    %v3279 = vld [vmem:[%s3276 + $0x8] sm:$0xf]
    %v3280 = vld [vmem:[%s3276 + $0xc] sm:$0xf]
    %v3285 = vunpack.c.l.b16 %v3277
    %v3286 = vunpack.c.l.b16 %v3278
    %v3287 = vunpack.c.l.b16 %v3279
    %v3288 = vunpack.c.l.b16 %v3280
    %v3289 = vpack.c.b16 %v3286, %v3285
    %v3290 = vpack.c.b16 %v3288, %v3287
    %v3294 = vsel %vm171, %v3275, 0
    %3296 = vmatprep.subr.bf16.mxu0 0
    %3297 = vmatpush1.bf16.msra.mxu0 %v3289
    %3298 = vmatprep.subr.bf16.mxu0 0
    %3299 = vmatpush1.bf16.msra.mxu0 %v3290
    %3300 = vmatprep.subr.bf16.mxu0 0
    %3301 = vmatpush1.bf16.msra.mxu0 0
    %3302 = vmatprep.subr.bf16.mxu0 0
    %3303 = vmatpush1.bf16.msra.mxu0 0
    %3304 = vmatprep.subr.bf16.mxu0 0
    %3305 = vmatpush1.bf16.msra.mxu0 0
    %3306 = vmatprep.subr.bf16.mxu0 0
    %3307 = vmatpush1.bf16.msra.mxu0 0
    %3308 = vmatprep.subr.bf16.mxu0 0
    %3309 = vmatpush1.bf16.msra.mxu0 0
    %3310 = vmatprep.subr.bf16.mxu0 0
    %3311 = vmatpush1.bf16.msra.mxu0 0
    %3312 = vmatprep.subr.bf16.mxu0 0
    %3313 = vmatpush1.bf16.msra.mxu0 0
    %3314 = vmatprep.subr.bf16.mxu0 0
    %3315 = vmatpush1.bf16.msra.mxu0 0
    %3316 = vmatprep.subr.bf16.mxu0 0
    %3317 = vmatpush1.bf16.msra.mxu0 0
    %3318 = vmatprep.subr.bf16.mxu0 0
    %3319 = vmatpush1.bf16.msra.mxu0 0
    %3320 = vmatprep.subr.bf16.mxu0 0
    %3321 = vmatpush1.bf16.msra.mxu0 0
    %3322 = vmatprep.subr.bf16.mxu0 0
    %3323 = vmatpush1.bf16.msra.mxu0 0
    %3324 = vmatprep.subr.bf16.mxu0 0
    %3325 = vmatpush1.bf16.msra.mxu0 0
    %3326 = vmatprep.subr.bf16.mxu0 0
    %3327 = vmatpush1.bf16.msra.mxu0 0
    %3328 = vmatprep.mubr.bf16.mxu0 0
    %3329 = vmatmul.mubr.bf16.gmra.mrb[0].mxu0 %v3294
    %v3330 = vpop.f32.mrb[0].mxu0
    %v3331 = vadd.f32 0.0, %v3330
    %v3332 = vpop.f32.mrb[0].mxu0
    %v3333 = vpop.f32.mrb[0].mxu0
    %v3334 = vadd.f32 0.0, %v3333
    %v3335 = vpop.f32.mrb[0].mxu0
    %3336 = vdwg.mxu0
    %v3337 = vxor.u32 %v3331, 2147483648
    %v3338 = vxor.u32 %v3334, 2147483648
    %v3339 = vmul.f32 %v3337, 1.442695
    %v3340 = vpow.pop %v3339
    %v3341 = vmul.f32 %v3338, 1.442695
    %v3342 = vpow.pop %v3341
    %v3343 = vadd.f32 %v3340, 1.0
    %v3344 = vadd.f32 %v3342, 1.0
    %v3345 = vrcp.pop %v3343
    %v3346 = vmul.f32 1.0, %v3345
    %v3347 = vrcp.pop %v3344
    %v3348 = vmul.f32 1.0, %v3347
    %v3349 = vmul.f32 %v3331, %v3346
    %v3350 = vmul.f32 %v3334, %v3348
    %3353 = vrot.lane.b32.xlu0 %v3331, 64
    %v3354 = vpop.permute.xlu0 %3353
    %3355 = vrot.lane.b32.xlu0 %v3334, 64
    %v3356 = vpop.permute.xlu0 %3355
    %v3359 = vmul.f32 %v3349, %v3354
    %v3360 = vmul.f32 %v3350, %v3356
    %v3361 = vpack.c.bf16 %v3360, %v3359
    %s3362 = scalar_lea.vmem %s10, 128
    %v3363 = vld [vmem:[%s3362] sm:$0xf]
    %v3364 = vld [vmem:[%s3362 + $0x4] sm:$0xf]
    %v3365 = vld [vmem:[%s3362 + $0x8] sm:$0xf]
    %v3366 = vld [vmem:[%s3362 + $0xc] sm:$0xf]
    %v3367 = vld [vmem:[%s3362 + $0x10] sm:$0xf]
    %v3368 = vld [vmem:[%s3362 + $0x14] sm:$0xf]
    %v3369 = vld [vmem:[%s3362 + $0x18] sm:$0xf]
    %v3370 = vld [vmem:[%s3362 + $0x1c] sm:$0xf]
    %v3379 = vunpack.c.l.b16 %v3363
    %v3380 = vunpack.c.l.b16 %v3364
    %v3381 = vunpack.c.l.b16 %v3365
    %v3382 = vunpack.c.l.b16 %v3366
    %v3383 = vunpack.c.l.b16 %v3367
    %v3384 = vunpack.c.l.b16 %v3368
    %v3385 = vunpack.c.l.b16 %v3369
    %v3386 = vunpack.c.l.b16 %v3370
    %v3387 = vpack.c.b16 %v3380, %v3379
    %v3388 = vpack.c.b16 %v3382, %v3381
    %v3389 = vpack.c.b16 %v3384, %v3383
    %v3390 = vpack.c.b16 %v3386, %v3385
    %v3396 = vsel %vm407, %v3361, 0
    %3398 = vmatprep.subr.bf16.mxu0 0
    %3399 = vmatpush1.bf16.msra.mxu0 %v3387
    %3400 = vmatprep.subr.bf16.mxu0 0
    %3401 = vmatpush1.bf16.msra.mxu0 %v3388
    %3402 = vmatprep.subr.bf16.mxu0 0
    %3403 = vmatpush1.bf16.msra.mxu0 %v3389
    %3404 = vmatprep.subr.bf16.mxu0 0
    %3405 = vmatpush1.bf16.msra.mxu0 %v3390
    %3406 = vmatprep.subr.bf16.mxu0 0
    %3407 = vmatpush1.bf16.msra.mxu0 0
    %3408 = vmatprep.subr.bf16.mxu0 0
    %3409 = vmatpush1.bf16.msra.mxu0 0
    %3410 = vmatprep.subr.bf16.mxu0 0
    %3411 = vmatpush1.bf16.msra.mxu0 0
    %3412 = vmatprep.subr.bf16.mxu0 0
    %3413 = vmatpush1.bf16.msra.mxu0 0
    %3414 = vmatprep.subr.bf16.mxu0 0
    %3415 = vmatpush1.bf16.msra.mxu0 0
    %3416 = vmatprep.subr.bf16.mxu0 0
    %3417 = vmatpush1.bf16.msra.mxu0 0
    %3418 = vmatprep.subr.bf16.mxu0 0
    %3419 = vmatpush1.bf16.msra.mxu0 0
    %3420 = vmatprep.subr.bf16.mxu0 0
    %3421 = vmatpush1.bf16.msra.mxu0 0
    %3422 = vmatprep.subr.bf16.mxu0 0
    %3423 = vmatpush1.bf16.msra.mxu0 0
    %3424 = vmatprep.subr.bf16.mxu0 0
    %3425 = vmatpush1.bf16.msra.mxu0 0
    %3426 = vmatprep.subr.bf16.mxu0 0
    %3427 = vmatpush1.bf16.msra.mxu0 0
    %3428 = vmatprep.subr.bf16.mxu0 0
    %3429 = vmatpush1.bf16.msra.mxu0 0
    %3430 = vmatprep.mubr.bf16.mxu0 0
    %3431 = vmatmul.mubr.bf16.gmra.mrb[0].mxu0 %v3396
    %v3432 = vpop.f32.mrb[0].mxu0
    %v3433 = vadd.f32 0.0, %v3432
    %v3434 = vpop.f32.mrb[0].mxu0
    %v3435 = vpop.f32.mrb[0].mxu0
    %v3436 = vadd.f32 0.0, %v3435
    %v3437 = vpop.f32.mrb[0].mxu0
    %3438 = vdwg.mxu0
    %v3439 = vadd.f32 %v3257, %v3433
    %v3440 = vadd.f32 %v3258, %v3436
    %v3441 = vmul.f32 %v3439, %v3439
    %v3442 = vmul.f32 %v3440, %v3440
    %v3443 = vsel %vm171, %v3441, 0.0
    %3444 = vadd.xlane.f32.xlu0 %v3443
    %v3445 = vpop.xlane.xlu0 %3444
    %v3446 = vsel %vm171, %v3442, 0.0
    %3447 = vadd.xlane.f32.xlu0 %v3446
    %v3448 = vpop.xlane.xlu0 %3447
    %v3449 = vmul.f32 %v3445, %v178
    %v3450 = vmul.f32 %v3448, %v178
    %v3451 = vadd.f32 %v3449, 1e-06
    %v3452 = vadd.f32 %v3450, 1e-06
    %v3453 = vrsqrt.pop %v3451
    %v3454 = vrsqrt.pop %v3452
    %v3455 = vmul.f32 %v3439, %v3453
    %v3456 = vmul.f32 %v3440, %v3454
    %v3457 = vpack.c.bf16 %v3456, %v3455
    %s3458 = scalar_lea.vmem %s7, 160
    %v3459 = vld [vmem:[%s3458] sm:$0xff]
    %v3460 = vld [vmem:[%s3458 + $0x8] sm:$0xff]
    %v3461 = vld [vmem:[%s3458 + $0x10] sm:$0xff]
    %v3462 = vld [vmem:[%s3458 + $0x18] sm:$0xff]
    %v3467 = vunpack.c.l.b16 %v3459
    %v3468 = vunpack.c.h.b16 %v3459
    %v3469 = vunpack.c.l.b16 %v3460
    %v3470 = vunpack.c.h.b16 %v3460
    %v3471 = vunpack.c.l.b16 %v3461
    %v3472 = vunpack.c.h.b16 %v3461
    %v3473 = vunpack.c.l.b16 %v3462
    %v3474 = vunpack.c.h.b16 %v3462
    %v3475 = vpack.c.b16 %v3469, %v3467
    %v3476 = vpack.c.b16 %v3470, %v3468
    %v3477 = vpack.c.b16 %v3473, %v3471
    %v3478 = vpack.c.b16 %v3474, %v3472
    %v3484 = vsel %vm171, %v3457, 0
    %3486 = vmatprep.subr.bf16.mxu0 %v3476
    %3487 = vmatpush1.bf16.msra.mxu0 %v3475
    %3488 = vmatprep.subr.bf16.mxu0 %v3478
    %3489 = vmatpush1.bf16.msra.mxu0 %v3477
    %3490 = vmatprep.subr.bf16.mxu0 0
    %3491 = vmatpush1.bf16.msra.mxu0 0
    %3492 = vmatprep.subr.bf16.mxu0 0
    %3493 = vmatpush1.bf16.msra.mxu0 0
    %3494 = vmatprep.subr.bf16.mxu0 0
    %3495 = vmatpush1.bf16.msra.mxu0 0
    %3496 = vmatprep.subr.bf16.mxu0 0
    %3497 = vmatpush1.bf16.msra.mxu0 0
    %3498 = vmatprep.subr.bf16.mxu0 0
    %3499 = vmatpush1.bf16.msra.mxu0 0
    %3500 = vmatprep.subr.bf16.mxu0 0
    %3501 = vmatpush1.bf16.msra.mxu0 0
    %3502 = vmatprep.subr.bf16.mxu0 0
    %3503 = vmatpush1.bf16.msra.mxu0 0
    %3504 = vmatprep.subr.bf16.mxu0 0
    %3505 = vmatpush1.bf16.msra.mxu0 0
    %3506 = vmatprep.subr.bf16.mxu0 0
    %3507 = vmatpush1.bf16.msra.mxu0 0
    %3508 = vmatprep.subr.bf16.mxu0 0
    %3509 = vmatpush1.bf16.msra.mxu0 0
    %3510 = vmatprep.subr.bf16.mxu0 0
    %3511 = vmatpush1.bf16.msra.mxu0 0
    %3512 = vmatprep.subr.bf16.mxu0 0
    %3513 = vmatpush1.bf16.msra.mxu0 0
    %3514 = vmatprep.subr.bf16.mxu0 0
    %3515 = vmatpush1.bf16.msra.mxu0 0
    %3516 = vmatprep.subr.bf16.mxu0 0
    %3517 = vmatpush1.bf16.msra.mxu0 0
    %3518 = vmatprep.mubr.bf16.mxu0 0
    %3519 = vmatmul.mubr.bf16.gmra.mrb[0].mxu0 %v3484
    %v3520 = vpop.f32.mrb[0].mxu0
    %v3521 = vadd.f32 0.0, %v3520
    %v3522 = vpop.f32.mrb[0].mxu0
    %v3523 = vadd.f32 0.0, %v3522
    %v3524 = vpop.f32.mrb[0].mxu0
    %v3525 = vadd.f32 0.0, %v3524
    %v3526 = vpop.f32.mrb[0].mxu0
    %v3527 = vadd.f32 0.0, %v3526
    %3528 = vdwg.mxu0
    %v3529 = vmul.f32 %v3521, %v147
    %v3530 = vmul.f32 %v3525, %v148
    %v3531 = vmul.f32 %v3521, %v263
    %v3532 = vmul.f32 %v3525, %v265
    %3535 = vrot.lane.b32.xlu0 %v3531, 64
    %v3536 = vpop.permute.xlu0 %3535
    %3537 = vrot.lane.b32.xlu0 %v3532, 64
    %v3538 = vpop.permute.xlu0 %3537
    %v3541 = vadd.f32 %v3529, %v3536
    %v3542 = vadd.f32 %v3530, %v3538
    %3545 = vrot.lane.b32.xlu0 %v3541, 96
    %v3546 = vpop.permute.xlu0 %3545
    %3547 = vrot.lane.b32.xlu0 %v3542, 96
    %v3548 = vpop.permute.xlu0 %3547
    %v3551 = vmul.f32 %v151, %v3546
    %v3552 = vmul.f32 %v152, %v3548
    %v3553 = vmul.f32 %v153, %v3546
    %v3554 = vmul.f32 %v154, %v3548
    %v3555 = vmul.f32 %v155, %v3546
    %v3556 = vmul.f32 %v156, %v3548
    %v3557 = vmul.f32 %v157, %v3546
    %v3558 = vmul.f32 %v158, %v3548
    %v3559 = vmul.f32 %v151, %v3523
    %v3560 = vmul.f32 %v152, %v3527
    %v3561 = vmul.f32 %v153, %v3523
    %v3562 = vmul.f32 %v154, %v3527
    %v3563 = vmul.f32 %v155, %v3523
    %v3564 = vmul.f32 %v156, %v3527
    %v3565 = vmul.f32 %v157, %v3523
    %v3566 = vmul.f32 %v158, %v3527
    %v3567 = vsel %vm171, %v3541, 0
    %v3569 = vsel %vm171, %v3542, 0
    %v3572 = vsel %vm171, %v3551, 0
    %v3575 = vsel %vm171, %v3552, 0
    %v3578 = vsel %vm171, %v3553, 0
    %v3581 = vsel %vm171, %v3554, 0
    %v3584 = vsel %vm171, %v3555, 0
    %v3587 = vsel %vm171, %v3556, 0
    %v3590 = vsel %vm171, %v3557, 0
    %v3593 = vsel %vm171, %v3558, 0
    %3595 = vmatprep.subr.mxu0 0.0
    %3596 = vmatpush1.xpose.msra.mxu0 %v3572
    %3597 = vmatprep.subr.mxu0 0.0
    %3598 = vmatpush1.xpose.msra.mxu0 %v3575
    %3599 = vmatprep.subr.mxu0 0.0
    %3600 = vmatpush1.xpose.msra.mxu0 %v3578
    %3601 = vmatprep.subr.mxu0 0.0
    %3602 = vmatpush1.xpose.msra.mxu0 %v3581
    %3603 = vmatprep.subr.mxu0 0.0
    %3604 = vmatpush1.xpose.msra.mxu0 %v3584
    %3605 = vmatprep.subr.mxu0 0.0
    %3606 = vmatpush1.xpose.msra.mxu0 %v3587
    %3607 = vmatprep.subr.mxu0 0.0
    %3608 = vmatpush1.xpose.msra.mxu0 %v3590
    %3609 = vmatprep.subr.mxu0 0.0
    %3610 = vmatpush1.xpose.msra.mxu0 %v3593
    %3611 = vmatprep.subr.mxu0 0.0
    %3612 = vmatpush1.xpose.msra.mxu0 0.0
    %3613 = vmatprep.subr.mxu0 0.0
    %3614 = vmatpush1.xpose.msra.mxu0 0.0
    %3615 = vmatprep.subr.mxu0 0.0
    %3616 = vmatpush1.xpose.msra.mxu0 0.0
    %3617 = vmatprep.subr.mxu0 0.0
    %3618 = vmatpush1.xpose.msra.mxu0 0.0
    %3619 = vmatprep.subr.mxu0 0.0
    %3620 = vmatpush1.xpose.msra.mxu0 0.0
    %3621 = vmatprep.subr.mxu0 0.0
    %3622 = vmatpush1.xpose.msra.mxu0 0.0
    %3623 = vmatprep.subr.mxu0 0.0
    %3624 = vmatpush1.xpose.msra.mxu0 0.0
    %3625 = vmatprep.subr.mxu0 0.0
    %3626 = vmatpush1.xpose.msra.mxu0 0.0
    %3627 = vmatprep.subr.mxu0 0.0
    %3628 = vmatpush1.xpose.msra.mxu0 0.0
    %3629 = vmatprep.subr.mxu0 0.0
    %3630 = vmatpush1.xpose.msra.mxu0 0.0
    %3631 = vmatprep.subr.mxu0 0.0
    %3632 = vmatpush1.xpose.msra.mxu0 0.0
    %3633 = vmatprep.subr.mxu0 0.0
    %3634 = vmatpush1.xpose.msra.mxu0 0.0
    %3635 = vmatprep.subr.mxu0 0.0
    %3636 = vmatpush1.xpose.msra.mxu0 0.0
    %3637 = vmatprep.subr.mxu0 0.0
    %3638 = vmatpush1.xpose.msra.mxu0 0.0
    %3639 = vmatprep.subr.mxu0 0.0
    %3640 = vmatpush1.xpose.msra.mxu0 0.0
    %3641 = vmatprep.subr.mxu0 0.0
    %3642 = vmatpush1.xpose.msra.mxu0 0.0
    %3643 = vmatprep.subr.mxu0 0.0
    %3644 = vmatpush1.xpose.msra.mxu0 0.0
    %3645 = vmatprep.subr.mxu0 0.0
    %3646 = vmatpush1.xpose.msra.mxu0 0.0
    %3647 = vmatprep.subr.mxu0 0.0
    %3648 = vmatpush1.xpose.msra.mxu0 0.0
    %3649 = vmatprep.subr.mxu0 0.0
    %3650 = vmatpush1.xpose.msra.mxu0 0.0
    %3651 = vmatprep.subr.mxu0 0.0
    %3652 = vmatpush1.xpose.msra.mxu0 0.0
    %3653 = vmatprep.subr.mxu0 0.0
    %3654 = vmatpush1.xpose.msra.mxu0 0.0
    %3655 = vmatprep.subr.mxu0 0.0
    %3656 = vmatpush1.xpose.msra.mxu0 0.0
    %3657 = vmatprep.subr.mxu0 0.0
    %3658 = vmatpush1.xpose.msra.mxu0 0.0
    %3659 = vmatprep.mubr.f32.mxu0 0.0
    %3660 = vmatmul.mubr.f32.gmra.mrb[0].mxu0 %v3567
    %v3661 = vpop.f32.mrb[0].mxu0
    %v3662 = vadd.f32 %v159, %v3661
    %v3663 = vpop.f32.mrb[0].mxu0
    %3664 = vmatprep.mubr.f32.mxu0 0.0
    %3665 = vmatmul.mubr.f32.gmra.mrb[0].mxu0 %v3569
    %v3666 = vpop.f32.mrb[0].mxu0
    %v3667 = vadd.f32 %v160, %v3666
    %v3668 = vpop.f32.mrb[0].mxu0
    %3669 = vdwg.mxu0
    %v3670 = vsel %vm407, %v3662, -inf
    %3671 = vmax.xlane.f32.xlu0 %v3670
    %v3672 = vpop.xlane.xlu0 %3671
    %v3673 = vsel %vm407, %v3667, -inf
    %3674 = vmax.xlane.f32.xlu0 %v3673
    %v3675 = vpop.xlane.xlu0 %3674
    %v3676 = vsub.f32 %v3662, %v3672
    %v3677 = vsub.f32 %v3667, %v3675
    %v3678 = vmul.f32 %v3676, 1.442695
    %v3679 = vpow.pop %v3678
    %v3680 = vmul.f32 %v3677, 1.442695
    %v3681 = vpow.pop %v3680
    %v3683 = vsel %vm407, %v3679, 0
    %v3686 = vsel %vm407, %v3681, 0
    %3688 = vmatprep.subr.mxu0 0.0
    %3689 = vmatpush1.msra.mxu0 %v161
    %3690 = vmatprep.subr.mxu0 0.0
    %3691 = vmatpush1.msra.mxu0 %v162
    %3692 = vmatprep.subr.mxu0 0.0
    %3693 = vmatpush1.msra.mxu0 %v163
    %3694 = vmatprep.subr.mxu0 0.0
    %3695 = vmatpush1.msra.mxu0 %v164
    %3696 = vmatprep.subr.mxu0 0.0
    %3697 = vmatpush1.msra.mxu0 %v165
    %3698 = vmatprep.subr.mxu0 0.0
    %3699 = vmatpush1.msra.mxu0 %v166
    %3700 = vmatprep.subr.mxu0 0.0
    %3701 = vmatpush1.msra.mxu0 %v167
    %3702 = vmatprep.subr.mxu0 0.0
    %3703 = vmatpush1.msra.mxu0 %v168
    %3704 = vmatprep.subr.mxu0 0.0
    %3705 = vmatpush1.msra.mxu0 0.0
    %3706 = vmatprep.subr.mxu0 0.0
    %3707 = vmatpush1.msra.mxu0 0.0
    %3708 = vmatprep.subr.mxu0 0.0
    %3709 = vmatpush1.msra.mxu0 0.0
    %3710 = vmatprep.subr.mxu0 0.0
    %3711 = vmatpush1.msra.mxu0 0.0
    %3712 = vmatprep.subr.mxu0 0.0
    %3713 = vmatpush1.msra.mxu0 0.0
    %3714 = vmatprep.subr.mxu0 0.0
    %3715 = vmatpush1.msra.mxu0 0.0
    %3716 = vmatprep.subr.mxu0 0.0
    %3717 = vmatpush1.msra.mxu0 0.0
    %3718 = vmatprep.subr.mxu0 0.0
    %3719 = vmatpush1.msra.mxu0 0.0
    %3720 = vmatprep.subr.mxu0 0.0
    %3721 = vmatpush1.msra.mxu0 0.0
    %3722 = vmatprep.subr.mxu0 0.0
    %3723 = vmatpush1.msra.mxu0 0.0
    %3724 = vmatprep.subr.mxu0 0.0
    %3725 = vmatpush1.msra.mxu0 0.0
    %3726 = vmatprep.subr.mxu0 0.0
    %3727 = vmatpush1.msra.mxu0 0.0
    %3728 = vmatprep.subr.mxu0 0.0
    %3729 = vmatpush1.msra.mxu0 0.0
    %3730 = vmatprep.subr.mxu0 0.0
    %3731 = vmatpush1.msra.mxu0 0.0
    %3732 = vmatprep.subr.mxu0 0.0
    %3733 = vmatpush1.msra.mxu0 0.0
    %3734 = vmatprep.subr.mxu0 0.0
    %3735 = vmatpush1.msra.mxu0 0.0
    %3736 = vmatprep.subr.mxu0 0.0
    %3737 = vmatpush1.msra.mxu0 0.0
    %3738 = vmatprep.subr.mxu0 0.0
    %3739 = vmatpush1.msra.mxu0 0.0
    %3740 = vmatprep.subr.mxu0 0.0
    %3741 = vmatpush1.msra.mxu0 0.0
    %3742 = vmatprep.subr.mxu0 0.0
    %3743 = vmatpush1.msra.mxu0 0.0
    %3744 = vmatprep.subr.mxu0 0.0
    %3745 = vmatpush1.msra.mxu0 0.0
    %3746 = vmatprep.subr.mxu0 0.0
    %3747 = vmatpush1.msra.mxu0 0.0
    %3748 = vmatprep.subr.mxu0 0.0
    %3749 = vmatpush1.msra.mxu0 0.0
    %3750 = vmatprep.subr.mxu0 0.0
    %3751 = vmatpush1.msra.mxu0 0.0
    %3752 = vmatprep.mubr.f32.mxu0 0.0
    %3753 = vmatmul.mubr.f32.gmra.mrb[0].mxu0 %v3683
    %v3754 = vpop.f32.mrb[0].mxu0
    %v3755 = vadd.f32 0.0, %v3754
    %v3756 = vpop.f32.mrb[0].mxu0
    %3757 = vmatprep.mubr.f32.mxu0 0.0
    %3758 = vmatmul.mubr.f32.gmra.mrb[0].mxu0 %v3686
    %v3759 = vpop.f32.mrb[0].mxu0
    %v3760 = vadd.f32 0.0, %v3759
    %v3761 = vpop.f32.mrb[0].mxu0
    %3762 = vdwg.mxu0
    %v3763 = vrcp.pop %v3755
    %v3764 = vrcp.pop %v3760
    %v3765 = vmul.f32 %v3679, %v3763
    %v3766 = vmul.f32 %v3681, %v3764
    %v3768 = vsel %vm407, %v3765, 0
    %v3771 = vsel %vm407, %v3766, 0
    %3773 = vmatprep.subr.mxu0 0.0
    %3774 = vmatpush1.msra.mxu0 %v3559
    %3775 = vmatprep.subr.mxu0 0.0
    %3776 = vmatpush1.msra.mxu0 %v3560
    %3777 = vmatprep.subr.mxu0 0.0
    %3778 = vmatpush1.msra.mxu0 %v3561
    %3779 = vmatprep.subr.mxu0 0.0
    %3780 = vmatpush1.msra.mxu0 %v3562
    %3781 = vmatprep.subr.mxu0 0.0
    %3782 = vmatpush1.msra.mxu0 %v3563
    %3783 = vmatprep.subr.mxu0 0.0
    %3784 = vmatpush1.msra.mxu0 %v3564
    %3785 = vmatprep.subr.mxu0 0.0
    %3786 = vmatpush1.msra.mxu0 %v3565
    %3787 = vmatprep.subr.mxu0 0.0
    %3788 = vmatpush1.msra.mxu0 %v3566
    %3789 = vmatprep.subr.mxu0 0.0
    %3790 = vmatpush1.msra.mxu0 0.0
    %3791 = vmatprep.subr.mxu0 0.0
    %3792 = vmatpush1.msra.mxu0 0.0
    %3793 = vmatprep.subr.mxu0 0.0
    %3794 = vmatpush1.msra.mxu0 0.0
    %3795 = vmatprep.subr.mxu0 0.0
    %3796 = vmatpush1.msra.mxu0 0.0
    %3797 = vmatprep.subr.mxu0 0.0
    %3798 = vmatpush1.msra.mxu0 0.0
    %3799 = vmatprep.subr.mxu0 0.0
    %3800 = vmatpush1.msra.mxu0 0.0
    %3801 = vmatprep.subr.mxu0 0.0
    %3802 = vmatpush1.msra.mxu0 0.0
    %3803 = vmatprep.subr.mxu0 0.0
    %3804 = vmatpush1.msra.mxu0 0.0
    %3805 = vmatprep.subr.mxu0 0.0
    %3806 = vmatpush1.msra.mxu0 0.0
    %3807 = vmatprep.subr.mxu0 0.0
    %3808 = vmatpush1.msra.mxu0 0.0
    %3809 = vmatprep.subr.mxu0 0.0
    %3810 = vmatpush1.msra.mxu0 0.0
    %3811 = vmatprep.subr.mxu0 0.0
    %3812 = vmatpush1.msra.mxu0 0.0
    %3813 = vmatprep.subr.mxu0 0.0
    %3814 = vmatpush1.msra.mxu0 0.0
    %3815 = vmatprep.subr.mxu0 0.0
    %3816 = vmatpush1.msra.mxu0 0.0
    %3817 = vmatprep.subr.mxu0 0.0
    %3818 = vmatpush1.msra.mxu0 0.0
    %3819 = vmatprep.subr.mxu0 0.0
    %3820 = vmatpush1.msra.mxu0 0.0
    %3821 = vmatprep.subr.mxu0 0.0
    %3822 = vmatpush1.msra.mxu0 0.0
    %3823 = vmatprep.subr.mxu0 0.0
    %3824 = vmatpush1.msra.mxu0 0.0
    %3825 = vmatprep.subr.mxu0 0.0
    %3826 = vmatpush1.msra.mxu0 0.0
    %3827 = vmatprep.subr.mxu0 0.0
    %3828 = vmatpush1.msra.mxu0 0.0
    %3829 = vmatprep.subr.mxu0 0.0
    %3830 = vmatpush1.msra.mxu0 0.0
    %3831 = vmatprep.subr.mxu0 0.0
    %3832 = vmatpush1.msra.mxu0 0.0
    %3833 = vmatprep.subr.mxu0 0.0
    %3834 = vmatpush1.msra.mxu0 0.0
    %3835 = vmatprep.subr.mxu0 0.0
    %3836 = vmatpush1.msra.mxu0 0.0
    %3837 = vmatprep.mubr.f32.mxu0 0.0
    %3838 = vmatmul.mubr.f32.gmra.mrb[0].mxu0 %v3768
    %v3839 = vpop.f32.mrb[0].mxu0
    %v3840 = vadd.f32 0.0, %v3839
    %v3841 = vpop.f32.mrb[0].mxu0
    %3842 = vmatprep.mubr.f32.mxu0 0.0
    %3843 = vmatmul.mubr.f32.gmra.mrb[0].mxu0 %v3771
    %v3844 = vpop.f32.mrb[0].mxu0
    %v3845 = vadd.f32 0.0, %v3844
    %v3846 = vpop.f32.mrb[0].mxu0
    %3847 = vdwg.mxu0
    %v3848 = vpack.c.bf16 %v3845, %v3840
    %s3849 = scalar_lea.vmem %s8, 80
    %v3850 = vld [vmem:[%s3849] sm:$0xf]
    %v3851 = vld [vmem:[%s3849 + $0x4] sm:$0xf]
    %v3852 = vld [vmem:[%s3849 + $0x8] sm:$0xf]
    %v3853 = vld [vmem:[%s3849 + $0xc] sm:$0xf]
    %v3858 = vunpack.c.l.b16 %v3850
    %v3859 = vunpack.c.l.b16 %v3851
    %v3860 = vunpack.c.l.b16 %v3852
    %v3861 = vunpack.c.l.b16 %v3853
    %v3862 = vpack.c.b16 %v3859, %v3858
    %v3863 = vpack.c.b16 %v3861, %v3860
    %v3867 = vsel %vm171, %v3848, 0
    %3869 = vmatprep.subr.bf16.mxu0 0
    %3870 = vmatpush1.bf16.msra.mxu0 %v3862
    %3871 = vmatprep.subr.bf16.mxu0 0
    %3872 = vmatpush1.bf16.msra.mxu0 %v3863
    %3873 = vmatprep.subr.bf16.mxu0 0
    %3874 = vmatpush1.bf16.msra.mxu0 0
    %3875 = vmatprep.subr.bf16.mxu0 0
    %3876 = vmatpush1.bf16.msra.mxu0 0
    %3877 = vmatprep.subr.bf16.mxu0 0
    %3878 = vmatpush1.bf16.msra.mxu0 0
    %3879 = vmatprep.subr.bf16.mxu0 0
    %3880 = vmatpush1.bf16.msra.mxu0 0
    %3881 = vmatprep.subr.bf16.mxu0 0
    %3882 = vmatpush1.bf16.msra.mxu0 0
    %3883 = vmatprep.subr.bf16.mxu0 0
    %3884 = vmatpush1.bf16.msra.mxu0 0
    %3885 = vmatprep.subr.bf16.mxu0 0
    %3886 = vmatpush1.bf16.msra.mxu0 0
    %3887 = vmatprep.subr.bf16.mxu0 0
    %3888 = vmatpush1.bf16.msra.mxu0 0
    %3889 = vmatprep.subr.bf16.mxu0 0
    %3890 = vmatpush1.bf16.msra.mxu0 0
    %3891 = vmatprep.subr.bf16.mxu0 0
    %3892 = vmatpush1.bf16.msra.mxu0 0
    %3893 = vmatprep.subr.bf16.mxu0 0
    %3894 = vmatpush1.bf16.msra.mxu0 0
    %3895 = vmatprep.subr.bf16.mxu0 0
    %3896 = vmatpush1.bf16.msra.mxu0 0
    %3897 = vmatprep.subr.bf16.mxu0 0
    %3898 = vmatpush1.bf16.msra.mxu0 0
    %3899 = vmatprep.subr.bf16.mxu0 0
    %3900 = vmatpush1.bf16.msra.mxu0 0
    %3901 = vmatprep.mubr.bf16.mxu0 0
    %3902 = vmatmul.mubr.bf16.gmra.mrb[0].mxu0 %v3867
    %v3903 = vpop.f32.mrb[0].mxu0
    %v3904 = vadd.f32 0.0, %v3903
    %v3905 = vpop.f32.mrb[0].mxu0
    %v3906 = vpop.f32.mrb[0].mxu0
    %v3907 = vadd.f32 0.0, %v3906
    %v3908 = vpop.f32.mrb[0].mxu0
    %3909 = vdwg.mxu0
    %v3910 = vadd.f32 %v3439, %v3904
    %v3911 = vadd.f32 %v3440, %v3907
    %v3912 = vmul.f32 %v3910, %v3910
    %v3913 = vmul.f32 %v3911, %v3911
    %v3914 = vsel %vm171, %v3912, 0.0
    %3915 = vadd.xlane.f32.xlu0 %v3914
    %v3916 = vpop.xlane.xlu0 %3915
    %v3917 = vsel %vm171, %v3913, 0.0
    %3918 = vadd.xlane.f32.xlu0 %v3917
    %v3919 = vpop.xlane.xlu0 %3918
    %v3920 = vmul.f32 %v3916, %v178
    %v3921 = vmul.f32 %v3919, %v178
    %v3922 = vadd.f32 %v3920, 1e-06
    %v3923 = vadd.f32 %v3921, 1e-06
    %v3924 = vrsqrt.pop %v3922
    %v3925 = vrsqrt.pop %v3923
    %v3926 = vmul.f32 %v3910, %v3924
    %v3927 = vmul.f32 %v3911, %v3925
    %v3928 = vpack.c.bf16 %v3927, %v3926
    %s3929 = scalar_lea.vmem %s9, 80
    %v3930 = vld [vmem:[%s3929] sm:$0xf]
    %v3931 = vld [vmem:[%s3929 + $0x4] sm:$0xf]
    %v3932 = vld [vmem:[%s3929 + $0x8] sm:$0xf]
    %v3933 = vld [vmem:[%s3929 + $0xc] sm:$0xf]
    %v3938 = vunpack.c.l.b16 %v3930
    %v3939 = vunpack.c.l.b16 %v3931
    %v3940 = vunpack.c.l.b16 %v3932
    %v3941 = vunpack.c.l.b16 %v3933
    %v3942 = vpack.c.b16 %v3939, %v3938
    %v3943 = vpack.c.b16 %v3941, %v3940
    %v3947 = vsel %vm171, %v3928, 0
    %3949 = vmatprep.subr.bf16.mxu0 0
    %3950 = vmatpush1.bf16.msra.mxu0 %v3942
    %3951 = vmatprep.subr.bf16.mxu0 0
    %3952 = vmatpush1.bf16.msra.mxu0 %v3943
    %3953 = vmatprep.subr.bf16.mxu0 0
    %3954 = vmatpush1.bf16.msra.mxu0 0
    %3955 = vmatprep.subr.bf16.mxu0 0
    %3956 = vmatpush1.bf16.msra.mxu0 0
    %3957 = vmatprep.subr.bf16.mxu0 0
    %3958 = vmatpush1.bf16.msra.mxu0 0
    %3959 = vmatprep.subr.bf16.mxu0 0
    %3960 = vmatpush1.bf16.msra.mxu0 0
    %3961 = vmatprep.subr.bf16.mxu0 0
    %3962 = vmatpush1.bf16.msra.mxu0 0
    %3963 = vmatprep.subr.bf16.mxu0 0
    %3964 = vmatpush1.bf16.msra.mxu0 0
    %3965 = vmatprep.subr.bf16.mxu0 0
    %3966 = vmatpush1.bf16.msra.mxu0 0
    %3967 = vmatprep.subr.bf16.mxu0 0
    %3968 = vmatpush1.bf16.msra.mxu0 0
    %3969 = vmatprep.subr.bf16.mxu0 0
    %3970 = vmatpush1.bf16.msra.mxu0 0
    %3971 = vmatprep.subr.bf16.mxu0 0
    %3972 = vmatpush1.bf16.msra.mxu0 0
    %3973 = vmatprep.subr.bf16.mxu0 0
    %3974 = vmatpush1.bf16.msra.mxu0 0
    %3975 = vmatprep.subr.bf16.mxu0 0
    %3976 = vmatpush1.bf16.msra.mxu0 0
    %3977 = vmatprep.subr.bf16.mxu0 0
    %3978 = vmatpush1.bf16.msra.mxu0 0
    %3979 = vmatprep.subr.bf16.mxu0 0
    %3980 = vmatpush1.bf16.msra.mxu0 0
    %3981 = vmatprep.mubr.bf16.mxu0 0
    %3982 = vmatmul.mubr.bf16.gmra.mrb[0].mxu0 %v3947
    %v3983 = vpop.f32.mrb[0].mxu0
    %v3984 = vadd.f32 0.0, %v3983
    %v3985 = vpop.f32.mrb[0].mxu0
    %v3986 = vpop.f32.mrb[0].mxu0
    %v3987 = vadd.f32 0.0, %v3986
    %v3988 = vpop.f32.mrb[0].mxu0
    %3989 = vdwg.mxu0
    %v3990 = vxor.u32 %v3984, 2147483648
    %v3991 = vxor.u32 %v3987, 2147483648
    %v3992 = vmul.f32 %v3990, 1.442695
    %v3993 = vpow.pop %v3992
    %v3994 = vmul.f32 %v3991, 1.442695
    %v3995 = vpow.pop %v3994
    %v3996 = vadd.f32 %v3993, 1.0
    %v3997 = vadd.f32 %v3995, 1.0
    %v3998 = vrcp.pop %v3996
    %v3999 = vmul.f32 1.0, %v3998
    %v4000 = vrcp.pop %v3997
    %v4001 = vmul.f32 1.0, %v4000
    %v4002 = vmul.f32 %v3984, %v3999
    %v4003 = vmul.f32 %v3987, %v4001
    %4006 = vrot.lane.b32.xlu0 %v3984, 64
    %v4007 = vpop.permute.xlu0 %4006
    %4008 = vrot.lane.b32.xlu0 %v3987, 64
    %v4009 = vpop.permute.xlu0 %4008
    %v4012 = vmul.f32 %v4002, %v4007
    %v4013 = vmul.f32 %v4003, %v4009
    %v4014 = vpack.c.bf16 %v4013, %v4012
    %s4015 = scalar_lea.vmem %s10, 160
    %v4016 = vld [vmem:[%s4015] sm:$0xf]
    %v4017 = vld [vmem:[%s4015 + $0x4] sm:$0xf]
    %v4018 = vld [vmem:[%s4015 + $0x8] sm:$0xf]
    %v4019 = vld [vmem:[%s4015 + $0xc] sm:$0xf]
    %v4020 = vld [vmem:[%s4015 + $0x10] sm:$0xf]
    %v4021 = vld [vmem:[%s4015 + $0x14] sm:$0xf]
    %v4022 = vld [vmem:[%s4015 + $0x18] sm:$0xf]
    %v4023 = vld [vmem:[%s4015 + $0x1c] sm:$0xf]
    %v4032 = vunpack.c.l.b16 %v4016
    %v4033 = vunpack.c.l.b16 %v4017
    %v4034 = vunpack.c.l.b16 %v4018
    %v4035 = vunpack.c.l.b16 %v4019
    %v4036 = vunpack.c.l.b16 %v4020
    %v4037 = vunpack.c.l.b16 %v4021
    %v4038 = vunpack.c.l.b16 %v4022
    %v4039 = vunpack.c.l.b16 %v4023
    %v4040 = vpack.c.b16 %v4033, %v4032
    %v4041 = vpack.c.b16 %v4035, %v4034
    %v4042 = vpack.c.b16 %v4037, %v4036
    %v4043 = vpack.c.b16 %v4039, %v4038
    %v4049 = vsel %vm407, %v4014, 0
    %4051 = vmatprep.subr.bf16.mxu0 0
    %4052 = vmatpush1.bf16.msra.mxu0 %v4040
    %4053 = vmatprep.subr.bf16.mxu0 0
    %4054 = vmatpush1.bf16.msra.mxu0 %v4041
    %4055 = vmatprep.subr.bf16.mxu0 0
    %4056 = vmatpush1.bf16.msra.mxu0 %v4042
    %4057 = vmatprep.subr.bf16.mxu0 0
    %4058 = vmatpush1.bf16.msra.mxu0 %v4043
    %4059 = vmatprep.subr.bf16.mxu0 0
    %4060 = vmatpush1.bf16.msra.mxu0 0
    %4061 = vmatprep.subr.bf16.mxu0 0
    %4062 = vmatpush1.bf16.msra.mxu0 0
    %4063 = vmatprep.subr.bf16.mxu0 0
    %4064 = vmatpush1.bf16.msra.mxu0 0
    %4065 = vmatprep.subr.bf16.mxu0 0
    %4066 = vmatpush1.bf16.msra.mxu0 0
    %4067 = vmatprep.subr.bf16.mxu0 0
    %4068 = vmatpush1.bf16.msra.mxu0 0
    %4069 = vmatprep.subr.bf16.mxu0 0
    %4070 = vmatpush1.bf16.msra.mxu0 0
    %4071 = vmatprep.subr.bf16.mxu0 0
    %4072 = vmatpush1.bf16.msra.mxu0 0
    %4073 = vmatprep.subr.bf16.mxu0 0
    %4074 = vmatpush1.bf16.msra.mxu0 0
    %4075 = vmatprep.subr.bf16.mxu0 0
    %4076 = vmatpush1.bf16.msra.mxu0 0
    %4077 = vmatprep.subr.bf16.mxu0 0
    %4078 = vmatpush1.bf16.msra.mxu0 0
    %4079 = vmatprep.subr.bf16.mxu0 0
    %4080 = vmatpush1.bf16.msra.mxu0 0
    %4081 = vmatprep.subr.bf16.mxu0 0
    %4082 = vmatpush1.bf16.msra.mxu0 0
    %4083 = vmatprep.mubr.bf16.mxu0 0
    %4084 = vmatmul.mubr.bf16.gmra.mrb[0].mxu0 %v4049
    %v4085 = vpop.f32.mrb[0].mxu0
    %v4086 = vadd.f32 0.0, %v4085
    %v4087 = vpop.f32.mrb[0].mxu0
    %v4088 = vpop.f32.mrb[0].mxu0
    %v4089 = vadd.f32 0.0, %v4088
    %v4090 = vpop.f32.mrb[0].mxu0
    %4091 = vdwg.mxu0
    %v4092 = vadd.f32 %v3910, %v4086
    %v4093 = vadd.f32 %v3911, %v4089
    %4094 = vst.msk [vmem:[#allocation2] sm:$0xff] %vm171, %v4092
    %4095 = vst.msk [vmem:[#allocation2 + $0x8] sm:$0xff] %vm171, %v4093
    // Predicated region
    $region46: #{part0_forward.1} parent=1 // pred_check
      _
    $region47: #{part0_forward.1} parent=1 // pred_check_branch
      %4097 = sbr.rel (0) target = $region49
    $region48: #{part0_forward.1} parent=1 // pred_region
      %s4099 = ssub.s32 256, 256
      %4100 = vsyncadd [#allocation3], %s4099
      %s4101 = sshll.u32 [#allocation2], 4
      %s4102 = int_to_ptr.vmem [resolvable:$true] %s4101
      %4107 = dma.vmem_to_hbm [thread:$0]  %s4102, 256, %s11, [#allocation3], 128, 128, 8
    $region49: #{part0_forward.1} parent=1 // pred_fallthru
      _
    // Predicated region
    $region50: #{part0_forward.1} parent=1 // pred_check
      _
    $region51: #{part0_forward.1} parent=1 // pred_check_branch
      %4109 = sbr.rel (0) target = $region53
    $region52: #{part0_forward.1} parent=1 // pred_region
      %4110 = dma.done [#allocation3], 256
    $region53: #{part0_forward.1} parent=1 // pred_fallthru
      _
    %4111 = vsyncpa [#allocation3], 1

</llo_original>
